<compile_context>
chip_gen: v7x
topology: tpu7x:2x2x1
jax: 0.10.0
libtpu: 0.0.40
codegen_flags: <defaults>
</compile_context>

<pallas_src>
import jax
import jax.numpy as jnp
from jax.experimental import pallas as pl
from jax.experimental.pallas import tpu as pltpu

LANE = 128   # padded channel width (lane dimension)
NUM_W = 9    # packed weight-stack depth
NUM_B = 12   # packed bias-slab depth


# ----------------------------------- kernel ----------------------------------- #
def discriminator_kernel(x_ref, adj_ref, w_ref, b_ref, out_ref, h_ref, agg_ref):
    G = adj_ref.shape[0]          # graphs in this block (static)
    N = adj_ref.shape[1]          # nodes per graph (static, multiple of 16)

    def bias(i):                  # (1, 128) f32 row of the packed bias slab
        return b_ref[i:i + 1, :]

    def aggregate():
        # per-graph sum aggregation: agg[g*N:(g+1)*N] = adj[g] @ h[g*N:(g+1)*N]
        for g in range(G):
            rows = pl.ds(g * N, N)
            agg_ref[rows, :] = jnp.dot(adj_ref[g], h_ref[rows, :],
                                       preferred_element_type=jnp.float32)

    h_ref[...] = x_ref[...]       # (G*N, 128) bf16, channels >= 19 are zero-padded

    # ---- gin_discrim_latent: 4x GINConv(eps=0, MLP = Linear -> ReLU -> Linear) ----
    for layer in range(4):
        aggregate()
        z = agg_ref[...] + h_ref[...].astype(jnp.float32)                 # (1+eps)*x + agg
        z = jnp.dot(z.astype(jnp.bfloat16), w_ref[2 * layer],
                    preferred_element_type=jnp.float32) + bias(2 * layer)
        z = jnp.maximum(z, 0.0)                                           # MLP-internal ReLU
        z = jnp.dot(z.astype(jnp.bfloat16), w_ref[2 * layer + 1],
                    preferred_element_type=jnp.float32) + bias(2 * layer + 1)
        if layer < 3:
            z = jnp.maximum(z, 0.0)                                       # inter-layer ReLU
        h_ref[...] = z.astype(jnp.bfloat16)                               # one cast per layer

    # latent = h_ref (G*N, 128) bf16; columns 64.. are exactly zero.

    # ---- fused heads: single latent @ [wda | wm] matmul ----
    # col 0 = latent @ wda (discriminator path), col 1 = latent @ wm (mmse path)
    t2 = jnp.dot(h_ref[...], w_ref[8], preferred_element_type=jnp.float32)  # (G*N, 128) f32

    # mmse_predictor: Linear(64, 1) -> LeakyReLU(negative_slope=0.01)      (column 1)
    m = t2 + bias(8)
    m = jnp.where(m >= 0.0, m, 0.01 * m)

    # gin_main_discrim, reordered by associativity (column 0):
    #   Lin2(ReLU(Lin1(adj@latent + latent))) = wdb*ReLU(adj@(latent@wda) + latent@wda + bda) + bdb
    h_ref[...] = t2.astype(jnp.bfloat16)
    aggregate()
    z1 = jnp.maximum(agg_ref[...] + t2 + bias(9), 0.0)      # +bda on col 0
    d = z1 * bias(10) + bias(11)                             # *wdb, +bdb on the VPU (0 elsewhere)

    # lane-dense output slab: col 0 = discriminator, col 1 = mmse, rest = 0
    lane = jax.lax.broadcasted_iota(jnp.int32, d.shape, 1)
    out_ref[...] = jnp.where(lane == 1, m, d)


# ------------------------------ parameter packing ------------------------------ #
def pack_params(params):
    (w0a, b0a, w0b, b0b, w1a, b1a, w1b, b1b,
     w2a, b2a, w2b, b2b, w3a, b3a, w3b, b3b,
     wm, bm, wda, bda, wdb, bdb) = params

    def pad_w(w):
        return jnp.zeros((LANE, LANE), jnp.float32).at[:w.shape[0], :w.shape[1]].set(w)

    def pad_b(b):                      # b: (1, C)
        return jnp.zeros((LANE,), jnp.float32).at[:b.shape[1]].set(b[0])

    # fused head weight: column 0 = wda (discriminator head), column 1 = wm (mmse head)
    w_head = (jnp.zeros((LANE, LANE), jnp.float32)
              .at[:wda.shape[0], 0].set(wda[:, 0])
              .at[:wm.shape[0], 1].set(wm[:, 0]))

    w_stack = jnp.stack(
        [pad_w(w0a), pad_w(w0b), pad_w(w1a), pad_w(w1b),
         pad_w(w2a), pad_w(w2b), pad_w(w3a), pad_w(w3b), w_head]
    ).astype(jnp.bfloat16)                                              # (9, 128, 128)

    def scalar_row(col, val):
        return jnp.zeros((LANE,), jnp.float32).at[col].set(val)

    b_stack = jnp.stack(
        [pad_b(b0a), pad_b(b0b), pad_b(b1a), pad_b(b1b),
         pad_b(b2a), pad_b(b2b), pad_b(b3a), pad_b(b3b),
         scalar_row(1, bm[0, 0]),      # row 8 : +bm  (mmse column)
         scalar_row(0, bda[0, 0]),     # row 9 : +bda (discrim column)
         scalar_row(0, wdb[0, 0]),     # row 10: *wdb (discrim column)
         scalar_row(0, bdb[0, 0])])    # row 11: +bdb (discrim column)
    return w_stack, b_stack            # (9,128,128) bf16, (12,128) f32


# ---------------------------------- wrapper ---------------------------------- #
def dementia_discriminator(x, adj, params, graphs_per_step=8):
    """x: (B, N, C<=128) f32 node features, adj: (B, N, N) f32 dense adjacency (adj[b,dst,src])."""
    B, N, C = x.shape
    assert C <= LANE

    G = min(graphs_per_step, B)                    # graphs per grid step
    B_pad = ((B + G - 1) // G) * G                 # pad batch to a multiple of G
    N_pad = ((N + 15) // 16) * 16                  # keep per-graph rows tile-aligned (bf16: 16)
    rows = G * N_pad

    w_stack, b_stack = pack_params(params)

    x_pad = jnp.zeros((B_pad, N_pad, LANE), jnp.float32).at[:B, :N, :C].set(x)
    x_flat = x_pad.astype(jnp.bfloat16).reshape(B_pad * N_pad, LANE)
    adj_pad = jnp.zeros((B_pad, N_pad, N_pad), jnp.float32).at[:B, :N, :N].set(adj)
    adj_bf = adj_pad.astype(jnp.bfloat16)

    out = pl.pallas_call(
        discriminator_kernel,
        out_shape=jax.ShapeDtypeStruct((B_pad * N_pad, LANE), jnp.float32),
        grid=(B_pad // G,),
        in_specs=[
            pl.BlockSpec((rows, LANE), lambda i: (i, 0)),              # node features (flat)
            pl.BlockSpec((G, N_pad, N_pad), lambda i: (i, 0, 0)),      # adjacencies
            pl.BlockSpec((NUM_W, LANE, LANE), lambda i: (0, 0, 0)),    # weights, VMEM-resident
            pl.BlockSpec((NUM_B, LANE), lambda i: (0, 0)),             # biases/scalars, resident
        ],
        out_specs=pl.BlockSpec((rows, LANE), lambda i: (i, 0)),        # lane-dense output slab
        scratch_shapes=[pltpu.VMEM((rows, LANE), jnp.bfloat16),        # h (activations)
                        pltpu.VMEM((rows, LANE), jnp.float32)],        # agg (f32 accumulator)
        compiler_params=pltpu.CompilerParams(dimension_semantics=("parallel",)),
    )(x_flat, adj_bf, w_stack, b_stack)

    out = out.reshape(B_pad, N_pad, LANE)
    discrim_out = out[:B, :N, 0:1]
    mmse_pred = out[:B, :N, 1:2]
    return discrim_out, mmse_pred


# ---------------- parameter construction (deterministic, PyTorch-style init) ---------------- #
def _init_linear(key, fan_in, fan_out):
    k1, k2 = jax.random.split(key)
    bound = 1.0 / float(fan_in) ** 0.5
    w = jax.random.uniform(k1, (fan_in, fan_out), jnp.float32, -bound, bound)
    b = jax.random.uniform(k2, (1, fan_out), jnp.float32, -bound, bound)
    return w, b


def make_params(key):
    params = []
    # gin_discrim_latent: 4 GINConv MLPs: [19->128->128], [128->128->128]*2, [128->64->64]
    dims = [(19, 128, 128), (128, 128, 128), (128, 128, 128), (128, 64, 64)]
    for (cin, chid, cout) in dims:
        key, ka, kb = jax.random.split(key, 3)
        wa, ba = _init_linear(ka, cin, chid)
        wb, bb = _init_linear(kb, chid, cout)
        params += [wa, ba, wb, bb]
    # mmse_predictor: Linear(64, 1)
    key, km = jax.random.split(key)
    wm, bm = _init_linear(km, 64, 1)
    params += [wm, bm]
    # gin_main_discrim: single GINConv MLP [64->1->1]
    key, ka, kb = jax.random.split(key, 3)
    wda, bda = _init_linear(ka, 64, 1)
    wdb, bdb = _init_linear(kb, 1, 1)
    params += [wda, bda, wdb, bdb]
    return params


# ---------------- pure-JAX references ---------------- #
def reference_matched(x, adj, params):
    """Replicates the kernel's exact bf16-operand / f32-accumulate numerics (single graph)."""
    (w0a, b0a, w0b, b0b, w1a, b1a, w1b, b1b,
     w2a, b2a, w2b, b2b, w3a, b3a, w3b, b3b,
     wm, bm, wda, bda, wdb, bdb) = params
    bf, f32 = jnp.bfloat16, jnp.float32

    def mm(a, b):
        return jnp.dot(a.astype(bf), b.astype(bf), preferred_element_type=f32)

    h = x
    for li, (wa, ba, wb, bb) in enumerate([(w0a, b0a, w0b, b0b), (w1a, b1a, w1b, b1b),
                                           (w2a, b2a, w2b, b2b), (w3a, b3a, w3b, b3b)]):
        z = mm(adj, h) + h.astype(bf).astype(f32)
        z = jnp.maximum(mm(z, wa) + ba, 0.0)
        z = mm(z, wb) + bb
        if li < 3:
            z = jnp.maximum(z, 0.0)
        h = z
    latent = h
    mmse = mm(latent, wm) + bm
    mmse = jnp.where(mmse >= 0.0, mmse, 0.01 * mmse)
    t = mm(latent, wda)
    z1 = jnp.maximum(mm(adj, t) + t + bda, 0.0)
    d = z1 * wdb[0, 0] + bdb[0, 0]
    return d, mmse


def reference_f32(x, adj, params):
    """Original full-f32 forward semantics (single graph)."""
    (w0a, b0a, w0b, b0b, w1a, b1a, w1b, b1b,
     w2a, b2a, w2b, b2b, w3a, b3a, w3b, b3b,
     wm, bm, wda, bda, wdb, bdb) = params

    def conv(h, wa, ba, wb, bb):
        z = adj @ h + h
        z = jnp.maximum(z @ wa + ba, 0.0)
        return z @ wb + bb

    h = jnp.maximum(conv(x, w0a, b0a, w0b, b0b), 0.0)
    h = jnp.maximum(conv(h, w1a, b1a, w1b, b1b), 0.0)
    h = jnp.maximum(conv(h, w2a, b2a, w2b, b2b), 0.0)
    latent = conv(h, w3a, b3a, w3b, b3b)
    mmse = latent @ wm + bm
    mmse = jnp.where(mmse >= 0.0, mmse, 0.01 * mmse)
    d = conv(latent, wda, bda, wdb, bdb)
    return d, mmse


if __name__ == "__main__":
    key = jax.random.PRNGKey(0)
    k_x, k_p = jax.random.split(key)

    B, N, C = 4, 16, 19   # batch of graphs, nodes (brain regions), regional-score channels
    x = jax.random.normal(k_x, (B, N, C), jnp.float32)

    # synthetic edge_index: bidirectional ring graph -> dense adjacency adj[dst, src]
    idx = jnp.arange(N)
    src = jnp.concatenate([idx, (idx + 1) % N])
    dst = jnp.concatenate([(idx + 1) % N, idx])
    adj1 = jnp.zeros((N, N), jnp.float32).at[dst, src].add(1.0)
    adj = jnp.broadcast_to(adj1, (B, N, N))

    params = make_params(k_p)

    discrim_out, mmse_pred = dementia_discriminator(x, adj, params)
    jax.block_until_ready((discrim_out, mmse_pred))
    assert discrim_out.shape == (B, N, 1) and mmse_pred.shape == (B, N, 1)

    for b in range(B):
        d_m, m_m = reference_matched(x[b], adj[b], params)
        assert jnp.allclose(discrim_out[b], d_m, atol=1e-3, rtol=1e-3)
        assert jnp.allclose(mmse_pred[b], m_m, atol=1e-3, rtol=1e-3)
        # loose check against full-f32 semantics (bf16 MXU operands => relaxed tolerance)
        d_f, m_f = reference_f32(x[b], adj[b], params)
        assert jnp.allclose(discrim_out[b], d_f, atol=2e-2, rtol=2e-2)
        assert jnp.allclose(mmse_pred[b], m_f, atol=2e-2, rtol=2e-2)

    print("KERNEL_OK")
</pallas_src>

<mosaic_0001>
module attributes {stable_mosaic.version = 11 : i64} {
  func.func @discriminator_kernel(%arg0: i32, %arg1: memref<64x128xbf16, #tpu.memory_space<vmem>>, %arg2: memref<4x16x16xbf16, #tpu.memory_space<vmem>>, %arg3: memref<9x128x128xbf16, #tpu.memory_space<vmem>>, %arg4: memref<12x128xf32, #tpu.memory_space<vmem>>, %arg5: memref<64x128xf32, #tpu.memory_space<vmem>>, %arg6: memref<64x128xbf16, #tpu.memory_space<vmem>>, %arg7: memref<64x128xf32, #tpu.memory_space<vmem>>) attributes {dimension_semantics = [#tpu.dimension_semantics<parallel>], iteration_bounds = array<i64: 1>, scalar_prefetch = 0 : i64, scratch_operands = 2 : i64, tpu.core_type = #tpu.core_type<tc>, window_params = [{transform_indices = @transform_0, window_bounds = array<i64: 64, 128>}, {transform_indices = @transform_1, window_bounds = array<i64: 4, 16, 16>}, {pipeline_mode = #tpu.pipeline_mode<synchronous>, transform_indices = @transform_2, window_bounds = array<i64: 9, 128, 128>}, {pipeline_mode = #tpu.pipeline_mode<synchronous>, transform_indices = @transform_3, window_bounds = array<i64: 12, 128>}, {transform_indices = @transform_4, window_bounds = array<i64: 64, 128>}]} {
    %c0 = arith.constant 0 : index
    %c0_0 = arith.constant 0 : index
    %0 = vector.load %arg1[%c0, %c0_0] : memref<64x128xbf16, #tpu.memory_space<vmem>>, vector<64x128xbf16>
    %c0_1 = arith.constant 0 : index
    %c0_2 = arith.constant 0 : index
    %1 = vector.load %arg6[%c0_1, %c0_2] : memref<64x128xbf16, #tpu.memory_space<vmem>>, vector<64x128xbf16>
    tpu.vector_store %arg6[%c0_1, %c0_2], %0 {strides = array<i32>} : memref<64x128xbf16, #tpu.memory_space<vmem>>, vector<64x128xbf16>,
    %c0_3 = arith.constant 0 : index
    %c0_4 = arith.constant 0 : index
    %c0_5 = arith.constant 0 : index
    %2 = vector.load %arg2[%c0_3, %c0_4, %c0_5] : memref<4x16x16xbf16, #tpu.memory_space<vmem>>, vector<1x16x16xbf16>
    %3 = vector.shape_cast %2 : vector<1x16x16xbf16> to vector<16x16xbf16>
    %c0_6 = arith.constant 0 : index
    %c0_7 = arith.constant 0 : index
    %4 = vector.load %arg6[%c0_6, %c0_7] : memref<64x128xbf16, #tpu.memory_space<vmem>>, vector<16x128xbf16>
    %cst = arith.constant dense<0.000000e+00> : vector<16x128xf32>
    %5 = tpu.matmul %3, %4, %cst {dimension_numbers = #tpu.dot_dimension_numbers<[1], [0], [0], [1], [0, 0, 1, 1], [], []>} : vector<16x16xbf16>, vector<16x128xbf16>, vector<16x128xf32> -> vector<16x128xf32>
    %c0_8 = arith.constant 0 : index
    %c0_9 = arith.constant 0 : index
    %6 = vector.load %arg7[%c0_8, %c0_9] : memref<64x128xf32, #tpu.memory_space<vmem>>, vector<16x128xf32>
    tpu.vector_store %arg7[%c0_8, %c0_9], %5 {strides = array<i32>} : memref<64x128xf32, #tpu.memory_space<vmem>>, vector<16x128xf32>,
    %c1 = arith.constant 1 : index
    %c0_10 = arith.constant 0 : index
    %c0_11 = arith.constant 0 : index
    %7 = vector.load %arg2[%c1, %c0_10, %c0_11] : memref<4x16x16xbf16, #tpu.memory_space<vmem>>, vector<1x16x16xbf16>
    %8 = vector.shape_cast %7 : vector<1x16x16xbf16> to vector<16x16xbf16>
    %c16 = arith.constant 16 : index
    %c0_12 = arith.constant 0 : index
    %9 = vector.load %arg6[%c16, %c0_12] : memref<64x128xbf16, #tpu.memory_space<vmem>>, vector<16x128xbf16>
    %cst_13 = arith.constant dense<0.000000e+00> : vector<16x128xf32>
    %10 = tpu.matmul %8, %9, %cst_13 {dimension_numbers = #tpu.dot_dimension_numbers<[1], [0], [0], [1], [0, 0, 1, 1], [], []>} : vector<16x16xbf16>, vector<16x128xbf16>, vector<16x128xf32> -> vector<16x128xf32>
    %c16_14 = arith.constant 16 : index
    %c0_15 = arith.constant 0 : index
    %11 = vector.load %arg7[%c16_14, %c0_15] : memref<64x128xf32, #tpu.memory_space<vmem>>, vector<16x128xf32>
    tpu.vector_store %arg7[%c16_14, %c0_15], %10 {strides = array<i32>} : memref<64x128xf32, #tpu.memory_space<vmem>>, vector<16x128xf32>,
    %c2 = arith.constant 2 : index
    %c0_16 = arith.constant 0 : index
    %c0_17 = arith.constant 0 : index
    %12 = vector.load %arg2[%c2, %c0_16, %c0_17] : memref<4x16x16xbf16, #tpu.memory_space<vmem>>, vector<1x16x16xbf16>
    %13 = vector.shape_cast %12 : vector<1x16x16xbf16> to vector<16x16xbf16>
    %c32 = arith.constant 32 : index
    %c0_18 = arith.constant 0 : index
    %14 = vector.load %arg6[%c32, %c0_18] : memref<64x128xbf16, #tpu.memory_space<vmem>>, vector<16x128xbf16>
    %cst_19 = arith.constant dense<0.000000e+00> : vector<16x128xf32>
    %15 = tpu.matmul %13, %14, %cst_19 {dimension_numbers = #tpu.dot_dimension_numbers<[1], [0], [0], [1], [0, 0, 1, 1], [], []>} : vector<16x16xbf16>, vector<16x128xbf16>, vector<16x128xf32> -> vector<16x128xf32>
    %c32_20 = arith.constant 32 : index
    %c0_21 = arith.constant 0 : index
    %16 = vector.load %arg7[%c32_20, %c0_21] : memref<64x128xf32, #tpu.memory_space<vmem>>, vector<16x128xf32>
    tpu.vector_store %arg7[%c32_20, %c0_21], %15 {strides = array<i32>} : memref<64x128xf32, #tpu.memory_space<vmem>>, vector<16x128xf32>,
    %c3 = arith.constant 3 : index
    %c0_22 = arith.constant 0 : index
    %c0_23 = arith.constant 0 : index
    %17 = vector.load %arg2[%c3, %c0_22, %c0_23] : memref<4x16x16xbf16, #tpu.memory_space<vmem>>, vector<1x16x16xbf16>
    %18 = vector.shape_cast %17 : vector<1x16x16xbf16> to vector<16x16xbf16>
    %c48 = arith.constant 48 : index
    %c0_24 = arith.constant 0 : index
    %19 = vector.load %arg6[%c48, %c0_24] : memref<64x128xbf16, #tpu.memory_space<vmem>>, vector<16x128xbf16>
    %cst_25 = arith.constant dense<0.000000e+00> : vector<16x128xf32>
    %20 = tpu.matmul %18, %19, %cst_25 {dimension_numbers = #tpu.dot_dimension_numbers<[1], [0], [0], [1], [0, 0, 1, 1], [], []>} : vector<16x16xbf16>, vector<16x128xbf16>, vector<16x128xf32> -> vector<16x128xf32>
    %c48_26 = arith.constant 48 : index
    %c0_27 = arith.constant 0 : index
    %21 = vector.load %arg7[%c48_26, %c0_27] : memref<64x128xf32, #tpu.memory_space<vmem>>, vector<16x128xf32>
    tpu.vector_store %arg7[%c48_26, %c0_27], %20 {strides = array<i32>} : memref<64x128xf32, #tpu.memory_space<vmem>>, vector<16x128xf32>,
    %c0_28 = arith.constant 0 : index
    %c0_29 = arith.constant 0 : index
    %22 = vector.load %arg7[%c0_28, %c0_29] : memref<64x128xf32, #tpu.memory_space<vmem>>, vector<64x128xf32>
    %c0_30 = arith.constant 0 : index
    %c0_31 = arith.constant 0 : index
    %23 = vector.load %arg6[%c0_30, %c0_31] : memref<64x128xbf16, #tpu.memory_space<vmem>>, vector<64x128xbf16>
    %24 = arith.extf %23 : vector<64x128xbf16> to vector<64x128xf32>
    %25 = arith.addf %22, %24 : vector<64x128xf32>
    %26 = arith.truncf %25 : vector<64x128xf32> to vector<64x128xbf16>
    %c0_32 = arith.constant 0 : index
    %c0_33 = arith.constant 0 : index
    %c0_34 = arith.constant 0 : index
    %27 = vector.load %arg3[%c0_32, %c0_33, %c0_34] : memref<9x128x128xbf16, #tpu.memory_space<vmem>>, vector<1x128x128xbf16>
    %28 = vector.shape_cast %27 : vector<1x128x128xbf16> to vector<128x128xbf16>
    %cst_35 = arith.constant dense<0.000000e+00> : vector<64x128xf32>
    %29 = tpu.matmul %26, %28, %cst_35 {dimension_numbers = #tpu.dot_dimension_numbers<[1], [0], [0], [1], [0, 0, 1, 1], [], []>} : vector<64x128xbf16>, vector<128x128xbf16>, vector<64x128xf32> -> vector<64x128xf32>
    %c0_36 = arith.constant 0 : index
    %c0_37 = arith.constant 0 : index
    %30 = vector.load %arg4[%c0_36, %c0_37] : memref<12x128xf32, #tpu.memory_space<vmem>>, vector<1x128xf32>
    %31 = vector.broadcast %30 : vector<1x128xf32> to vector<64x128xf32>
    %32 = arith.addf %29, %31 : vector<64x128xf32>
    %cst_38 = arith.constant 0.000000e+00 : f32
    %33 = vector.broadcast %cst_38 : f32 to vector<64x128xf32>
    %34 = arith.maximumf %32, %33 : vector<64x128xf32>
    %35 = arith.truncf %34 : vector<64x128xf32> to vector<64x128xbf16>
    %c1_39 = arith.constant 1 : index
    %c0_40 = arith.constant 0 : index
    %c0_41 = arith.constant 0 : index
    %36 = vector.load %arg3[%c1_39, %c0_40, %c0_41] : memref<9x128x128xbf16, #tpu.memory_space<vmem>>, vector<1x128x128xbf16>
    %37 = vector.shape_cast %36 : vector<1x128x128xbf16> to vector<128x128xbf16>
    %cst_42 = arith.constant dense<0.000000e+00> : vector<64x128xf32>
    %38 = tpu.matmul %35, %37, %cst_42 {dimension_numbers = #tpu.dot_dimension_numbers<[1], [0], [0], [1], [0, 0, 1, 1], [], []>} : vector<64x128xbf16>, vector<128x128xbf16>, vector<64x128xf32> -> vector<64x128xf32>
    %c1_43 = arith.constant 1 : index
    %c0_44 = arith.constant 0 : index
    %39 = vector.load %arg4[%c1_43, %c0_44] : memref<12x128xf32, #tpu.memory_space<vmem>>, vector<1x128xf32>
    %40 = vector.broadcast %39 : vector<1x128xf32> to vector<64x128xf32>
    %41 = arith.addf %38, %40 : vector<64x128xf32>
    %cst_45 = arith.constant 0.000000e+00 : f32
    %42 = vector.broadcast %cst_45 : f32 to vector<64x128xf32>
    %43 = arith.maximumf %41, %42 : vector<64x128xf32>
    %44 = arith.truncf %43 : vector<64x128xf32> to vector<64x128xbf16>
    %c0_46 = arith.constant 0 : index
    %c0_47 = arith.constant 0 : index
    %45 = vector.load %arg6[%c0_46, %c0_47] : memref<64x128xbf16, #tpu.memory_space<vmem>>, vector<64x128xbf16>
    tpu.vector_store %arg6[%c0_46, %c0_47], %44 {strides = array<i32>} : memref<64x128xbf16, #tpu.memory_space<vmem>>, vector<64x128xbf16>,
    %c0_48 = arith.constant 0 : index
    %c0_49 = arith.constant 0 : index
    %c0_50 = arith.constant 0 : index
    %46 = vector.load %arg2[%c0_48, %c0_49, %c0_50] : memref<4x16x16xbf16, #tpu.memory_space<vmem>>, vector<1x16x16xbf16>
    %47 = vector.shape_cast %46 : vector<1x16x16xbf16> to vector<16x16xbf16>
    %c0_51 = arith.constant 0 : index
    %c0_52 = arith.constant 0 : index
    %48 = vector.load %arg6[%c0_51, %c0_52] : memref<64x128xbf16, #tpu.memory_space<vmem>>, vector<16x128xbf16>
    %cst_53 = arith.constant dense<0.000000e+00> : vector<16x128xf32>
    %49 = tpu.matmul %47, %48, %cst_53 {dimension_numbers = #tpu.dot_dimension_numbers<[1], [0], [0], [1], [0, 0, 1, 1], [], []>} : vector<16x16xbf16>, vector<16x128xbf16>, vector<16x128xf32> -> vector<16x128xf32>
    %c0_54 = arith.constant 0 : index
    %c0_55 = arith.constant 0 : index
    %50 = vector.load %arg7[%c0_54, %c0_55] : memref<64x128xf32, #tpu.memory_space<vmem>>, vector<16x128xf32>
    tpu.vector_store %arg7[%c0_54, %c0_55], %49 {strides = array<i32>} : memref<64x128xf32, #tpu.memory_space<vmem>>, vector<16x128xf32>,
    %c1_56 = arith.constant 1 : index
    %c0_57 = arith.constant 0 : index
    %c0_58 = arith.constant 0 : index
    %51 = vector.load %arg2[%c1_56, %c0_57, %c0_58] : memref<4x16x16xbf16, #tpu.memory_space<vmem>>, vector<1x16x16xbf16>
    %52 = vector.shape_cast %51 : vector<1x16x16xbf16> to vector<16x16xbf16>
    %c16_59 = arith.constant 16 : index
    %c0_60 = arith.constant 0 : index
    %53 = vector.load %arg6[%c16_59, %c0_60] : memref<64x128xbf16, #tpu.memory_space<vmem>>, vector<16x128xbf16>
    %cst_61 = arith.constant dense<0.000000e+00> : vector<16x128xf32>
    %54 = tpu.matmul %52, %53, %cst_61 {dimension_numbers = #tpu.dot_dimension_numbers<[1], [0], [0], [1], [0, 0, 1, 1], [], []>} : vector<16x16xbf16>, vector<16x128xbf16>, vector<16x128xf32> -> vector<16x128xf32>
    %c16_62 = arith.constant 16 : index
    %c0_63 = arith.constant 0 : index
    %55 = vector.load %arg7[%c16_62, %c0_63] : memref<64x128xf32, #tpu.memory_space<vmem>>, vector<16x128xf32>
    tpu.vector_store %arg7[%c16_62, %c0_63], %54 {strides = array<i32>} : memref<64x128xf32, #tpu.memory_space<vmem>>, vector<16x128xf32>,
    %c2_64 = arith.constant 2 : index
    %c0_65 = arith.constant 0 : index
    %c0_66 = arith.constant 0 : index
    %56 = vector.load %arg2[%c2_64, %c0_65, %c0_66] : memref<4x16x16xbf16, #tpu.memory_space<vmem>>, vector<1x16x16xbf16>
    %57 = vector.shape_cast %56 : vector<1x16x16xbf16> to vector<16x16xbf16>
    %c32_67 = arith.constant 32 : index
    %c0_68 = arith.constant 0 : index
    %58 = vector.load %arg6[%c32_67, %c0_68] : memref<64x128xbf16, #tpu.memory_space<vmem>>, vector<16x128xbf16>
    %cst_69 = arith.constant dense<0.000000e+00> : vector<16x128xf32>
    %59 = tpu.matmul %57, %58, %cst_69 {dimension_numbers = #tpu.dot_dimension_numbers<[1], [0], [0], [1], [0, 0, 1, 1], [], []>} : vector<16x16xbf16>, vector<16x128xbf16>, vector<16x128xf32> -> vector<16x128xf32>
    %c32_70 = arith.constant 32 : index
    %c0_71 = arith.constant 0 : index
    %60 = vector.load %arg7[%c32_70, %c0_71] : memref<64x128xf32, #tpu.memory_space<vmem>>, vector<16x128xf32>
    tpu.vector_store %arg7[%c32_70, %c0_71], %59 {strides = array<i32>} : memref<64x128xf32, #tpu.memory_space<vmem>>, vector<16x128xf32>,
    %c3_72 = arith.constant 3 : index
    %c0_73 = arith.constant 0 : index
    %c0_74 = arith.constant 0 : index
    %61 = vector.load %arg2[%c3_72, %c0_73, %c0_74] : memref<4x16x16xbf16, #tpu.memory_space<vmem>>, vector<1x16x16xbf16>
    %62 = vector.shape_cast %61 : vector<1x16x16xbf16> to vector<16x16xbf16>
    %c48_75 = arith.constant 48 : index
    %c0_76 = arith.constant 0 : index
    %63 = vector.load %arg6[%c48_75, %c0_76] : memref<64x128xbf16, #tpu.memory_space<vmem>>, vector<16x128xbf16>
    %cst_77 = arith.constant dense<0.000000e+00> : vector<16x128xf32>
    %64 = tpu.matmul %62, %63, %cst_77 {dimension_numbers = #tpu.dot_dimension_numbers<[1], [0], [0], [1], [0, 0, 1, 1], [], []>} : vector<16x16xbf16>, vector<16x128xbf16>, vector<16x128xf32> -> vector<16x128xf32>
    %c48_78 = arith.constant 48 : index
    %c0_79 = arith.constant 0 : index
    %65 = vector.load %arg7[%c48_78, %c0_79] : memref<64x128xf32, #tpu.memory_space<vmem>>, vector<16x128xf32>
    tpu.vector_store %arg7[%c48_78, %c0_79], %64 {strides = array<i32>} : memref<64x128xf32, #tpu.memory_space<vmem>>, vector<16x128xf32>,
    %c0_80 = arith.constant 0 : index
    %c0_81 = arith.constant 0 : index
    %66 = vector.load %arg7[%c0_80, %c0_81] : memref<64x128xf32, #tpu.memory_space<vmem>>, vector<64x128xf32>
    %c0_82 = arith.constant 0 : index
    %c0_83 = arith.constant 0 : index
    %67 = vector.load %arg6[%c0_82, %c0_83] : memref<64x128xbf16, #tpu.memory_space<vmem>>, vector<64x128xbf16>
    %68 = arith.extf %67 : vector<64x128xbf16> to vector<64x128xf32>
    %69 = arith.addf %66, %68 : vector<64x128xf32>
    %70 = arith.truncf %69 : vector<64x128xf32> to vector<64x128xbf16>
    %c2_84 = arith.constant 2 : index
    %c0_85 = arith.constant 0 : index
    %c0_86 = arith.constant 0 : index
    %71 = vector.load %arg3[%c2_84, %c0_85, %c0_86] : memref<9x128x128xbf16, #tpu.memory_space<vmem>>, vector<1x128x128xbf16>
    %72 = vector.shape_cast %71 : vector<1x128x128xbf16> to vector<128x128xbf16>
    %cst_87 = arith.constant dense<0.000000e+00> : vector<64x128xf32>
    %73 = tpu.matmul %70, %72, %cst_87 {dimension_numbers = #tpu.dot_dimension_numbers<[1], [0], [0], [1], [0, 0, 1, 1], [], []>} : vector<64x128xbf16>, vector<128x128xbf16>, vector<64x128xf32> -> vector<64x128xf32>
    %c2_88 = arith.constant 2 : index
    %c0_89 = arith.constant 0 : index
    %74 = vector.load %arg4[%c2_88, %c0_89] : memref<12x128xf32, #tpu.memory_space<vmem>>, vector<1x128xf32>
    %75 = vector.broadcast %74 : vector<1x128xf32> to vector<64x128xf32>
    %76 = arith.addf %73, %75 : vector<64x128xf32>
    %cst_90 = arith.constant 0.000000e+00 : f32
    %77 = vector.broadcast %cst_90 : f32 to vector<64x128xf32>
    %78 = arith.maximumf %76, %77 : vector<64x128xf32>
    %79 = arith.truncf %78 : vector<64x128xf32> to vector<64x128xbf16>
    %c3_91 = arith.constant 3 : index
    %c0_92 = arith.constant 0 : index
    %c0_93 = arith.constant 0 : index
    %80 = vector.load %arg3[%c3_91, %c0_92, %c0_93] : memref<9x128x128xbf16, #tpu.memory_space<vmem>>, vector<1x128x128xbf16>
    %81 = vector.shape_cast %80 : vector<1x128x128xbf16> to vector<128x128xbf16>
    %cst_94 = arith.constant dense<0.000000e+00> : vector<64x128xf32>
    %82 = tpu.matmul %79, %81, %cst_94 {dimension_numbers = #tpu.dot_dimension_numbers<[1], [0], [0], [1], [0, 0, 1, 1], [], []>} : vector<64x128xbf16>, vector<128x128xbf16>, vector<64x128xf32> -> vector<64x128xf32>
    %c3_95 = arith.constant 3 : index
    %c0_96 = arith.constant 0 : index
    %83 = vector.load %arg4[%c3_95, %c0_96] : memref<12x128xf32, #tpu.memory_space<vmem>>, vector<1x128xf32>
    %84 = vector.broadcast %83 : vector<1x128xf32> to vector<64x128xf32>
    %85 = arith.addf %82, %84 : vector<64x128xf32>
    %cst_97 = arith.constant 0.000000e+00 : f32
    %86 = vector.broadcast %cst_97 : f32 to vector<64x128xf32>
    %87 = arith.maximumf %85, %86 : vector<64x128xf32>
    %88 = arith.truncf %87 : vector<64x128xf32> to vector<64x128xbf16>
    %c0_98 = arith.constant 0 : index
    %c0_99 = arith.constant 0 : index
    %89 = vector.load %arg6[%c0_98, %c0_99] : memref<64x128xbf16, #tpu.memory_space<vmem>>, vector<64x128xbf16>
    tpu.vector_store %arg6[%c0_98, %c0_99], %88 {strides = array<i32>} : memref<64x128xbf16, #tpu.memory_space<vmem>>, vector<64x128xbf16>,
    %c0_100 = arith.constant 0 : index
    %c0_101 = arith.constant 0 : index
    %c0_102 = arith.constant 0 : index
    %90 = vector.load %arg2[%c0_100, %c0_101, %c0_102] : memref<4x16x16xbf16, #tpu.memory_space<vmem>>, vector<1x16x16xbf16>
    %91 = vector.shape_cast %90 : vector<1x16x16xbf16> to vector<16x16xbf16>
    %c0_103 = arith.constant 0 : index
    %c0_104 = arith.constant 0 : index
    %92 = vector.load %arg6[%c0_103, %c0_104] : memref<64x128xbf16, #tpu.memory_space<vmem>>, vector<16x128xbf16>
    %cst_105 = arith.constant dense<0.000000e+00> : vector<16x128xf32>
    %93 = tpu.matmul %91, %92, %cst_105 {dimension_numbers = #tpu.dot_dimension_numbers<[1], [0], [0], [1], [0, 0, 1, 1], [], []>} : vector<16x16xbf16>, vector<16x128xbf16>, vector<16x128xf32> -> vector<16x128xf32>
    %c0_106 = arith.constant 0 : index
    %c0_107 = arith.constant 0 : index
    %94 = vector.load %arg7[%c0_106, %c0_107] : memref<64x128xf32, #tpu.memory_space<vmem>>, vector<16x128xf32>
    tpu.vector_store %arg7[%c0_106, %c0_107], %93 {strides = array<i32>} : memref<64x128xf32, #tpu.memory_space<vmem>>, vector<16x128xf32>,
    %c1_108 = arith.constant 1 : index
    %c0_109 = arith.constant 0 : index
    %c0_110 = arith.constant 0 : index
    %95 = vector.load %arg2[%c1_108, %c0_109, %c0_110] : memref<4x16x16xbf16, #tpu.memory_space<vmem>>, vector<1x16x16xbf16>
    %96 = vector.shape_cast %95 : vector<1x16x16xbf16> to vector<16x16xbf16>
    %c16_111 = arith.constant 16 : index
    %c0_112 = arith.constant 0 : index
    %97 = vector.load %arg6[%c16_111, %c0_112] : memref<64x128xbf16, #tpu.memory_space<vmem>>, vector<16x128xbf16>
    %cst_113 = arith.constant dense<0.000000e+00> : vector<16x128xf32>
    %98 = tpu.matmul %96, %97, %cst_113 {dimension_numbers = #tpu.dot_dimension_numbers<[1], [0], [0], [1], [0, 0, 1, 1], [], []>} : vector<16x16xbf16>, vector<16x128xbf16>, vector<16x128xf32> -> vector<16x128xf32>
    %c16_114 = arith.constant 16 : index
    %c0_115 = arith.constant 0 : index
    %99 = vector.load %arg7[%c16_114, %c0_115] : memref<64x128xf32, #tpu.memory_space<vmem>>, vector<16x128xf32>
    tpu.vector_store %arg7[%c16_114, %c0_115], %98 {strides = array<i32>} : memref<64x128xf32, #tpu.memory_space<vmem>>, vector<16x128xf32>,
    %c2_116 = arith.constant 2 : index
    %c0_117 = arith.constant 0 : index
    %c0_118 = arith.constant 0 : index
    %100 = vector.load %arg2[%c2_116, %c0_117, %c0_118] : memref<4x16x16xbf16, #tpu.memory_space<vmem>>, vector<1x16x16xbf16>
    %101 = vector.shape_cast %100 : vector<1x16x16xbf16> to vector<16x16xbf16>
    %c32_119 = arith.constant 32 : index
    %c0_120 = arith.constant 0 : index
    %102 = vector.load %arg6[%c32_119, %c0_120] : memref<64x128xbf16, #tpu.memory_space<vmem>>, vector<16x128xbf16>
    %cst_121 = arith.constant dense<0.000000e+00> : vector<16x128xf32>
    %103 = tpu.matmul %101, %102, %cst_121 {dimension_numbers = #tpu.dot_dimension_numbers<[1], [0], [0], [1], [0, 0, 1, 1], [], []>} : vector<16x16xbf16>, vector<16x128xbf16>, vector<16x128xf32> -> vector<16x128xf32>
    %c32_122 = arith.constant 32 : index
    %c0_123 = arith.constant 0 : index
    %104 = vector.load %arg7[%c32_122, %c0_123] : memref<64x128xf32, #tpu.memory_space<vmem>>, vector<16x128xf32>
    tpu.vector_store %arg7[%c32_122, %c0_123], %103 {strides = array<i32>} : memref<64x128xf32, #tpu.memory_space<vmem>>, vector<16x128xf32>,
    %c3_124 = arith.constant 3 : index
    %c0_125 = arith.constant 0 : index
    %c0_126 = arith.constant 0 : index
    %105 = vector.load %arg2[%c3_124, %c0_125, %c0_126] : memref<4x16x16xbf16, #tpu.memory_space<vmem>>, vector<1x16x16xbf16>
    %106 = vector.shape_cast %105 : vector<1x16x16xbf16> to vector<16x16xbf16>
    %c48_127 = arith.constant 48 : index
    %c0_128 = arith.constant 0 : index
    %107 = vector.load %arg6[%c48_127, %c0_128] : memref<64x128xbf16, #tpu.memory_space<vmem>>, vector<16x128xbf16>
    %cst_129 = arith.constant dense<0.000000e+00> : vector<16x128xf32>
    %108 = tpu.matmul %106, %107, %cst_129 {dimension_numbers = #tpu.dot_dimension_numbers<[1], [0], [0], [1], [0, 0, 1, 1], [], []>} : vector<16x16xbf16>, vector<16x128xbf16>, vector<16x128xf32> -> vector<16x128xf32>
    %c48_130 = arith.constant 48 : index
    %c0_131 = arith.constant 0 : index
    %109 = vector.load %arg7[%c48_130, %c0_131] : memref<64x128xf32, #tpu.memory_space<vmem>>, vector<16x128xf32>
    tpu.vector_store %arg7[%c48_130, %c0_131], %108 {strides = array<i32>} : memref<64x128xf32, #tpu.memory_space<vmem>>, vector<16x128xf32>,
    %c0_132 = arith.constant 0 : index
    %c0_133 = arith.constant 0 : index
    %110 = vector.load %arg7[%c0_132, %c0_133] : memref<64x128xf32, #tpu.memory_space<vmem>>, vector<64x128xf32>
    %c0_134 = arith.constant 0 : index
    %c0_135 = arith.constant 0 : index
    %111 = vector.load %arg6[%c0_134, %c0_135] : memref<64x128xbf16, #tpu.memory_space<vmem>>, vector<64x128xbf16>
    %112 = arith.extf %111 : vector<64x128xbf16> to vector<64x128xf32>
    %113 = arith.addf %110, %112 : vector<64x128xf32>
    %114 = arith.truncf %113 : vector<64x128xf32> to vector<64x128xbf16>
    %c4 = arith.constant 4 : index
    %c0_136 = arith.constant 0 : index
    %c0_137 = arith.constant 0 : index
    %115 = vector.load %arg3[%c4, %c0_136, %c0_137] : memref<9x128x128xbf16, #tpu.memory_space<vmem>>, vector<1x128x128xbf16>
    %116 = vector.shape_cast %115 : vector<1x128x128xbf16> to vector<128x128xbf16>
    %cst_138 = arith.constant dense<0.000000e+00> : vector<64x128xf32>
    %117 = tpu.matmul %114, %116, %cst_138 {dimension_numbers = #tpu.dot_dimension_numbers<[1], [0], [0], [1], [0, 0, 1, 1], [], []>} : vector<64x128xbf16>, vector<128x128xbf16>, vector<64x128xf32> -> vector<64x128xf32>
    %c4_139 = arith.constant 4 : index
    %c0_140 = arith.constant 0 : index
    %118 = vector.load %arg4[%c4_139, %c0_140] : memref<12x128xf32, #tpu.memory_space<vmem>>, vector<1x128xf32>
    %119 = vector.broadcast %118 : vector<1x128xf32> to vector<64x128xf32>
    %120 = arith.addf %117, %119 : vector<64x128xf32>
    %cst_141 = arith.constant 0.000000e+00 : f32
    %121 = vector.broadcast %cst_141 : f32 to vector<64x128xf32>
    %122 = arith.maximumf %120, %121 : vector<64x128xf32>
    %123 = arith.truncf %122 : vector<64x128xf32> to vector<64x128xbf16>
    %c5 = arith.constant 5 : index
    %c0_142 = arith.constant 0 : index
    %c0_143 = arith.constant 0 : index
    %124 = vector.load %arg3[%c5, %c0_142, %c0_143] : memref<9x128x128xbf16, #tpu.memory_space<vmem>>, vector<1x128x128xbf16>
    %125 = vector.shape_cast %124 : vector<1x128x128xbf16> to vector<128x128xbf16>
    %cst_144 = arith.constant dense<0.000000e+00> : vector<64x128xf32>
    %126 = tpu.matmul %123, %125, %cst_144 {dimension_numbers = #tpu.dot_dimension_numbers<[1], [0], [0], [1], [0, 0, 1, 1], [], []>} : vector<64x128xbf16>, vector<128x128xbf16>, vector<64x128xf32> -> vector<64x128xf32>
    %c5_145 = arith.constant 5 : index
    %c0_146 = arith.constant 0 : index
    %127 = vector.load %arg4[%c5_145, %c0_146] : memref<12x128xf32, #tpu.memory_space<vmem>>, vector<1x128xf32>
    %128 = vector.broadcast %127 : vector<1x128xf32> to vector<64x128xf32>
    %129 = arith.addf %126, %128 : vector<64x128xf32>
    %cst_147 = arith.constant 0.000000e+00 : f32
    %130 = vector.broadcast %cst_147 : f32 to vector<64x128xf32>
    %131 = arith.maximumf %129, %130 : vector<64x128xf32>
    %132 = arith.truncf %131 : vector<64x128xf32> to vector<64x128xbf16>
    %c0_148 = arith.constant 0 : index
    %c0_149 = arith.constant 0 : index
    %133 = vector.load %arg6[%c0_148, %c0_149] : memref<64x128xbf16, #tpu.memory_space<vmem>>, vector<64x128xbf16>
    tpu.vector_store %arg6[%c0_148, %c0_149], %132 {strides = array<i32>} : memref<64x128xbf16, #tpu.memory_space<vmem>>, vector<64x128xbf16>,
    %c0_150 = arith.constant 0 : index
    %c0_151 = arith.constant 0 : index
    %c0_152 = arith.constant 0 : index
    %134 = vector.load %arg2[%c0_150, %c0_151, %c0_152] : memref<4x16x16xbf16, #tpu.memory_space<vmem>>, vector<1x16x16xbf16>
    %135 = vector.shape_cast %134 : vector<1x16x16xbf16> to vector<16x16xbf16>
    %c0_153 = arith.constant 0 : index
    %c0_154 = arith.constant 0 : index
    %136 = vector.load %arg6[%c0_153, %c0_154] : memref<64x128xbf16, #tpu.memory_space<vmem>>, vector<16x128xbf16>
    %cst_155 = arith.constant dense<0.000000e+00> : vector<16x128xf32>
    %137 = tpu.matmul %135, %136, %cst_155 {dimension_numbers = #tpu.dot_dimension_numbers<[1], [0], [0], [1], [0, 0, 1, 1], [], []>} : vector<16x16xbf16>, vector<16x128xbf16>, vector<16x128xf32> -> vector<16x128xf32>
    %c0_156 = arith.constant 0 : index
    %c0_157 = arith.constant 0 : index
    %138 = vector.load %arg7[%c0_156, %c0_157] : memref<64x128xf32, #tpu.memory_space<vmem>>, vector<16x128xf32>
    tpu.vector_store %arg7[%c0_156, %c0_157], %137 {strides = array<i32>} : memref<64x128xf32, #tpu.memory_space<vmem>>, vector<16x128xf32>,
    %c1_158 = arith.constant 1 : index
    %c0_159 = arith.constant 0 : index
    %c0_160 = arith.constant 0 : index
    %139 = vector.load %arg2[%c1_158, %c0_159, %c0_160] : memref<4x16x16xbf16, #tpu.memory_space<vmem>>, vector<1x16x16xbf16>
    %140 = vector.shape_cast %139 : vector<1x16x16xbf16> to vector<16x16xbf16>
    %c16_161 = arith.constant 16 : index
    %c0_162 = arith.constant 0 : index
    %141 = vector.load %arg6[%c16_161, %c0_162] : memref<64x128xbf16, #tpu.memory_space<vmem>>, vector<16x128xbf16>
    %cst_163 = arith.constant dense<0.000000e+00> : vector<16x128xf32>
    %142 = tpu.matmul %140, %141, %cst_163 {dimension_numbers = #tpu.dot_dimension_numbers<[1], [0], [0], [1], [0, 0, 1, 1], [], []>} : vector<16x16xbf16>, vector<16x128xbf16>, vector<16x128xf32> -> vector<16x128xf32>
    %c16_164 = arith.constant 16 : index
    %c0_165 = arith.constant 0 : index
    %143 = vector.load %arg7[%c16_164, %c0_165] : memref<64x128xf32, #tpu.memory_space<vmem>>, vector<16x128xf32>
    tpu.vector_store %arg7[%c16_164, %c0_165], %142 {strides = array<i32>} : memref<64x128xf32, #tpu.memory_space<vmem>>, vector<16x128xf32>,
    %c2_166 = arith.constant 2 : index
    %c0_167 = arith.constant 0 : index
    %c0_168 = arith.constant 0 : index
    %144 = vector.load %arg2[%c2_166, %c0_167, %c0_168] : memref<4x16x16xbf16, #tpu.memory_space<vmem>>, vector<1x16x16xbf16>
    %145 = vector.shape_cast %144 : vector<1x16x16xbf16> to vector<16x16xbf16>
    %c32_169 = arith.constant 32 : index
    %c0_170 = arith.constant 0 : index
    %146 = vector.load %arg6[%c32_169, %c0_170] : memref<64x128xbf16, #tpu.memory_space<vmem>>, vector<16x128xbf16>
    %cst_171 = arith.constant dense<0.000000e+00> : vector<16x128xf32>
    %147 = tpu.matmul %145, %146, %cst_171 {dimension_numbers = #tpu.dot_dimension_numbers<[1], [0], [0], [1], [0, 0, 1, 1], [], []>} : vector<16x16xbf16>, vector<16x128xbf16>, vector<16x128xf32> -> vector<16x128xf32>
    %c32_172 = arith.constant 32 : index
    %c0_173 = arith.constant 0 : index
    %148 = vector.load %arg7[%c32_172, %c0_173] : memref<64x128xf32, #tpu.memory_space<vmem>>, vector<16x128xf32>
    tpu.vector_store %arg7[%c32_172, %c0_173], %147 {strides = array<i32>} : memref<64x128xf32, #tpu.memory_space<vmem>>, vector<16x128xf32>,
    %c3_174 = arith.constant 3 : index
    %c0_175 = arith.constant 0 : index
    %c0_176 = arith.constant 0 : index
    %149 = vector.load %arg2[%c3_174, %c0_175, %c0_176] : memref<4x16x16xbf16, #tpu.memory_space<vmem>>, vector<1x16x16xbf16>
    %150 = vector.shape_cast %149 : vector<1x16x16xbf16> to vector<16x16xbf16>
    %c48_177 = arith.constant 48 : index
    %c0_178 = arith.constant 0 : index
    %151 = vector.load %arg6[%c48_177, %c0_178] : memref<64x128xbf16, #tpu.memory_space<vmem>>, vector<16x128xbf16>
    %cst_179 = arith.constant dense<0.000000e+00> : vector<16x128xf32>
    %152 = tpu.matmul %150, %151, %cst_179 {dimension_numbers = #tpu.dot_dimension_numbers<[1], [0], [0], [1], [0, 0, 1, 1], [], []>} : vector<16x16xbf16>, vector<16x128xbf16>, vector<16x128xf32> -> vector<16x128xf32>
    %c48_180 = arith.constant 48 : index
    %c0_181 = arith.constant 0 : index
    %153 = vector.load %arg7[%c48_180, %c0_181] : memref<64x128xf32, #tpu.memory_space<vmem>>, vector<16x128xf32>
    tpu.vector_store %arg7[%c48_180, %c0_181], %152 {strides = array<i32>} : memref<64x128xf32, #tpu.memory_space<vmem>>, vector<16x128xf32>,
    %c0_182 = arith.constant 0 : index
    %c0_183 = arith.constant 0 : index
    %154 = vector.load %arg7[%c0_182, %c0_183] : memref<64x128xf32, #tpu.memory_space<vmem>>, vector<64x128xf32>
    %c0_184 = arith.constant 0 : index
    %c0_185 = arith.constant 0 : index
    %155 = vector.load %arg6[%c0_184, %c0_185] : memref<64x128xbf16, #tpu.memory_space<vmem>>, vector<64x128xbf16>
    %156 = arith.extf %155 : vector<64x128xbf16> to vector<64x128xf32>
    %157 = arith.addf %154, %156 : vector<64x128xf32>
    %158 = arith.truncf %157 : vector<64x128xf32> to vector<64x128xbf16>
    %c6 = arith.constant 6 : index
    %c0_186 = arith.constant 0 : index
    %c0_187 = arith.constant 0 : index
    %159 = vector.load %arg3[%c6, %c0_186, %c0_187] : memref<9x128x128xbf16, #tpu.memory_space<vmem>>, vector<1x128x128xbf16>
    %160 = vector.shape_cast %159 : vector<1x128x128xbf16> to vector<128x128xbf16>
    %cst_188 = arith.constant dense<0.000000e+00> : vector<64x128xf32>
    %161 = tpu.matmul %158, %160, %cst_188 {dimension_numbers = #tpu.dot_dimension_numbers<[1], [0], [0], [1], [0, 0, 1, 1], [], []>} : vector<64x128xbf16>, vector<128x128xbf16>, vector<64x128xf32> -> vector<64x128xf32>
    %c6_189 = arith.constant 6 : index
    %c0_190 = arith.constant 0 : index
    %162 = vector.load %arg4[%c6_189, %c0_190] : memref<12x128xf32, #tpu.memory_space<vmem>>, vector<1x128xf32>
    %163 = vector.broadcast %162 : vector<1x128xf32> to vector<64x128xf32>
    %164 = arith.addf %161, %163 : vector<64x128xf32>
    %cst_191 = arith.constant 0.000000e+00 : f32
    %165 = vector.broadcast %cst_191 : f32 to vector<64x128xf32>
    %166 = arith.maximumf %164, %165 : vector<64x128xf32>
    %167 = arith.truncf %166 : vector<64x128xf32> to vector<64x128xbf16>
    %c7 = arith.constant 7 : index
    %c0_192 = arith.constant 0 : index
    %c0_193 = arith.constant 0 : index
    %168 = vector.load %arg3[%c7, %c0_192, %c0_193] : memref<9x128x128xbf16, #tpu.memory_space<vmem>>, vector<1x128x128xbf16>
    %169 = vector.shape_cast %168 : vector<1x128x128xbf16> to vector<128x128xbf16>
    %cst_194 = arith.constant dense<0.000000e+00> : vector<64x128xf32>
    %170 = tpu.matmul %167, %169, %cst_194 {dimension_numbers = #tpu.dot_dimension_numbers<[1], [0], [0], [1], [0, 0, 1, 1], [], []>} : vector<64x128xbf16>, vector<128x128xbf16>, vector<64x128xf32> -> vector<64x128xf32>
    %c7_195 = arith.constant 7 : index
    %c0_196 = arith.constant 0 : index
    %171 = vector.load %arg4[%c7_195, %c0_196] : memref<12x128xf32, #tpu.memory_space<vmem>>, vector<1x128xf32>
    %172 = vector.broadcast %171 : vector<1x128xf32> to vector<64x128xf32>
    %173 = arith.addf %170, %172 : vector<64x128xf32>
    %174 = arith.truncf %173 : vector<64x128xf32> to vector<64x128xbf16>
    %c0_197 = arith.constant 0 : index
    %c0_198 = arith.constant 0 : index
    %175 = vector.load %arg6[%c0_197, %c0_198] : memref<64x128xbf16, #tpu.memory_space<vmem>>, vector<64x128xbf16>
    tpu.vector_store %arg6[%c0_197, %c0_198], %174 {strides = array<i32>} : memref<64x128xbf16, #tpu.memory_space<vmem>>, vector<64x128xbf16>,
    %c0_199 = arith.constant 0 : index
    %c0_200 = arith.constant 0 : index
    %176 = vector.load %arg6[%c0_199, %c0_200] : memref<64x128xbf16, #tpu.memory_space<vmem>>, vector<64x128xbf16>
    %c8 = arith.constant 8 : index
    %c0_201 = arith.constant 0 : index
    %c0_202 = arith.constant 0 : index
    %177 = vector.load %arg3[%c8, %c0_201, %c0_202] : memref<9x128x128xbf16, #tpu.memory_space<vmem>>, vector<1x128x128xbf16>
    %178 = vector.shape_cast %177 : vector<1x128x128xbf16> to vector<128x128xbf16>
    %cst_203 = arith.constant dense<0.000000e+00> : vector<64x128xf32>
    %179 = tpu.matmul %176, %178, %cst_203 {dimension_numbers = #tpu.dot_dimension_numbers<[1], [0], [0], [1], [0, 0, 1, 1], [], []>} : vector<64x128xbf16>, vector<128x128xbf16>, vector<64x128xf32> -> vector<64x128xf32>
    %c8_204 = arith.constant 8 : index
    %c0_205 = arith.constant 0 : index
    %180 = vector.load %arg4[%c8_204, %c0_205] : memref<12x128xf32, #tpu.memory_space<vmem>>, vector<1x128xf32>
    %181 = vector.broadcast %180 : vector<1x128xf32> to vector<64x128xf32>
    %182 = arith.addf %179, %181 : vector<64x128xf32>
    %cst_206 = arith.constant 0.000000e+00 : f32
    %183 = vector.broadcast %cst_206 : f32 to vector<64x128xf32>
    %184 = arith.cmpf oge, %182, %183 : vector<64x128xf32>
    %cst_207 = arith.constant 0.00999999977 : f32
    %185 = vector.broadcast %cst_207 : f32 to vector<64x128xf32>
    %186 = arith.mulf %185, %182 : vector<64x128xf32>
    %187 = arith.select %184, %182, %186 : vector<64x128xi1>, vector<64x128xf32>
    %188 = arith.truncf %179 : vector<64x128xf32> to vector<64x128xbf16>
    %c0_208 = arith.constant 0 : index
    %c0_209 = arith.constant 0 : index
    %189 = vector.load %arg6[%c0_208, %c0_209] : memref<64x128xbf16, #tpu.memory_space<vmem>>, vector<64x128xbf16>
    tpu.vector_store %arg6[%c0_208, %c0_209], %188 {strides = array<i32>} : memref<64x128xbf16, #tpu.memory_space<vmem>>, vector<64x128xbf16>,
    %c0_210 = arith.constant 0 : index
    %c0_211 = arith.constant 0 : index
    %c0_212 = arith.constant 0 : index
    %190 = vector.load %arg2[%c0_210, %c0_211, %c0_212] : memref<4x16x16xbf16, #tpu.memory_space<vmem>>, vector<1x16x16xbf16>
    %191 = vector.shape_cast %190 : vector<1x16x16xbf16> to vector<16x16xbf16>
    %c0_213 = arith.constant 0 : index
    %c0_214 = arith.constant 0 : index
    %192 = vector.load %arg6[%c0_213, %c0_214] : memref<64x128xbf16, #tpu.memory_space<vmem>>, vector<16x128xbf16>
    %cst_215 = arith.constant dense<0.000000e+00> : vector<16x128xf32>
    %193 = tpu.matmul %191, %192, %cst_215 {dimension_numbers = #tpu.dot_dimension_numbers<[1], [0], [0], [1], [0, 0, 1, 1], [], []>} : vector<16x16xbf16>, vector<16x128xbf16>, vector<16x128xf32> -> vector<16x128xf32>
    %c0_216 = arith.constant 0 : index
    %c0_217 = arith.constant 0 : index
    %194 = vector.load %arg7[%c0_216, %c0_217] : memref<64x128xf32, #tpu.memory_space<vmem>>, vector<16x128xf32>
    tpu.vector_store %arg7[%c0_216, %c0_217], %193 {strides = array<i32>} : memref<64x128xf32, #tpu.memory_space<vmem>>, vector<16x128xf32>,
    %c1_218 = arith.constant 1 : index
    %c0_219 = arith.constant 0 : index
    %c0_220 = arith.constant 0 : index
    %195 = vector.load %arg2[%c1_218, %c0_219, %c0_220] : memref<4x16x16xbf16, #tpu.memory_space<vmem>>, vector<1x16x16xbf16>
    %196 = vector.shape_cast %195 : vector<1x16x16xbf16> to vector<16x16xbf16>
    %c16_221 = arith.constant 16 : index
    %c0_222 = arith.constant 0 : index
    %197 = vector.load %arg6[%c16_221, %c0_222] : memref<64x128xbf16, #tpu.memory_space<vmem>>, vector<16x128xbf16>
    %cst_223 = arith.constant dense<0.000000e+00> : vector<16x128xf32>
    %198 = tpu.matmul %196, %197, %cst_223 {dimension_numbers = #tpu.dot_dimension_numbers<[1], [0], [0], [1], [0, 0, 1, 1], [], []>} : vector<16x16xbf16>, vector<16x128xbf16>, vector<16x128xf32> -> vector<16x128xf32>
    %c16_224 = arith.constant 16 : index
    %c0_225 = arith.constant 0 : index
    %199 = vector.load %arg7[%c16_224, %c0_225] : memref<64x128xf32, #tpu.memory_space<vmem>>, vector<16x128xf32>
    tpu.vector_store %arg7[%c16_224, %c0_225], %198 {strides = array<i32>} : memref<64x128xf32, #tpu.memory_space<vmem>>, vector<16x128xf32>,
    %c2_226 = arith.constant 2 : index
    %c0_227 = arith.constant 0 : index
    %c0_228 = arith.constant 0 : index
    %200 = vector.load %arg2[%c2_226, %c0_227, %c0_228] : memref<4x16x16xbf16, #tpu.memory_space<vmem>>, vector<1x16x16xbf16>
    %201 = vector.shape_cast %200 : vector<1x16x16xbf16> to vector<16x16xbf16>
    %c32_229 = arith.constant 32 : index
    %c0_230 = arith.constant 0 : index
    %202 = vector.load %arg6[%c32_229, %c0_230] : memref<64x128xbf16, #tpu.memory_space<vmem>>, vector<16x128xbf16>
    %cst_231 = arith.constant dense<0.000000e+00> : vector<16x128xf32>
    %203 = tpu.matmul %201, %202, %cst_231 {dimension_numbers = #tpu.dot_dimension_numbers<[1], [0], [0], [1], [0, 0, 1, 1], [], []>} : vector<16x16xbf16>, vector<16x128xbf16>, vector<16x128xf32> -> vector<16x128xf32>
    %c32_232 = arith.constant 32 : index
    %c0_233 = arith.constant 0 : index
    %204 = vector.load %arg7[%c32_232, %c0_233] : memref<64x128xf32, #tpu.memory_space<vmem>>, vector<16x128xf32>
    tpu.vector_store %arg7[%c32_232, %c0_233], %203 {strides = array<i32>} : memref<64x128xf32, #tpu.memory_space<vmem>>, vector<16x128xf32>,
    %c3_234 = arith.constant 3 : index
    %c0_235 = arith.constant 0 : index
    %c0_236 = arith.constant 0 : index
    %205 = vector.load %arg2[%c3_234, %c0_235, %c0_236] : memref<4x16x16xbf16, #tpu.memory_space<vmem>>, vector<1x16x16xbf16>
    %206 = vector.shape_cast %205 : vector<1x16x16xbf16> to vector<16x16xbf16>
    %c48_237 = arith.constant 48 : index
    %c0_238 = arith.constant 0 : index
    %207 = vector.load %arg6[%c48_237, %c0_238] : memref<64x128xbf16, #tpu.memory_space<vmem>>, vector<16x128xbf16>
    %cst_239 = arith.constant dense<0.000000e+00> : vector<16x128xf32>
    %208 = tpu.matmul %206, %207, %cst_239 {dimension_numbers = #tpu.dot_dimension_numbers<[1], [0], [0], [1], [0, 0, 1, 1], [], []>} : vector<16x16xbf16>, vector<16x128xbf16>, vector<16x128xf32> -> vector<16x128xf32>
    %c48_240 = arith.constant 48 : index
    %c0_241 = arith.constant 0 : index
    %209 = vector.load %arg7[%c48_240, %c0_241] : memref<64x128xf32, #tpu.memory_space<vmem>>, vector<16x128xf32>
    tpu.vector_store %arg7[%c48_240, %c0_241], %208 {strides = array<i32>} : memref<64x128xf32, #tpu.memory_space<vmem>>, vector<16x128xf32>,
    %c0_242 = arith.constant 0 : index
    %c0_243 = arith.constant 0 : index
    %210 = vector.load %arg7[%c0_242, %c0_243] : memref<64x128xf32, #tpu.memory_space<vmem>>, vector<64x128xf32>
    %211 = arith.addf %210, %179 : vector<64x128xf32>
    %c9 = arith.constant 9 : index
    %c0_244 = arith.constant 0 : index
    %212 = vector.load %arg4[%c9, %c0_244] : memref<12x128xf32, #tpu.memory_space<vmem>>, vector<1x128xf32>
    %213 = vector.broadcast %212 : vector<1x128xf32> to vector<64x128xf32>
    %214 = arith.addf %211, %213 : vector<64x128xf32>
    %cst_245 = arith.constant 0.000000e+00 : f32
    %215 = vector.broadcast %cst_245 : f32 to vector<64x128xf32>
    %216 = arith.maximumf %214, %215 : vector<64x128xf32>
    %c10 = arith.constant 10 : index
    %c0_246 = arith.constant 0 : index
    %217 = vector.load %arg4[%c10, %c0_246] : memref<12x128xf32, #tpu.memory_space<vmem>>, vector<1x128xf32>
    %218 = vector.broadcast %217 : vector<1x128xf32> to vector<64x128xf32>
    %219 = arith.mulf %216, %218 : vector<64x128xf32>
    %c11 = arith.constant 11 : index
    %c0_247 = arith.constant 0 : index
    %220 = vector.load %arg4[%c11, %c0_247] : memref<12x128xf32, #tpu.memory_space<vmem>>, vector<1x128xf32>
    %221 = vector.broadcast %220 : vector<1x128xf32> to vector<64x128xf32>
    %222 = arith.addf %219, %221 : vector<64x128xf32>
    %223 = tpu.iota {dimensions = array<i32: 1>} : vector<64x128xi32>
    %c1_i32 = arith.constant 1 : i32
    %224 = vector.broadcast %c1_i32 : i32 to vector<64x128xi32>
    %225 = arith.cmpi eq, %223, %224 : vector<64x128xi32>
    %226 = arith.select %225, %187, %222 : vector<64x128xi1>, vector<64x128xf32>
    %c0_248 = arith.constant 0 : index
    %c0_249 = arith.constant 0 : index
    %227 = vector.load %arg5[%c0_248, %c0_249] : memref<64x128xf32, #tpu.memory_space<vmem>>, vector<64x128xf32>
    tpu.vector_store %arg5[%c0_248, %c0_249], %226 {strides = array<i32>} : memref<64x128xf32, #tpu.memory_space<vmem>>, vector<64x128xf32>,
    return
  }
  func.func @transform_0(%arg0: i32) -> (i32, i32) {
    %c0_i32 = arith.constant 0 : i32
    %c0_i32_0 = arith.constant 0 : i32
    return %arg0, %c0_i32 : i32, i32
  }
  func.func @transform_1(%arg0: i32) -> (i32, i32, i32) {
    %c0_i32 = arith.constant 0 : i32
    %c0_i32_0 = arith.constant 0 : i32
    %c0_i32_1 = arith.constant 0 : i32
    return %arg0, %c0_i32, %c0_i32_0 : i32, i32, i32
  }
  func.func @transform_2(%arg0: i32) -> (i32, i32, i32) {
    %c0_i32 = arith.constant 0 : i32
    %c0_i32_0 = arith.constant 0 : i32
    %c0_i32_1 = arith.constant 0 : i32
    %c0_i32_2 = arith.constant 0 : i32
    return %c0_i32, %c0_i32_0, %c0_i32_1 : i32, i32, i32
  }
  func.func @transform_3(%arg0: i32) -> (i32, i32) {
    %c0_i32 = arith.constant 0 : i32
    %c0_i32_0 = arith.constant 0 : i32
    %c0_i32_1 = arith.constant 0 : i32
    return %c0_i32, %c0_i32_0 : i32, i32
  }
  func.func @transform_4(%arg0: i32) -> (i32, i32) {
    %c0_i32 = arith.constant 0 : i32
    %c0_i32_0 = arith.constant 0 : i32
    return %arg0, %c0_i32 : i32, i32
  }
}

</mosaic_0001>

<llo_original>
// kernel: tpu_custom_call.1
$region0: #{tpu_custom_call.1}
  #allocation0 [shape = 'u32[]', space=smem, size = 0x4, offset = 0x4, fixed_abs, tag = 'smem constant byte address 0x4 - core index']
  #allocation1 [shape = 'u32[144,128]{1,0:T(1,128)}', space=vmem, size = 0x12000, scoped, tag = 'internal scratch']
  #allocation2 [shape = 'bf16[64,128]{1,0:T(16,128)(2,1)}', space=vmem, size = 0x4000, scoped, tag = 'scratch operand']
  #allocation3 [shape = 'f32[64,128]{1,0:T(8,128)}', space=vmem, size = 0x8000, scoped, tag = 'scratch operand']
  %s0 = inlined_call_operand.hbm [shape: bf16[64,128], index: 0, kind: input, shape index: {}]
  %s1 = inlined_call_operand.hbm [shape: bf16[4,16,16], index: 1, kind: input, shape index: {}]
  %s2 = inlined_call_operand.hbm [shape: bf16[9,128,128], index: 2, kind: input, shape index: {}]
  %s3 = inlined_call_operand.hbm [shape: f32[12,128], index: 3, kind: input, shape index: {}]
  %s4 = inlined_call_operand.hbm [shape: f32[64,128], index: 4, kind: output, shape index: {}]
  %s5 = sld [smem:[#allocation0]]
  $region42: #{tpu_custom_call.1} parent=0
    _
  %s7 = ssub.s32 1, %s5
  %s8 = scalar_select 0, %s7, %s5
  $region1: #{tpu_custom_call.1} parent=0
    #allocation4 [shape = 'u8[16384]{0}', space=vmem, size = 0x4000, scoped, tag = 'input window, operand 0, single buffered']
    #allocation5 [shape = 's32[1]{0}', space=sflag, size = 0x4, scoped, tag = 'scoped memory for tpu_custom_call.1']
    #allocation6 [shape = 's32[1]{0}', space=sflag, size = 0x4, scoped, tag = 'scoped memory for tpu_custom_call.1']
    #allocation7 [shape = 'u8[16384]{0}', space=vmem, size = 0x4000, scoped, tag = 'input window, operand 1, single buffered']
    #allocation8 [shape = 's32[1]{0}', space=sflag, size = 0x4, scoped, tag = 'scoped memory for tpu_custom_call.1']
    #allocation9 [shape = 'u8[294912]{0}', space=vmem, size = 0x48000, scoped, tag = 'input window, operand 2, single buffered']
    #allocation10 [shape = 'u8[8192]{0}', space=vmem, size = 0x2000, scoped, tag = 'input window, operand 3, single buffered']
    #allocation11 [shape = 's32[1]{0}', space=sflag, size = 0x4, scoped, tag = 'scoped memory for tpu_custom_call.1']
    #allocation12 [shape = 'u8[32768]{0}', space=vmem, size = 0x8000, scoped, tag = 'output window, operand 0, single buffered']
    %9 = vsyncpa [#allocation5], 0
    %10 = vsyncpa [#allocation8], 0
    %11 = vsyncpa [#allocation11], 0
    %12 = vsyncpa [#allocation6], 0
    // Predicated region
    $region2: #{tpu_custom_call.1} parent=1 // pred_check
      _
    $region3: #{tpu_custom_call.1} parent=1 // pred_check_branch
      %14 = sbr.rel (0) target = $region5
    $region4: #{tpu_custom_call.1} parent=1 // pred_region
      %s16 = ssub.s32 512, 512
      %17 = vsyncadd [#allocation5], %s16
      %s18 = sshll.u32 [#allocation4], 4
      %s19 = int_to_ptr.vmem [resolvable:$true] %s18
      %24 = dma.hbm_to_vmem [thread:$0]  %s0, 512, %s19, [#allocation5], 64, 64, 4
    $region5: #{tpu_custom_call.1} parent=1 // pred_fallthru
      _
    // Predicated region
    $region6: #{tpu_custom_call.1} parent=1 // pred_check
      _
    $region7: #{tpu_custom_call.1} parent=1 // pred_check_branch
      %26 = sbr.rel (0) target = $region9
    $region8: #{tpu_custom_call.1} parent=1 // pred_region
      %s28 = ssub.s32 512, 512
      %29 = vsyncadd [#allocation8], %s28
      %s30 = sshll.u32 [#allocation7], 4
      %s31 = int_to_ptr.vmem [resolvable:$true] %s30
      %36 = dma.hbm_to_vmem [thread:$0]  %s1, 512, %s31, [#allocation8], 64, 64, 4
    $region9: #{tpu_custom_call.1} parent=1 // pred_fallthru
      _
    // Predicated region
    $region10: #{tpu_custom_call.1} parent=1 // pred_check
      _
    $region11: #{tpu_custom_call.1} parent=1 // pred_check_branch
      %38 = sbr.rel (0) target = $region13
    $region12: #{tpu_custom_call.1} parent=1 // pred_region
      %s40 = ssub.s32 9216, 9216
      %41 = vsyncadd [#allocation8], %s40
      %s42 = sshll.u32 [#allocation9], 4
      %s43 = int_to_ptr.vmem [resolvable:$true] %s42
      %48 = dma.hbm_to_vmem [thread:$0]  %s2, 9216, %s43, [#allocation8], 64, 64, 4
    $region13: #{tpu_custom_call.1} parent=1 // pred_fallthru
      _
    // Predicated region
    $region14: #{tpu_custom_call.1} parent=1 // pred_check
      _
    $region15: #{tpu_custom_call.1} parent=1 // pred_check_branch
      %50 = sbr.rel (0) target = $region17
    $region16: #{tpu_custom_call.1} parent=1 // pred_region
      %s52 = ssub.s32 256, 256
      %53 = vsyncadd [#allocation11], %s52
      %s54 = sshll.u32 [#allocation10], 4
      %s55 = int_to_ptr.vmem [resolvable:$true] %s54
      %60 = dma.hbm_to_vmem [thread:$0]  %s3, 256, %s55, [#allocation11], 128, 128, 8
    $region17: #{tpu_custom_call.1} parent=1 // pred_fallthru
      _
    // Predicated region
    $region18: #{tpu_custom_call.1} parent=1 // pred_check
      _
    $region19: #{tpu_custom_call.1} parent=1 // pred_check_branch
      %62 = sbr.rel (0) target = $region21
    $region20: #{tpu_custom_call.1} parent=1 // pred_region
      %63 = dma.done [#allocation5], 512
    $region21: #{tpu_custom_call.1} parent=1 // pred_fallthru
      _
    // Predicated region
    $region22: #{tpu_custom_call.1} parent=1 // pred_check
      _
    $region23: #{tpu_custom_call.1} parent=1 // pred_check_branch
      %65 = sbr.rel (0) target = $region25
    $region24: #{tpu_custom_call.1} parent=1 // pred_region
      %66 = dma.done [#allocation8], 512
    $region25: #{tpu_custom_call.1} parent=1 // pred_fallthru
      _
    // Predicated region
    $region26: #{tpu_custom_call.1} parent=1 // pred_check
      _
    $region27: #{tpu_custom_call.1} parent=1 // pred_check_branch
      %68 = sbr.rel (0) target = $region29
    $region28: #{tpu_custom_call.1} parent=1 // pred_region
      %69 = dma.done [#allocation8], 9216
    $region29: #{tpu_custom_call.1} parent=1 // pred_fallthru
      _
    // Predicated region
    $region30: #{tpu_custom_call.1} parent=1 // pred_check
      _
    $region31: #{tpu_custom_call.1} parent=1 // pred_check_branch
      %71 = sbr.rel (0) target = $region33
    $region32: #{tpu_custom_call.1} parent=1 // pred_region
      %72 = dma.done [#allocation11], 256
    $region33: #{tpu_custom_call.1} parent=1 // pred_fallthru
      _
    %v74 = vld [vmem:[#allocation4] sm:$0xf]
    %v75 = vld [vmem:[#allocation4 + $0x4] sm:$0xf]
    %v76 = vld [vmem:[#allocation4 + $0x8] sm:$0xf]
    %v77 = vld [vmem:[#allocation4 + $0xc] sm:$0xf]
    %v78 = vld [vmem:[#allocation4 + $0x10] sm:$0xf]
    %v79 = vld [vmem:[#allocation4 + $0x14] sm:$0xf]
    %v80 = vld [vmem:[#allocation4 + $0x18] sm:$0xf]
    %v81 = vld [vmem:[#allocation4 + $0x1c] sm:$0xf]
    %v90 = vunpack.c.l.b16 %v74
    %v91 = vunpack.c.l.b16 %v75
    %v92 = vunpack.c.l.b16 %v76
    %v93 = vunpack.c.l.b16 %v77
    %v94 = vunpack.c.l.b16 %v78
    %v95 = vunpack.c.l.b16 %v79
    %v96 = vunpack.c.l.b16 %v80
    %v97 = vunpack.c.l.b16 %v81
    %v98 = vpack.c.b16 %v91, %v90
    %v99 = vpack.c.b16 %v93, %v92
    %v100 = vpack.c.b16 %v95, %v94
    %v101 = vpack.c.b16 %v97, %v96
    %106 = vst [vmem:[#allocation2] sm:$0xff] %v98
    %107 = vst [vmem:[#allocation2 + $0x8] sm:$0xff] %v99
    %108 = vst [vmem:[#allocation2 + $0x10] sm:$0xff] %v100
    %109 = vst [vmem:[#allocation2 + $0x18] sm:$0xff] %v101
    %v110 = vld [vmem:[#allocation7] sm:$0xf]
    %v111 = vld [vmem:[#allocation7 + $0x4] sm:$0xf]
    %v112 = vld [vmem:[#allocation2] sm:$0xff]
    %v115 = vunpack.c.l.b16 %v110
    %v116 = vunpack.c.l.b16 %v111
    %v117 = vpack.c.b16 %v116, %v115
    %vm118 = vcmask 130048
    %v120 = vsel %vm118, %v117, 0
    %122 = vmatprep.subr.bf16.mxu0 0
    %123 = vmatpush1.bf16.msra.mxu0 %v112
    %124 = vmatprep.subr.bf16.mxu0 0
    %125 = vmatpush1.bf16.msra.mxu0 0
    %126 = vmatprep.subr.bf16.mxu0 0
    %127 = vmatpush1.bf16.msra.mxu0 0
    %128 = vmatprep.subr.bf16.mxu0 0
    %129 = vmatpush1.bf16.msra.mxu0 0
    %130 = vmatprep.subr.bf16.mxu0 0
    %131 = vmatpush1.bf16.msra.mxu0 0
    %132 = vmatprep.subr.bf16.mxu0 0
    %133 = vmatpush1.bf16.msra.mxu0 0
    %134 = vmatprep.subr.bf16.mxu0 0
    %135 = vmatpush1.bf16.msra.mxu0 0
    %136 = vmatprep.subr.bf16.mxu0 0
    %137 = vmatpush1.bf16.msra.mxu0 0
    %138 = vmatprep.subr.bf16.mxu0 0
    %139 = vmatpush1.bf16.msra.mxu0 0
    %140 = vmatprep.subr.bf16.mxu0 0
    %141 = vmatpush1.bf16.msra.mxu0 0
    %142 = vmatprep.subr.bf16.mxu0 0
    %143 = vmatpush1.bf16.msra.mxu0 0
    %144 = vmatprep.subr.bf16.mxu0 0
    %145 = vmatpush1.bf16.msra.mxu0 0
    %146 = vmatprep.subr.bf16.mxu0 0
    %147 = vmatpush1.bf16.msra.mxu0 0
    %148 = vmatprep.subr.bf16.mxu0 0
    %149 = vmatpush1.bf16.msra.mxu0 0
    %150 = vmatprep.subr.bf16.mxu0 0
    %151 = vmatpush1.bf16.msra.mxu0 0
    %152 = vmatprep.subr.bf16.mxu0 0
    %153 = vmatpush1.bf16.msra.mxu0 0
    %154 = vmatprep.mubr.bf16.mxu0 0
    %155 = vmatmul.mubr.bf16.gmra.mrb[0].mxu0 %v120
    %v156 = vpop.f32.mrb[0].mxu0
    %v157 = vadd.f32 0.0, %v156
    %v158 = vpop.f32.mrb[0].mxu0
    %v159 = vpop.f32.mrb[0].mxu0
    %v160 = vadd.f32 0.0, %v159
    %v161 = vpop.f32.mrb[0].mxu0
    %162 = vdwg.mxu0
    %163 = vst [vmem:[#allocation3] sm:$0xff] %v157
    %164 = vst [vmem:[#allocation3 + $0x8] sm:$0xff] %v160
    %s165 = scalar_lea.vmem [#allocation7], 8
    %v166 = vld [vmem:[%s165] sm:$0xf]
    %v167 = vld [vmem:[%s165 + $0x4] sm:$0xf]
    %v168 = vld [vmem:[#allocation2 + $0x8] sm:$0xff]
    %v171 = vunpack.c.l.b16 %v166
    %v172 = vunpack.c.l.b16 %v167
    %v173 = vpack.c.b16 %v172, %v171
    %v175 = vsel %vm118, %v173, 0
    %177 = vmatprep.subr.bf16.mxu0 0
    %178 = vmatpush1.bf16.msra.mxu0 %v168
    %179 = vmatprep.subr.bf16.mxu0 0
    %180 = vmatpush1.bf16.msra.mxu0 0
    %181 = vmatprep.subr.bf16.mxu0 0
    %182 = vmatpush1.bf16.msra.mxu0 0
    %183 = vmatprep.subr.bf16.mxu0 0
    %184 = vmatpush1.bf16.msra.mxu0 0
    %185 = vmatprep.subr.bf16.mxu0 0
    %186 = vmatpush1.bf16.msra.mxu0 0
    %187 = vmatprep.subr.bf16.mxu0 0
    %188 = vmatpush1.bf16.msra.mxu0 0
    %189 = vmatprep.subr.bf16.mxu0 0
    %190 = vmatpush1.bf16.msra.mxu0 0
    %191 = vmatprep.subr.bf16.mxu0 0
    %192 = vmatpush1.bf16.msra.mxu0 0
    %193 = vmatprep.subr.bf16.mxu0 0
    %194 = vmatpush1.bf16.msra.mxu0 0
    %195 = vmatprep.subr.bf16.mxu0 0
    %196 = vmatpush1.bf16.msra.mxu0 0
    %197 = vmatprep.subr.bf16.mxu0 0
    %198 = vmatpush1.bf16.msra.mxu0 0
    %199 = vmatprep.subr.bf16.mxu0 0
    %200 = vmatpush1.bf16.msra.mxu0 0
    %201 = vmatprep.subr.bf16.mxu0 0
    %202 = vmatpush1.bf16.msra.mxu0 0
    %203 = vmatprep.subr.bf16.mxu0 0
    %204 = vmatpush1.bf16.msra.mxu0 0
    %205 = vmatprep.subr.bf16.mxu0 0
    %206 = vmatpush1.bf16.msra.mxu0 0
    %207 = vmatprep.subr.bf16.mxu0 0
    %208 = vmatpush1.bf16.msra.mxu0 0
    %209 = vmatprep.mubr.bf16.mxu0 0
    %210 = vmatmul.mubr.bf16.gmra.mrb[0].mxu0 %v175
    %v211 = vpop.f32.mrb[0].mxu0
    %v212 = vadd.f32 0.0, %v211
    %v213 = vpop.f32.mrb[0].mxu0
    %v214 = vpop.f32.mrb[0].mxu0
    %v215 = vadd.f32 0.0, %v214
    %v216 = vpop.f32.mrb[0].mxu0
    %217 = vdwg.mxu0
    %218 = vst [vmem:[#allocation3 + $0x10] sm:$0xff] %v212
    %219 = vst [vmem:[#allocation3 + $0x18] sm:$0xff] %v215
    %s220 = scalar_lea.vmem [#allocation7], 16
    %v221 = vld [vmem:[%s220] sm:$0xf]
    %v222 = vld [vmem:[%s220 + $0x4] sm:$0xf]
    %v223 = vld [vmem:[#allocation2 + $0x10] sm:$0xff]
    %v226 = vunpack.c.l.b16 %v221
    %v227 = vunpack.c.l.b16 %v222
    %v228 = vpack.c.b16 %v227, %v226
    %v230 = vsel %vm118, %v228, 0
    %232 = vmatprep.subr.bf16.mxu0 0
    %233 = vmatpush1.bf16.msra.mxu0 %v223
    %234 = vmatprep.subr.bf16.mxu0 0
    %235 = vmatpush1.bf16.msra.mxu0 0
    %236 = vmatprep.subr.bf16.mxu0 0
    %237 = vmatpush1.bf16.msra.mxu0 0
    %238 = vmatprep.subr.bf16.mxu0 0
    %239 = vmatpush1.bf16.msra.mxu0 0
    %240 = vmatprep.subr.bf16.mxu0 0
    %241 = vmatpush1.bf16.msra.mxu0 0
    %242 = vmatprep.subr.bf16.mxu0 0
    %243 = vmatpush1.bf16.msra.mxu0 0
    %244 = vmatprep.subr.bf16.mxu0 0
    %245 = vmatpush1.bf16.msra.mxu0 0
    %246 = vmatprep.subr.bf16.mxu0 0
    %247 = vmatpush1.bf16.msra.mxu0 0
    %248 = vmatprep.subr.bf16.mxu0 0
    %249 = vmatpush1.bf16.msra.mxu0 0
    %250 = vmatprep.subr.bf16.mxu0 0
    %251 = vmatpush1.bf16.msra.mxu0 0
    %252 = vmatprep.subr.bf16.mxu0 0
    %253 = vmatpush1.bf16.msra.mxu0 0
    %254 = vmatprep.subr.bf16.mxu0 0
    %255 = vmatpush1.bf16.msra.mxu0 0
    %256 = vmatprep.subr.bf16.mxu0 0
    %257 = vmatpush1.bf16.msra.mxu0 0
    %258 = vmatprep.subr.bf16.mxu0 0
    %259 = vmatpush1.bf16.msra.mxu0 0
    %260 = vmatprep.subr.bf16.mxu0 0
    %261 = vmatpush1.bf16.msra.mxu0 0
    %262 = vmatprep.subr.bf16.mxu0 0
    %263 = vmatpush1.bf16.msra.mxu0 0
    %264 = vmatprep.mubr.bf16.mxu0 0
    %265 = vmatmul.mubr.bf16.gmra.mrb[0].mxu0 %v230
    %v266 = vpop.f32.mrb[0].mxu0
    %v267 = vadd.f32 0.0, %v266
    %v268 = vpop.f32.mrb[0].mxu0
    %v269 = vpop.f32.mrb[0].mxu0
    %v270 = vadd.f32 0.0, %v269
    %v271 = vpop.f32.mrb[0].mxu0
    %272 = vdwg.mxu0
    %273 = vst [vmem:[#allocation3 + $0x20] sm:$0xff] %v267
    %274 = vst [vmem:[#allocation3 + $0x28] sm:$0xff] %v270
    %s275 = scalar_lea.vmem [#allocation7], 24
    %v276 = vld [vmem:[%s275] sm:$0xf]
    %v277 = vld [vmem:[%s275 + $0x4] sm:$0xf]
    %v278 = vld [vmem:[#allocation2 + $0x18] sm:$0xff]
    %v281 = vunpack.c.l.b16 %v276
    %v282 = vunpack.c.l.b16 %v277
    %v283 = vpack.c.b16 %v282, %v281
    %v285 = vsel %vm118, %v283, 0
    %287 = vmatprep.subr.bf16.mxu0 0
    %288 = vmatpush1.bf16.msra.mxu0 %v278
    %289 = vmatprep.subr.bf16.mxu0 0
    %290 = vmatpush1.bf16.msra.mxu0 0
    %291 = vmatprep.subr.bf16.mxu0 0
    %292 = vmatpush1.bf16.msra.mxu0 0
    %293 = vmatprep.subr.bf16.mxu0 0
    %294 = vmatpush1.bf16.msra.mxu0 0
    %295 = vmatprep.subr.bf16.mxu0 0
    %296 = vmatpush1.bf16.msra.mxu0 0
    %297 = vmatprep.subr.bf16.mxu0 0
    %298 = vmatpush1.bf16.msra.mxu0 0
    %299 = vmatprep.subr.bf16.mxu0 0
    %300 = vmatpush1.bf16.msra.mxu0 0
    %301 = vmatprep.subr.bf16.mxu0 0
    %302 = vmatpush1.bf16.msra.mxu0 0
    %303 = vmatprep.subr.bf16.mxu0 0
    %304 = vmatpush1.bf16.msra.mxu0 0
    %305 = vmatprep.subr.bf16.mxu0 0
    %306 = vmatpush1.bf16.msra.mxu0 0
    %307 = vmatprep.subr.bf16.mxu0 0
    %308 = vmatpush1.bf16.msra.mxu0 0
    %309 = vmatprep.subr.bf16.mxu0 0
    %310 = vmatpush1.bf16.msra.mxu0 0
    %311 = vmatprep.subr.bf16.mxu0 0
    %312 = vmatpush1.bf16.msra.mxu0 0
    %313 = vmatprep.subr.bf16.mxu0 0
    %314 = vmatpush1.bf16.msra.mxu0 0
    %315 = vmatprep.subr.bf16.mxu0 0
    %316 = vmatpush1.bf16.msra.mxu0 0
    %317 = vmatprep.subr.bf16.mxu0 0
    %318 = vmatpush1.bf16.msra.mxu0 0
    %319 = vmatprep.mubr.bf16.mxu0 0
    %320 = vmatmul.mubr.bf16.gmra.mrb[0].mxu0 %v285
    %v321 = vpop.f32.mrb[0].mxu0
    %v322 = vadd.f32 0.0, %v321
    %v323 = vpop.f32.mrb[0].mxu0
    %v324 = vpop.f32.mrb[0].mxu0
    %v325 = vadd.f32 0.0, %v324
    %v326 = vpop.f32.mrb[0].mxu0
    %327 = vdwg.mxu0
    %328 = vst [vmem:[#allocation3 + $0x30] sm:$0xff] %v322
    %329 = vst [vmem:[#allocation3 + $0x38] sm:$0xff] %v325
    %v330 = vld [vmem:[#allocation3] sm:$0xff]
    %v331 = vld [vmem:[#allocation3 + $0x8] sm:$0xff]
    %v332 = vld [vmem:[#allocation3 + $0x10] sm:$0xff]
    %v333 = vld [vmem:[#allocation3 + $0x18] sm:$0xff]
    %v334 = vld [vmem:[#allocation3 + $0x20] sm:$0xff]
    %v335 = vld [vmem:[#allocation3 + $0x28] sm:$0xff]
    %v336 = vld [vmem:[#allocation3 + $0x30] sm:$0xff]
    %v337 = vld [vmem:[#allocation3 + $0x38] sm:$0xff]
    %v338 = vld [vmem:[#allocation2] sm:$0xff]
    %v339 = vld [vmem:[#allocation2 + $0x8] sm:$0xff]
    %v340 = vld [vmem:[#allocation2 + $0x10] sm:$0xff]
    %v341 = vld [vmem:[#allocation2 + $0x18] sm:$0xff]
    %v342 = vunpack.c.l.bf16 %v338
    %v343 = vunpack.c.h.bf16 %v338
    %v344 = vunpack.c.l.bf16 %v339
    %v345 = vunpack.c.h.bf16 %v339
    %v346 = vunpack.c.l.bf16 %v340
    %v347 = vunpack.c.h.bf16 %v340
    %v348 = vunpack.c.l.bf16 %v341
    %v349 = vunpack.c.h.bf16 %v341
    %v350 = vadd.f32 %v330, %v342
    %v351 = vadd.f32 %v331, %v343
    %v352 = vadd.f32 %v332, %v344
    %v353 = vadd.f32 %v333, %v345
    %v354 = vadd.f32 %v334, %v346
    %v355 = vadd.f32 %v335, %v347
    %v356 = vadd.f32 %v336, %v348
    %v357 = vadd.f32 %v337, %v349
    %v358 = vpack.c.bf16 %v351, %v350
    %v359 = vpack.c.bf16 %v353, %v352
    %v360 = vpack.c.bf16 %v355, %v354
    %v361 = vpack.c.bf16 %v357, %v356
    %v362 = vld [vmem:[#allocation9] sm:$0xf]
    %v363 = vld [vmem:[#allocation9 + $0x4] sm:$0xf]
    %v364 = vld [vmem:[#allocation9 + $0x8] sm:$0xf]
    %v365 = vld [vmem:[#allocation9 + $0xc] sm:$0xf]
    %v366 = vld [vmem:[#allocation9 + $0x10] sm:$0xf]
    %v367 = vld [vmem:[#allocation9 + $0x14] sm:$0xf]
    %v368 = vld [vmem:[#allocation9 + $0x18] sm:$0xf]
    %v369 = vld [vmem:[#allocation9 + $0x1c] sm:$0xf]
    %v370 = vld [vmem:[#allocation9 + $0x20] sm:$0xf]
    %v371 = vld [vmem:[#allocation9 + $0x24] sm:$0xf]
    %v372 = vld [vmem:[#allocation9 + $0x28] sm:$0xf]
    %v373 = vld [vmem:[#allocation9 + $0x2c] sm:$0xf]
    %v374 = vld [vmem:[#allocation9 + $0x30] sm:$0xf]
    %v375 = vld [vmem:[#allocation9 + $0x34] sm:$0xf]
    %v376 = vld [vmem:[#allocation9 + $0x38] sm:$0xf]
    %v377 = vld [vmem:[#allocation9 + $0x3c] sm:$0xf]
    %v378 = vld [vmem:[#allocation10] sm:$0x1]
    %v379 = vlaneseq
    %v380 = vshrl.u32 %v379, 7
    %v381 = vsub.s32 0, %v380
    %v382 = vrot.slane %v378, %v381
    %v399 = vunpack.c.l.b16 %v362
    %v400 = vunpack.c.l.b16 %v363
    %v401 = vunpack.c.l.b16 %v364
    %v402 = vunpack.c.l.b16 %v365
    %v403 = vunpack.c.l.b16 %v366
    %v404 = vunpack.c.l.b16 %v367
    %v405 = vunpack.c.l.b16 %v368
    %v406 = vunpack.c.l.b16 %v369
    %v407 = vunpack.c.l.b16 %v370
    %v408 = vunpack.c.l.b16 %v371
    %v409 = vunpack.c.l.b16 %v372
    %v410 = vunpack.c.l.b16 %v373
    %v411 = vunpack.c.l.b16 %v374
    %v412 = vunpack.c.l.b16 %v375
    %v413 = vunpack.c.l.b16 %v376
    %v414 = vunpack.c.l.b16 %v377
    %v415 = vpack.c.b16 %v400, %v399
    %v416 = vpack.c.b16 %v402, %v401
    %v417 = vpack.c.b16 %v404, %v403
    %v418 = vpack.c.b16 %v406, %v405
    %v419 = vpack.c.b16 %v408, %v407
    %v420 = vpack.c.b16 %v410, %v409
    %v421 = vpack.c.b16 %v412, %v411
    %v422 = vpack.c.b16 %v414, %v413
    %431 = vmatprep.subr.bf16.mxu0 0
    %432 = vmatpush1.bf16.msra.mxu0 %v415
    %433 = vmatprep.subr.bf16.mxu0 0
    %434 = vmatpush1.bf16.msra.mxu0 %v416
    %435 = vmatprep.subr.bf16.mxu0 0
    %436 = vmatpush1.bf16.msra.mxu0 %v417
    %437 = vmatprep.subr.bf16.mxu0 0
    %438 = vmatpush1.bf16.msra.mxu0 %v418
    %439 = vmatprep.subr.bf16.mxu0 0
    %440 = vmatpush1.bf16.msra.mxu0 %v419
    %441 = vmatprep.subr.bf16.mxu0 0
    %442 = vmatpush1.bf16.msra.mxu0 %v420
    %443 = vmatprep.subr.bf16.mxu0 0
    %444 = vmatpush1.bf16.msra.mxu0 %v421
    %445 = vmatprep.subr.bf16.mxu0 0
    %446 = vmatpush1.bf16.msra.mxu0 %v422
    %447 = vmatprep.subr.bf16.mxu0 0
    %448 = vmatpush1.bf16.msra.mxu0 0
    %449 = vmatprep.subr.bf16.mxu0 0
    %450 = vmatpush1.bf16.msra.mxu0 0
    %451 = vmatprep.subr.bf16.mxu0 0
    %452 = vmatpush1.bf16.msra.mxu0 0
    %453 = vmatprep.subr.bf16.mxu0 0
    %454 = vmatpush1.bf16.msra.mxu0 0
    %455 = vmatprep.subr.bf16.mxu0 0
    %456 = vmatpush1.bf16.msra.mxu0 0
    %457 = vmatprep.subr.bf16.mxu0 0
    %458 = vmatpush1.bf16.msra.mxu0 0
    %459 = vmatprep.subr.bf16.mxu0 0
    %460 = vmatpush1.bf16.msra.mxu0 0
    %461 = vmatprep.subr.bf16.mxu0 0
    %462 = vmatpush1.bf16.msra.mxu0 0
    %463 = vmatprep.mubr.bf16.mxu0 0
    %464 = vmatmul.mubr.bf16.gmra.mrb[0].mxu0 %v358
    %v465 = vpop.f32.mrb[0].mxu0
    %v466 = vadd.f32 %v382, %v465
    %v467 = vpop.f32.mrb[0].mxu0
    %v468 = vpop.f32.mrb[0].mxu0
    %v469 = vadd.f32 %v382, %v468
    %v470 = vpop.f32.mrb[0].mxu0
    %471 = vmatprep.mubr.bf16.mxu0 0
    %472 = vmatmul.mubr.bf16.gmra.mrb[0].mxu0 %v359
    %v473 = vpop.f32.mrb[0].mxu0
    %v474 = vadd.f32 %v382, %v473
    %v475 = vpop.f32.mrb[0].mxu0
    %v476 = vpop.f32.mrb[0].mxu0
    %v477 = vadd.f32 %v382, %v476
    %v478 = vpop.f32.mrb[0].mxu0
    %479 = vmatprep.mubr.bf16.mxu0 0
    %480 = vmatmul.mubr.bf16.gmra.mrb[0].mxu0 %v360
    %v481 = vpop.f32.mrb[0].mxu0
    %v482 = vadd.f32 %v382, %v481
    %v483 = vpop.f32.mrb[0].mxu0
    %v484 = vpop.f32.mrb[0].mxu0
    %v485 = vadd.f32 %v382, %v484
    %v486 = vpop.f32.mrb[0].mxu0
    %487 = vmatprep.mubr.bf16.mxu0 0
    %488 = vmatmul.mubr.bf16.gmra.mrb[0].mxu0 %v361
    %v489 = vpop.f32.mrb[0].mxu0
    %v490 = vadd.f32 %v382, %v489
    %v491 = vpop.f32.mrb[0].mxu0
    %v492 = vpop.f32.mrb[0].mxu0
    %v493 = vadd.f32 %v382, %v492
    %v494 = vpop.f32.mrb[0].mxu0
    %495 = vdwg.mxu0
    %v496 = vmax.f32 %v466, 0.0
    %v497 = vmax.f32 %v469, 0.0
    %v498 = vmax.f32 %v474, 0.0
    %v499 = vmax.f32 %v477, 0.0
    %v500 = vmax.f32 %v482, 0.0
    %v501 = vmax.f32 %v485, 0.0
    %v502 = vmax.f32 %v490, 0.0
    %v503 = vmax.f32 %v493, 0.0
    %v504 = vpack.c.bf16 %v497, %v496
    %v505 = vpack.c.bf16 %v499, %v498
    %v506 = vpack.c.bf16 %v501, %v500
    %v507 = vpack.c.bf16 %v503, %v502
    %s508 = scalar_lea.vmem [#allocation9], 64
    %v509 = vld [vmem:[%s508] sm:$0xf]
    %v510 = vld [vmem:[%s508 + $0x4] sm:$0xf]
    %v511 = vld [vmem:[%s508 + $0x8] sm:$0xf]
    %v512 = vld [vmem:[%s508 + $0xc] sm:$0xf]
    %v513 = vld [vmem:[%s508 + $0x10] sm:$0xf]
    %v514 = vld [vmem:[%s508 + $0x14] sm:$0xf]
    %v515 = vld [vmem:[%s508 + $0x18] sm:$0xf]
    %v516 = vld [vmem:[%s508 + $0x1c] sm:$0xf]
    %v517 = vld [vmem:[%s508 + $0x20] sm:$0xf]
    %v518 = vld [vmem:[%s508 + $0x24] sm:$0xf]
    %v519 = vld [vmem:[%s508 + $0x28] sm:$0xf]
    %v520 = vld [vmem:[%s508 + $0x2c] sm:$0xf]
    %v521 = vld [vmem:[%s508 + $0x30] sm:$0xf]
    %v522 = vld [vmem:[%s508 + $0x34] sm:$0xf]
    %v523 = vld [vmem:[%s508 + $0x38] sm:$0xf]
    %v524 = vld [vmem:[%s508 + $0x3c] sm:$0xf]
    %v525 = vld [vmem:[#allocation10 + $0x1] sm:$0x1]
    %v526 = vlaneseq
    %v527 = vshrl.u32 %v526, 7
    %v528 = vsub.s32 0, %v527
    %v529 = vrot.slane %v525, %v528
    %v546 = vunpack.c.l.b16 %v509
    %v547 = vunpack.c.l.b16 %v510
    %v548 = vunpack.c.l.b16 %v511
    %v549 = vunpack.c.l.b16 %v512
    %v550 = vunpack.c.l.b16 %v513
    %v551 = vunpack.c.l.b16 %v514
    %v552 = vunpack.c.l.b16 %v515
    %v553 = vunpack.c.l.b16 %v516
    %v554 = vunpack.c.l.b16 %v517
    %v555 = vunpack.c.l.b16 %v518
    %v556 = vunpack.c.l.b16 %v519
    %v557 = vunpack.c.l.b16 %v520
    %v558 = vunpack.c.l.b16 %v521
    %v559 = vunpack.c.l.b16 %v522
    %v560 = vunpack.c.l.b16 %v523
    %v561 = vunpack.c.l.b16 %v524
    %v562 = vpack.c.b16 %v547, %v546
    %v563 = vpack.c.b16 %v549, %v548
    %v564 = vpack.c.b16 %v551, %v550
    %v565 = vpack.c.b16 %v553, %v552
    %v566 = vpack.c.b16 %v555, %v554
    %v567 = vpack.c.b16 %v557, %v556
    %v568 = vpack.c.b16 %v559, %v558
    %v569 = vpack.c.b16 %v561, %v560
    %578 = vmatprep.subr.bf16.mxu0 0
    %579 = vmatpush1.bf16.msra.mxu0 %v562
    %580 = vmatprep.subr.bf16.mxu0 0
    %581 = vmatpush1.bf16.msra.mxu0 %v563
    %582 = vmatprep.subr.bf16.mxu0 0
    %583 = vmatpush1.bf16.msra.mxu0 %v564
    %584 = vmatprep.subr.bf16.mxu0 0
    %585 = vmatpush1.bf16.msra.mxu0 %v565
    %586 = vmatprep.subr.bf16.mxu0 0
    %587 = vmatpush1.bf16.msra.mxu0 %v566
    %588 = vmatprep.subr.bf16.mxu0 0
    %589 = vmatpush1.bf16.msra.mxu0 %v567
    %590 = vmatprep.subr.bf16.mxu0 0
    %591 = vmatpush1.bf16.msra.mxu0 %v568
    %592 = vmatprep.subr.bf16.mxu0 0
    %593 = vmatpush1.bf16.msra.mxu0 %v569
    %594 = vmatprep.subr.bf16.mxu0 0
    %595 = vmatpush1.bf16.msra.mxu0 0
    %596 = vmatprep.subr.bf16.mxu0 0
    %597 = vmatpush1.bf16.msra.mxu0 0
    %598 = vmatprep.subr.bf16.mxu0 0
    %599 = vmatpush1.bf16.msra.mxu0 0
    %600 = vmatprep.subr.bf16.mxu0 0
    %601 = vmatpush1.bf16.msra.mxu0 0
    %602 = vmatprep.subr.bf16.mxu0 0
    %603 = vmatpush1.bf16.msra.mxu0 0
    %604 = vmatprep.subr.bf16.mxu0 0
    %605 = vmatpush1.bf16.msra.mxu0 0
    %606 = vmatprep.subr.bf16.mxu0 0
    %607 = vmatpush1.bf16.msra.mxu0 0
    %608 = vmatprep.subr.bf16.mxu0 0
    %609 = vmatpush1.bf16.msra.mxu0 0
    %610 = vmatprep.mubr.bf16.mxu0 0
    %611 = vmatmul.mubr.bf16.gmra.mrb[0].mxu0 %v504
    %v612 = vpop.f32.mrb[0].mxu0
    %v613 = vadd.f32 %v529, %v612
    %v614 = vpop.f32.mrb[0].mxu0
    %v615 = vpop.f32.mrb[0].mxu0
    %v616 = vadd.f32 %v529, %v615
    %v617 = vpop.f32.mrb[0].mxu0
    %618 = vmatprep.mubr.bf16.mxu0 0
    %619 = vmatmul.mubr.bf16.gmra.mrb[0].mxu0 %v505
    %v620 = vpop.f32.mrb[0].mxu0
    %v621 = vadd.f32 %v529, %v620
    %v622 = vpop.f32.mrb[0].mxu0
    %v623 = vpop.f32.mrb[0].mxu0
    %v624 = vadd.f32 %v529, %v623
    %v625 = vpop.f32.mrb[0].mxu0
    %626 = vmatprep.mubr.bf16.mxu0 0
    %627 = vmatmul.mubr.bf16.gmra.mrb[0].mxu0 %v506
    %v628 = vpop.f32.mrb[0].mxu0
    %v629 = vadd.f32 %v529, %v628
    %v630 = vpop.f32.mrb[0].mxu0
    %v631 = vpop.f32.mrb[0].mxu0
    %v632 = vadd.f32 %v529, %v631
    %v633 = vpop.f32.mrb[0].mxu0
    %634 = vmatprep.mubr.bf16.mxu0 0
    %635 = vmatmul.mubr.bf16.gmra.mrb[0].mxu0 %v507
    %v636 = vpop.f32.mrb[0].mxu0
    %v637 = vadd.f32 %v529, %v636
    %v638 = vpop.f32.mrb[0].mxu0
    %v639 = vpop.f32.mrb[0].mxu0
    %v640 = vadd.f32 %v529, %v639
    %v641 = vpop.f32.mrb[0].mxu0
    %642 = vdwg.mxu0
    %v643 = vmax.f32 %v613, 0.0
    %v644 = vmax.f32 %v616, 0.0
    %v645 = vmax.f32 %v621, 0.0
    %v646 = vmax.f32 %v624, 0.0
    %v647 = vmax.f32 %v629, 0.0
    %v648 = vmax.f32 %v632, 0.0
    %v649 = vmax.f32 %v637, 0.0
    %v650 = vmax.f32 %v640, 0.0
    %v651 = vpack.c.bf16 %v644, %v643
    %v652 = vpack.c.bf16 %v646, %v645
    %v653 = vpack.c.bf16 %v648, %v647
    %v654 = vpack.c.bf16 %v650, %v649
    %655 = vst [vmem:[#allocation2] sm:$0xff] %v651
    %656 = vst [vmem:[#allocation2 + $0x8] sm:$0xff] %v652
    %657 = vst [vmem:[#allocation2 + $0x10] sm:$0xff] %v653
    %658 = vst [vmem:[#allocation2 + $0x18] sm:$0xff] %v654
    %v659 = vld [vmem:[#allocation7] sm:$0xf]
    %v660 = vld [vmem:[#allocation7 + $0x4] sm:$0xf]
    %v661 = vld [vmem:[#allocation2] sm:$0xff]
    %v664 = vunpack.c.l.b16 %v659
    %v665 = vunpack.c.l.b16 %v660
    %v666 = vpack.c.b16 %v665, %v664
    %v668 = vsel %vm118, %v666, 0
    %670 = vmatprep.subr.bf16.mxu0 0
    %671 = vmatpush1.bf16.msra.mxu0 %v661
    %672 = vmatprep.subr.bf16.mxu0 0
    %673 = vmatpush1.bf16.msra.mxu0 0
    %674 = vmatprep.subr.bf16.mxu0 0
    %675 = vmatpush1.bf16.msra.mxu0 0
    %676 = vmatprep.subr.bf16.mxu0 0
    %677 = vmatpush1.bf16.msra.mxu0 0
    %678 = vmatprep.subr.bf16.mxu0 0
    %679 = vmatpush1.bf16.msra.mxu0 0
    %680 = vmatprep.subr.bf16.mxu0 0
    %681 = vmatpush1.bf16.msra.mxu0 0
    %682 = vmatprep.subr.bf16.mxu0 0
    %683 = vmatpush1.bf16.msra.mxu0 0
    %684 = vmatprep.subr.bf16.mxu0 0
    %685 = vmatpush1.bf16.msra.mxu0 0
    %686 = vmatprep.subr.bf16.mxu0 0
    %687 = vmatpush1.bf16.msra.mxu0 0
    %688 = vmatprep.subr.bf16.mxu0 0
    %689 = vmatpush1.bf16.msra.mxu0 0
    %690 = vmatprep.subr.bf16.mxu0 0
    %691 = vmatpush1.bf16.msra.mxu0 0
    %692 = vmatprep.subr.bf16.mxu0 0
    %693 = vmatpush1.bf16.msra.mxu0 0
    %694 = vmatprep.subr.bf16.mxu0 0
    %695 = vmatpush1.bf16.msra.mxu0 0
    %696 = vmatprep.subr.bf16.mxu0 0
    %697 = vmatpush1.bf16.msra.mxu0 0
    %698 = vmatprep.subr.bf16.mxu0 0
    %699 = vmatpush1.bf16.msra.mxu0 0
    %700 = vmatprep.subr.bf16.mxu0 0
    %701 = vmatpush1.bf16.msra.mxu0 0
    %702 = vmatprep.mubr.bf16.mxu0 0
    %703 = vmatmul.mubr.bf16.gmra.mrb[0].mxu0 %v668
    %v704 = vpop.f32.mrb[0].mxu0
    %v705 = vadd.f32 0.0, %v704
    %v706 = vpop.f32.mrb[0].mxu0
    %v707 = vpop.f32.mrb[0].mxu0
    %v708 = vadd.f32 0.0, %v707
    %v709 = vpop.f32.mrb[0].mxu0
    %710 = vdwg.mxu0
    %711 = vst [vmem:[#allocation3] sm:$0xff] %v705
    %712 = vst [vmem:[#allocation3 + $0x8] sm:$0xff] %v708
    %v713 = vld [vmem:[%s165] sm:$0xf]
    %v714 = vld [vmem:[%s165 + $0x4] sm:$0xf]
    %v715 = vld [vmem:[#allocation2 + $0x8] sm:$0xff]
    %v718 = vunpack.c.l.b16 %v713
    %v719 = vunpack.c.l.b16 %v714
    %v720 = vpack.c.b16 %v719, %v718
    %v722 = vsel %vm118, %v720, 0
    %724 = vmatprep.subr.bf16.mxu0 0
    %725 = vmatpush1.bf16.msra.mxu0 %v715
    %726 = vmatprep.subr.bf16.mxu0 0
    %727 = vmatpush1.bf16.msra.mxu0 0
    %728 = vmatprep.subr.bf16.mxu0 0
    %729 = vmatpush1.bf16.msra.mxu0 0
    %730 = vmatprep.subr.bf16.mxu0 0
    %731 = vmatpush1.bf16.msra.mxu0 0
    %732 = vmatprep.subr.bf16.mxu0 0
    %733 = vmatpush1.bf16.msra.mxu0 0
    %734 = vmatprep.subr.bf16.mxu0 0
    %735 = vmatpush1.bf16.msra.mxu0 0
    %736 = vmatprep.subr.bf16.mxu0 0
    %737 = vmatpush1.bf16.msra.mxu0 0
    %738 = vmatprep.subr.bf16.mxu0 0
    %739 = vmatpush1.bf16.msra.mxu0 0
    %740 = vmatprep.subr.bf16.mxu0 0
    %741 = vmatpush1.bf16.msra.mxu0 0
    %742 = vmatprep.subr.bf16.mxu0 0
    %743 = vmatpush1.bf16.msra.mxu0 0
    %744 = vmatprep.subr.bf16.mxu0 0
    %745 = vmatpush1.bf16.msra.mxu0 0
    %746 = vmatprep.subr.bf16.mxu0 0
    %747 = vmatpush1.bf16.msra.mxu0 0
    %748 = vmatprep.subr.bf16.mxu0 0
    %749 = vmatpush1.bf16.msra.mxu0 0
    %750 = vmatprep.subr.bf16.mxu0 0
    %751 = vmatpush1.bf16.msra.mxu0 0
    %752 = vmatprep.subr.bf16.mxu0 0
    %753 = vmatpush1.bf16.msra.mxu0 0
    %754 = vmatprep.subr.bf16.mxu0 0
    %755 = vmatpush1.bf16.msra.mxu0 0
    %756 = vmatprep.mubr.bf16.mxu0 0
    %757 = vmatmul.mubr.bf16.gmra.mrb[0].mxu0 %v722
    %v758 = vpop.f32.mrb[0].mxu0
    %v759 = vadd.f32 0.0, %v758
    %v760 = vpop.f32.mrb[0].mxu0
    %v761 = vpop.f32.mrb[0].mxu0
    %v762 = vadd.f32 0.0, %v761
    %v763 = vpop.f32.mrb[0].mxu0
    %764 = vdwg.mxu0
    %765 = vst [vmem:[#allocation3 + $0x10] sm:$0xff] %v759
    %766 = vst [vmem:[#allocation3 + $0x18] sm:$0xff] %v762
    %v767 = vld [vmem:[%s220] sm:$0xf]
    %v768 = vld [vmem:[%s220 + $0x4] sm:$0xf]
    %v769 = vld [vmem:[#allocation2 + $0x10] sm:$0xff]
    %v772 = vunpack.c.l.b16 %v767
    %v773 = vunpack.c.l.b16 %v768
    %v774 = vpack.c.b16 %v773, %v772
    %v776 = vsel %vm118, %v774, 0
    %778 = vmatprep.subr.bf16.mxu0 0
    %779 = vmatpush1.bf16.msra.mxu0 %v769
    %780 = vmatprep.subr.bf16.mxu0 0
    %781 = vmatpush1.bf16.msra.mxu0 0
    %782 = vmatprep.subr.bf16.mxu0 0
    %783 = vmatpush1.bf16.msra.mxu0 0
    %784 = vmatprep.subr.bf16.mxu0 0
    %785 = vmatpush1.bf16.msra.mxu0 0
    %786 = vmatprep.subr.bf16.mxu0 0
    %787 = vmatpush1.bf16.msra.mxu0 0
    %788 = vmatprep.subr.bf16.mxu0 0
    %789 = vmatpush1.bf16.msra.mxu0 0
    %790 = vmatprep.subr.bf16.mxu0 0
    %791 = vmatpush1.bf16.msra.mxu0 0
    %792 = vmatprep.subr.bf16.mxu0 0
    %793 = vmatpush1.bf16.msra.mxu0 0
    %794 = vmatprep.subr.bf16.mxu0 0
    %795 = vmatpush1.bf16.msra.mxu0 0
    %796 = vmatprep.subr.bf16.mxu0 0
    %797 = vmatpush1.bf16.msra.mxu0 0
    %798 = vmatprep.subr.bf16.mxu0 0
    %799 = vmatpush1.bf16.msra.mxu0 0
    %800 = vmatprep.subr.bf16.mxu0 0
    %801 = vmatpush1.bf16.msra.mxu0 0
    %802 = vmatprep.subr.bf16.mxu0 0
    %803 = vmatpush1.bf16.msra.mxu0 0
    %804 = vmatprep.subr.bf16.mxu0 0
    %805 = vmatpush1.bf16.msra.mxu0 0
    %806 = vmatprep.subr.bf16.mxu0 0
    %807 = vmatpush1.bf16.msra.mxu0 0
    %808 = vmatprep.subr.bf16.mxu0 0
    %809 = vmatpush1.bf16.msra.mxu0 0
    %810 = vmatprep.mubr.bf16.mxu0 0
    %811 = vmatmul.mubr.bf16.gmra.mrb[0].mxu0 %v776
    %v812 = vpop.f32.mrb[0].mxu0
    %v813 = vadd.f32 0.0, %v812
    %v814 = vpop.f32.mrb[0].mxu0
    %v815 = vpop.f32.mrb[0].mxu0
    %v816 = vadd.f32 0.0, %v815
    %v817 = vpop.f32.mrb[0].mxu0
    %818 = vdwg.mxu0
    %819 = vst [vmem:[#allocation3 + $0x20] sm:$0xff] %v813
    %820 = vst [vmem:[#allocation3 + $0x28] sm:$0xff] %v816
    %v821 = vld [vmem:[%s275] sm:$0xf]
    %v822 = vld [vmem:[%s275 + $0x4] sm:$0xf]
    %v823 = vld [vmem:[#allocation2 + $0x18] sm:$0xff]
    %v826 = vunpack.c.l.b16 %v821
    %v827 = vunpack.c.l.b16 %v822
    %v828 = vpack.c.b16 %v827, %v826
    %v830 = vsel %vm118, %v828, 0
    %832 = vmatprep.subr.bf16.mxu0 0
    %833 = vmatpush1.bf16.msra.mxu0 %v823
    %834 = vmatprep.subr.bf16.mxu0 0
    %835 = vmatpush1.bf16.msra.mxu0 0
    %836 = vmatprep.subr.bf16.mxu0 0
    %837 = vmatpush1.bf16.msra.mxu0 0
    %838 = vmatprep.subr.bf16.mxu0 0
    %839 = vmatpush1.bf16.msra.mxu0 0
    %840 = vmatprep.subr.bf16.mxu0 0
    %841 = vmatpush1.bf16.msra.mxu0 0
    %842 = vmatprep.subr.bf16.mxu0 0
    %843 = vmatpush1.bf16.msra.mxu0 0
    %844 = vmatprep.subr.bf16.mxu0 0
    %845 = vmatpush1.bf16.msra.mxu0 0
    %846 = vmatprep.subr.bf16.mxu0 0
    %847 = vmatpush1.bf16.msra.mxu0 0
    %848 = vmatprep.subr.bf16.mxu0 0
    %849 = vmatpush1.bf16.msra.mxu0 0
    %850 = vmatprep.subr.bf16.mxu0 0
    %851 = vmatpush1.bf16.msra.mxu0 0
    %852 = vmatprep.subr.bf16.mxu0 0
    %853 = vmatpush1.bf16.msra.mxu0 0
    %854 = vmatprep.subr.bf16.mxu0 0
    %855 = vmatpush1.bf16.msra.mxu0 0
    %856 = vmatprep.subr.bf16.mxu0 0
    %857 = vmatpush1.bf16.msra.mxu0 0
    %858 = vmatprep.subr.bf16.mxu0 0
    %859 = vmatpush1.bf16.msra.mxu0 0
    %860 = vmatprep.subr.bf16.mxu0 0
    %861 = vmatpush1.bf16.msra.mxu0 0
    %862 = vmatprep.subr.bf16.mxu0 0
    %863 = vmatpush1.bf16.msra.mxu0 0
    %864 = vmatprep.mubr.bf16.mxu0 0
    %865 = vmatmul.mubr.bf16.gmra.mrb[0].mxu0 %v830
    %v866 = vpop.f32.mrb[0].mxu0
    %v867 = vadd.f32 0.0, %v866
    %v868 = vpop.f32.mrb[0].mxu0
    %v869 = vpop.f32.mrb[0].mxu0
    %v870 = vadd.f32 0.0, %v869
    %v871 = vpop.f32.mrb[0].mxu0
    %872 = vdwg.mxu0
    %873 = vst [vmem:[#allocation3 + $0x30] sm:$0xff] %v867
    %874 = vst [vmem:[#allocation3 + $0x38] sm:$0xff] %v870
    %v875 = vld [vmem:[#allocation3] sm:$0xff]
    %v876 = vld [vmem:[#allocation3 + $0x8] sm:$0xff]
    %v877 = vld [vmem:[#allocation3 + $0x10] sm:$0xff]
    %v878 = vld [vmem:[#allocation3 + $0x18] sm:$0xff]
    %v879 = vld [vmem:[#allocation3 + $0x20] sm:$0xff]
    %v880 = vld [vmem:[#allocation3 + $0x28] sm:$0xff]
    %v881 = vld [vmem:[#allocation3 + $0x30] sm:$0xff]
    %v882 = vld [vmem:[#allocation3 + $0x38] sm:$0xff]
    %v883 = vld [vmem:[#allocation2] sm:$0xff]
    %v884 = vld [vmem:[#allocation2 + $0x8] sm:$0xff]
    %v885 = vld [vmem:[#allocation2 + $0x10] sm:$0xff]
    %v886 = vld [vmem:[#allocation2 + $0x18] sm:$0xff]
    %v887 = vunpack.c.l.bf16 %v883
    %v888 = vunpack.c.h.bf16 %v883
    %v889 = vunpack.c.l.bf16 %v884
    %v890 = vunpack.c.h.bf16 %v884
    %v891 = vunpack.c.l.bf16 %v885
    %v892 = vunpack.c.h.bf16 %v885
    %v893 = vunpack.c.l.bf16 %v886
    %v894 = vunpack.c.h.bf16 %v886
    %v895 = vadd.f32 %v875, %v887
    %v896 = vadd.f32 %v876, %v888
    %v897 = vadd.f32 %v877, %v889
    %v898 = vadd.f32 %v878, %v890
    %v899 = vadd.f32 %v879, %v891
    %v900 = vadd.f32 %v880, %v892
    %v901 = vadd.f32 %v881, %v893
    %v902 = vadd.f32 %v882, %v894
    %v903 = vpack.c.bf16 %v896, %v895
    %v904 = vpack.c.bf16 %v898, %v897
    %v905 = vpack.c.bf16 %v900, %v899
    %v906 = vpack.c.bf16 %v902, %v901
    %s907 = scalar_lea.vmem [#allocation9], 128
    %v908 = vld [vmem:[%s907] sm:$0xf]
    %v909 = vld [vmem:[%s907 + $0x4] sm:$0xf]
    %v910 = vld [vmem:[%s907 + $0x8] sm:$0xf]
    %v911 = vld [vmem:[%s907 + $0xc] sm:$0xf]
    %v912 = vld [vmem:[%s907 + $0x10] sm:$0xf]
    %v913 = vld [vmem:[%s907 + $0x14] sm:$0xf]
    %v914 = vld [vmem:[%s907 + $0x18] sm:$0xf]
    %v915 = vld [vmem:[%s907 + $0x1c] sm:$0xf]
    %v916 = vld [vmem:[%s907 + $0x20] sm:$0xf]
    %v917 = vld [vmem:[%s907 + $0x24] sm:$0xf]
    %v918 = vld [vmem:[%s907 + $0x28] sm:$0xf]
    %v919 = vld [vmem:[%s907 + $0x2c] sm:$0xf]
    %v920 = vld [vmem:[%s907 + $0x30] sm:$0xf]
    %v921 = vld [vmem:[%s907 + $0x34] sm:$0xf]
    %v922 = vld [vmem:[%s907 + $0x38] sm:$0xf]
    %v923 = vld [vmem:[%s907 + $0x3c] sm:$0xf]
    %v924 = vld [vmem:[#allocation10 + $0x2] sm:$0x1]
    %v925 = vlaneseq
    %v926 = vshrl.u32 %v925, 7
    %v927 = vsub.s32 0, %v926
    %v928 = vrot.slane %v924, %v927
    %v945 = vunpack.c.l.b16 %v908
    %v946 = vunpack.c.l.b16 %v909
    %v947 = vunpack.c.l.b16 %v910
    %v948 = vunpack.c.l.b16 %v911
    %v949 = vunpack.c.l.b16 %v912
    %v950 = vunpack.c.l.b16 %v913
    %v951 = vunpack.c.l.b16 %v914
    %v952 = vunpack.c.l.b16 %v915
    %v953 = vunpack.c.l.b16 %v916
    %v954 = vunpack.c.l.b16 %v917
    %v955 = vunpack.c.l.b16 %v918
    %v956 = vunpack.c.l.b16 %v919
    %v957 = vunpack.c.l.b16 %v920
    %v958 = vunpack.c.l.b16 %v921
    %v959 = vunpack.c.l.b16 %v922
    %v960 = vunpack.c.l.b16 %v923
    %v961 = vpack.c.b16 %v946, %v945
    %v962 = vpack.c.b16 %v948, %v947
    %v963 = vpack.c.b16 %v950, %v949
    %v964 = vpack.c.b16 %v952, %v951
    %v965 = vpack.c.b16 %v954, %v953
    %v966 = vpack.c.b16 %v956, %v955
    %v967 = vpack.c.b16 %v958, %v957
    %v968 = vpack.c.b16 %v960, %v959
    %977 = vmatprep.subr.bf16.mxu0 0
    %978 = vmatpush1.bf16.msra.mxu0 %v961
    %979 = vmatprep.subr.bf16.mxu0 0
    %980 = vmatpush1.bf16.msra.mxu0 %v962
    %981 = vmatprep.subr.bf16.mxu0 0
    %982 = vmatpush1.bf16.msra.mxu0 %v963
    %983 = vmatprep.subr.bf16.mxu0 0
    %984 = vmatpush1.bf16.msra.mxu0 %v964
    %985 = vmatprep.subr.bf16.mxu0 0
    %986 = vmatpush1.bf16.msra.mxu0 %v965
    %987 = vmatprep.subr.bf16.mxu0 0
    %988 = vmatpush1.bf16.msra.mxu0 %v966
    %989 = vmatprep.subr.bf16.mxu0 0
    %990 = vmatpush1.bf16.msra.mxu0 %v967
    %991 = vmatprep.subr.bf16.mxu0 0
    %992 = vmatpush1.bf16.msra.mxu0 %v968
    %993 = vmatprep.subr.bf16.mxu0 0
    %994 = vmatpush1.bf16.msra.mxu0 0
    %995 = vmatprep.subr.bf16.mxu0 0
    %996 = vmatpush1.bf16.msra.mxu0 0
    %997 = vmatprep.subr.bf16.mxu0 0
    %998 = vmatpush1.bf16.msra.mxu0 0
    %999 = vmatprep.subr.bf16.mxu0 0
    %1000 = vmatpush1.bf16.msra.mxu0 0
    %1001 = vmatprep.subr.bf16.mxu0 0
    %1002 = vmatpush1.bf16.msra.mxu0 0
    %1003 = vmatprep.subr.bf16.mxu0 0
    %1004 = vmatpush1.bf16.msra.mxu0 0
    %1005 = vmatprep.subr.bf16.mxu0 0
    %1006 = vmatpush1.bf16.msra.mxu0 0
    %1007 = vmatprep.subr.bf16.mxu0 0
    %1008 = vmatpush1.bf16.msra.mxu0 0
    %1009 = vmatprep.mubr.bf16.mxu0 0
    %1010 = vmatmul.mubr.bf16.gmra.mrb[0].mxu0 %v903
    %v1011 = vpop.f32.mrb[0].mxu0
    %v1012 = vadd.f32 %v928, %v1011
    %v1013 = vpop.f32.mrb[0].mxu0
    %v1014 = vpop.f32.mrb[0].mxu0
    %v1015 = vadd.f32 %v928, %v1014
    %v1016 = vpop.f32.mrb[0].mxu0
    %1017 = vmatprep.mubr.bf16.mxu0 0
    %1018 = vmatmul.mubr.bf16.gmra.mrb[0].mxu0 %v904
    %v1019 = vpop.f32.mrb[0].mxu0
    %v1020 = vadd.f32 %v928, %v1019
    %v1021 = vpop.f32.mrb[0].mxu0
    %v1022 = vpop.f32.mrb[0].mxu0
    %v1023 = vadd.f32 %v928, %v1022
    %v1024 = vpop.f32.mrb[0].mxu0
    %1025 = vmatprep.mubr.bf16.mxu0 0
    %1026 = vmatmul.mubr.bf16.gmra.mrb[0].mxu0 %v905
    %v1027 = vpop.f32.mrb[0].mxu0
    %v1028 = vadd.f32 %v928, %v1027
    %v1029 = vpop.f32.mrb[0].mxu0
    %v1030 = vpop.f32.mrb[0].mxu0
    %v1031 = vadd.f32 %v928, %v1030
    %v1032 = vpop.f32.mrb[0].mxu0
    %1033 = vmatprep.mubr.bf16.mxu0 0
    %1034 = vmatmul.mubr.bf16.gmra.mrb[0].mxu0 %v906
    %v1035 = vpop.f32.mrb[0].mxu0
    %v1036 = vadd.f32 %v928, %v1035
    %v1037 = vpop.f32.mrb[0].mxu0
    %v1038 = vpop.f32.mrb[0].mxu0
    %v1039 = vadd.f32 %v928, %v1038
    %v1040 = vpop.f32.mrb[0].mxu0
    %1041 = vdwg.mxu0
    %v1042 = vmax.f32 %v1012, 0.0
    %v1043 = vmax.f32 %v1015, 0.0
    %v1044 = vmax.f32 %v1020, 0.0
    %v1045 = vmax.f32 %v1023, 0.0
    %v1046 = vmax.f32 %v1028, 0.0
    %v1047 = vmax.f32 %v1031, 0.0
    %v1048 = vmax.f32 %v1036, 0.0
    %v1049 = vmax.f32 %v1039, 0.0
    %v1050 = vpack.c.bf16 %v1043, %v1042
    %v1051 = vpack.c.bf16 %v1045, %v1044
    %v1052 = vpack.c.bf16 %v1047, %v1046
    %v1053 = vpack.c.bf16 %v1049, %v1048
    %s1054 = scalar_lea.vmem [#allocation9], 192
    %v1055 = vld [vmem:[%s1054] sm:$0xf]
    %v1056 = vld [vmem:[%s1054 + $0x4] sm:$0xf]
    %v1057 = vld [vmem:[%s1054 + $0x8] sm:$0xf]
    %v1058 = vld [vmem:[%s1054 + $0xc] sm:$0xf]
    %v1059 = vld [vmem:[%s1054 + $0x10] sm:$0xf]
    %v1060 = vld [vmem:[%s1054 + $0x14] sm:$0xf]
    %v1061 = vld [vmem:[%s1054 + $0x18] sm:$0xf]
    %v1062 = vld [vmem:[%s1054 + $0x1c] sm:$0xf]
    %v1063 = vld [vmem:[%s1054 + $0x20] sm:$0xf]
    %v1064 = vld [vmem:[%s1054 + $0x24] sm:$0xf]
    %v1065 = vld [vmem:[%s1054 + $0x28] sm:$0xf]
    %v1066 = vld [vmem:[%s1054 + $0x2c] sm:$0xf]
    %v1067 = vld [vmem:[%s1054 + $0x30] sm:$0xf]
    %v1068 = vld [vmem:[%s1054 + $0x34] sm:$0xf]
    %v1069 = vld [vmem:[%s1054 + $0x38] sm:$0xf]
    %v1070 = vld [vmem:[%s1054 + $0x3c] sm:$0xf]
    %v1071 = vld [vmem:[#allocation10 + $0x3] sm:$0x1]
    %v1072 = vlaneseq
    %v1073 = vshrl.u32 %v1072, 7
    %v1074 = vsub.s32 0, %v1073
    %v1075 = vrot.slane %v1071, %v1074
    %v1092 = vunpack.c.l.b16 %v1055
    %v1093 = vunpack.c.l.b16 %v1056
    %v1094 = vunpack.c.l.b16 %v1057
    %v1095 = vunpack.c.l.b16 %v1058
    %v1096 = vunpack.c.l.b16 %v1059
    %v1097 = vunpack.c.l.b16 %v1060
    %v1098 = vunpack.c.l.b16 %v1061
    %v1099 = vunpack.c.l.b16 %v1062
    %v1100 = vunpack.c.l.b16 %v1063
    %v1101 = vunpack.c.l.b16 %v1064
    %v1102 = vunpack.c.l.b16 %v1065
    %v1103 = vunpack.c.l.b16 %v1066
    %v1104 = vunpack.c.l.b16 %v1067
    %v1105 = vunpack.c.l.b16 %v1068
    %v1106 = vunpack.c.l.b16 %v1069
    %v1107 = vunpack.c.l.b16 %v1070
    %v1108 = vpack.c.b16 %v1093, %v1092
    %v1109 = vpack.c.b16 %v1095, %v1094
    %v1110 = vpack.c.b16 %v1097, %v1096
    %v1111 = vpack.c.b16 %v1099, %v1098
    %v1112 = vpack.c.b16 %v1101, %v1100
    %v1113 = vpack.c.b16 %v1103, %v1102
    %v1114 = vpack.c.b16 %v1105, %v1104
    %v1115 = vpack.c.b16 %v1107, %v1106
    %1124 = vmatprep.subr.bf16.mxu0 0
    %1125 = vmatpush1.bf16.msra.mxu0 %v1108
    %1126 = vmatprep.subr.bf16.mxu0 0
    %1127 = vmatpush1.bf16.msra.mxu0 %v1109
    %1128 = vmatprep.subr.bf16.mxu0 0
    %1129 = vmatpush1.bf16.msra.mxu0 %v1110
    %1130 = vmatprep.subr.bf16.mxu0 0
    %1131 = vmatpush1.bf16.msra.mxu0 %v1111
    %1132 = vmatprep.subr.bf16.mxu0 0
    %1133 = vmatpush1.bf16.msra.mxu0 %v1112
    %1134 = vmatprep.subr.bf16.mxu0 0
    %1135 = vmatpush1.bf16.msra.mxu0 %v1113
    %1136 = vmatprep.subr.bf16.mxu0 0
    %1137 = vmatpush1.bf16.msra.mxu0 %v1114
    %1138 = vmatprep.subr.bf16.mxu0 0
    %1139 = vmatpush1.bf16.msra.mxu0 %v1115
    %1140 = vmatprep.subr.bf16.mxu0 0
    %1141 = vmatpush1.bf16.msra.mxu0 0
    %1142 = vmatprep.subr.bf16.mxu0 0
    %1143 = vmatpush1.bf16.msra.mxu0 0
    %1144 = vmatprep.subr.bf16.mxu0 0
    %1145 = vmatpush1.bf16.msra.mxu0 0
    %1146 = vmatprep.subr.bf16.mxu0 0
    %1147 = vmatpush1.bf16.msra.mxu0 0
    %1148 = vmatprep.subr.bf16.mxu0 0
    %1149 = vmatpush1.bf16.msra.mxu0 0
    %1150 = vmatprep.subr.bf16.mxu0 0
    %1151 = vmatpush1.bf16.msra.mxu0 0
    %1152 = vmatprep.subr.bf16.mxu0 0
    %1153 = vmatpush1.bf16.msra.mxu0 0
    %1154 = vmatprep.subr.bf16.mxu0 0
    %1155 = vmatpush1.bf16.msra.mxu0 0
    %1156 = vmatprep.mubr.bf16.mxu0 0
    %1157 = vmatmul.mubr.bf16.gmra.mrb[0].mxu0 %v1050
    %v1158 = vpop.f32.mrb[0].mxu0
    %v1159 = vadd.f32 %v1075, %v1158
    %v1160 = vpop.f32.mrb[0].mxu0
    %v1161 = vpop.f32.mrb[0].mxu0
    %v1162 = vadd.f32 %v1075, %v1161
    %v1163 = vpop.f32.mrb[0].mxu0
    %1164 = vmatprep.mubr.bf16.mxu0 0
    %1165 = vmatmul.mubr.bf16.gmra.mrb[0].mxu0 %v1051
    %v1166 = vpop.f32.mrb[0].mxu0
    %v1167 = vadd.f32 %v1075, %v1166
    %v1168 = vpop.f32.mrb[0].mxu0
    %v1169 = vpop.f32.mrb[0].mxu0
    %v1170 = vadd.f32 %v1075, %v1169
    %v1171 = vpop.f32.mrb[0].mxu0
    %1172 = vmatprep.mubr.bf16.mxu0 0
    %1173 = vmatmul.mubr.bf16.gmra.mrb[0].mxu0 %v1052
    %v1174 = vpop.f32.mrb[0].mxu0
    %v1175 = vadd.f32 %v1075, %v1174
    %v1176 = vpop.f32.mrb[0].mxu0
    %v1177 = vpop.f32.mrb[0].mxu0
    %v1178 = vadd.f32 %v1075, %v1177
    %v1179 = vpop.f32.mrb[0].mxu0
    %1180 = vmatprep.mubr.bf16.mxu0 0
    %1181 = vmatmul.mubr.bf16.gmra.mrb[0].mxu0 %v1053
    %v1182 = vpop.f32.mrb[0].mxu0
    %v1183 = vadd.f32 %v1075, %v1182
    %v1184 = vpop.f32.mrb[0].mxu0
    %v1185 = vpop.f32.mrb[0].mxu0
    %v1186 = vadd.f32 %v1075, %v1185
    %v1187 = vpop.f32.mrb[0].mxu0
    %1188 = vdwg.mxu0
    %v1189 = vmax.f32 %v1159, 0.0
    %v1190 = vmax.f32 %v1162, 0.0
    %v1191 = vmax.f32 %v1167, 0.0
    %v1192 = vmax.f32 %v1170, 0.0
    %v1193 = vmax.f32 %v1175, 0.0
    %v1194 = vmax.f32 %v1178, 0.0
    %v1195 = vmax.f32 %v1183, 0.0
    %v1196 = vmax.f32 %v1186, 0.0
    %v1197 = vpack.c.bf16 %v1190, %v1189
    %v1198 = vpack.c.bf16 %v1192, %v1191
    %v1199 = vpack.c.bf16 %v1194, %v1193
    %v1200 = vpack.c.bf16 %v1196, %v1195
    %1201 = vst [vmem:[#allocation2] sm:$0xff] %v1197
    %1202 = vst [vmem:[#allocation2 + $0x8] sm:$0xff] %v1198
    %1203 = vst [vmem:[#allocation2 + $0x10] sm:$0xff] %v1199
    %1204 = vst [vmem:[#allocation2 + $0x18] sm:$0xff] %v1200
    %v1205 = vld [vmem:[#allocation7] sm:$0xf]
    %v1206 = vld [vmem:[#allocation7 + $0x4] sm:$0xf]
    %v1207 = vld [vmem:[#allocation2] sm:$0xff]
    %v1210 = vunpack.c.l.b16 %v1205
    %v1211 = vunpack.c.l.b16 %v1206
    %v1212 = vpack.c.b16 %v1211, %v1210
    %v1214 = vsel %vm118, %v1212, 0
    %1216 = vmatprep.subr.bf16.mxu0 0
    %1217 = vmatpush1.bf16.msra.mxu0 %v1207
    %1218 = vmatprep.subr.bf16.mxu0 0
    %1219 = vmatpush1.bf16.msra.mxu0 0
    %1220 = vmatprep.subr.bf16.mxu0 0
    %1221 = vmatpush1.bf16.msra.mxu0 0
    %1222 = vmatprep.subr.bf16.mxu0 0
    %1223 = vmatpush1.bf16.msra.mxu0 0
    %1224 = vmatprep.subr.bf16.mxu0 0
    %1225 = vmatpush1.bf16.msra.mxu0 0
    %1226 = vmatprep.subr.bf16.mxu0 0
    %1227 = vmatpush1.bf16.msra.mxu0 0
    %1228 = vmatprep.subr.bf16.mxu0 0
    %1229 = vmatpush1.bf16.msra.mxu0 0
    %1230 = vmatprep.subr.bf16.mxu0 0
    %1231 = vmatpush1.bf16.msra.mxu0 0
    %1232 = vmatprep.subr.bf16.mxu0 0
    %1233 = vmatpush1.bf16.msra.mxu0 0
    %1234 = vmatprep.subr.bf16.mxu0 0
    %1235 = vmatpush1.bf16.msra.mxu0 0
    %1236 = vmatprep.subr.bf16.mxu0 0
    %1237 = vmatpush1.bf16.msra.mxu0 0
    %1238 = vmatprep.subr.bf16.mxu0 0
    %1239 = vmatpush1.bf16.msra.mxu0 0
    %1240 = vmatprep.subr.bf16.mxu0 0
    %1241 = vmatpush1.bf16.msra.mxu0 0
    %1242 = vmatprep.subr.bf16.mxu0 0
    %1243 = vmatpush1.bf16.msra.mxu0 0
    %1244 = vmatprep.subr.bf16.mxu0 0
    %1245 = vmatpush1.bf16.msra.mxu0 0
    %1246 = vmatprep.subr.bf16.mxu0 0
    %1247 = vmatpush1.bf16.msra.mxu0 0
    %1248 = vmatprep.mubr.bf16.mxu0 0
    %1249 = vmatmul.mubr.bf16.gmra.mrb[0].mxu0 %v1214
    %v1250 = vpop.f32.mrb[0].mxu0
    %v1251 = vadd.f32 0.0, %v1250
    %v1252 = vpop.f32.mrb[0].mxu0
    %v1253 = vpop.f32.mrb[0].mxu0
    %v1254 = vadd.f32 0.0, %v1253
    %v1255 = vpop.f32.mrb[0].mxu0
    %1256 = vdwg.mxu0
    %1257 = vst [vmem:[#allocation3] sm:$0xff] %v1251
    %1258 = vst [vmem:[#allocation3 + $0x8] sm:$0xff] %v1254
    %v1259 = vld [vmem:[%s165] sm:$0xf]
    %v1260 = vld [vmem:[%s165 + $0x4] sm:$0xf]
    %v1261 = vld [vmem:[#allocation2 + $0x8] sm:$0xff]
    %v1264 = vunpack.c.l.b16 %v1259
    %v1265 = vunpack.c.l.b16 %v1260
    %v1266 = vpack.c.b16 %v1265, %v1264
    %v1268 = vsel %vm118, %v1266, 0
    %1270 = vmatprep.subr.bf16.mxu0 0
    %1271 = vmatpush1.bf16.msra.mxu0 %v1261
    %1272 = vmatprep.subr.bf16.mxu0 0
    %1273 = vmatpush1.bf16.msra.mxu0 0
    %1274 = vmatprep.subr.bf16.mxu0 0
    %1275 = vmatpush1.bf16.msra.mxu0 0
    %1276 = vmatprep.subr.bf16.mxu0 0
    %1277 = vmatpush1.bf16.msra.mxu0 0
    %1278 = vmatprep.subr.bf16.mxu0 0
    %1279 = vmatpush1.bf16.msra.mxu0 0
    %1280 = vmatprep.subr.bf16.mxu0 0
    %1281 = vmatpush1.bf16.msra.mxu0 0
    %1282 = vmatprep.subr.bf16.mxu0 0
    %1283 = vmatpush1.bf16.msra.mxu0 0
    %1284 = vmatprep.subr.bf16.mxu0 0
    %1285 = vmatpush1.bf16.msra.mxu0 0
    %1286 = vmatprep.subr.bf16.mxu0 0
    %1287 = vmatpush1.bf16.msra.mxu0 0
    %1288 = vmatprep.subr.bf16.mxu0 0
    %1289 = vmatpush1.bf16.msra.mxu0 0
    %1290 = vmatprep.subr.bf16.mxu0 0
    %1291 = vmatpush1.bf16.msra.mxu0 0
    %1292 = vmatprep.subr.bf16.mxu0 0
    %1293 = vmatpush1.bf16.msra.mxu0 0
    %1294 = vmatprep.subr.bf16.mxu0 0
    %1295 = vmatpush1.bf16.msra.mxu0 0
    %1296 = vmatprep.subr.bf16.mxu0 0
    %1297 = vmatpush1.bf16.msra.mxu0 0
    %1298 = vmatprep.subr.bf16.mxu0 0
    %1299 = vmatpush1.bf16.msra.mxu0 0
    %1300 = vmatprep.subr.bf16.mxu0 0
    %1301 = vmatpush1.bf16.msra.mxu0 0
    %1302 = vmatprep.mubr.bf16.mxu0 0
    %1303 = vmatmul.mubr.bf16.gmra.mrb[0].mxu0 %v1268
    %v1304 = vpop.f32.mrb[0].mxu0
    %v1305 = vadd.f32 0.0, %v1304
    %v1306 = vpop.f32.mrb[0].mxu0
    %v1307 = vpop.f32.mrb[0].mxu0
    %v1308 = vadd.f32 0.0, %v1307
    %v1309 = vpop.f32.mrb[0].mxu0
    %1310 = vdwg.mxu0
    %1311 = vst [vmem:[#allocation3 + $0x10] sm:$0xff] %v1305
    %1312 = vst [vmem:[#allocation3 + $0x18] sm:$0xff] %v1308
    %v1313 = vld [vmem:[%s220] sm:$0xf]
    %v1314 = vld [vmem:[%s220 + $0x4] sm:$0xf]
    %v1315 = vld [vmem:[#allocation2 + $0x10] sm:$0xff]
    %v1318 = vunpack.c.l.b16 %v1313
    %v1319 = vunpack.c.l.b16 %v1314
    %v1320 = vpack.c.b16 %v1319, %v1318
    %v1322 = vsel %vm118, %v1320, 0
    %1324 = vmatprep.subr.bf16.mxu0 0
    %1325 = vmatpush1.bf16.msra.mxu0 %v1315
    %1326 = vmatprep.subr.bf16.mxu0 0
    %1327 = vmatpush1.bf16.msra.mxu0 0
    %1328 = vmatprep.subr.bf16.mxu0 0
    %1329 = vmatpush1.bf16.msra.mxu0 0
    %1330 = vmatprep.subr.bf16.mxu0 0
    %1331 = vmatpush1.bf16.msra.mxu0 0
    %1332 = vmatprep.subr.bf16.mxu0 0
    %1333 = vmatpush1.bf16.msra.mxu0 0
    %1334 = vmatprep.subr.bf16.mxu0 0
    %1335 = vmatpush1.bf16.msra.mxu0 0
    %1336 = vmatprep.subr.bf16.mxu0 0
    %1337 = vmatpush1.bf16.msra.mxu0 0
    %1338 = vmatprep.subr.bf16.mxu0 0
    %1339 = vmatpush1.bf16.msra.mxu0 0
    %1340 = vmatprep.subr.bf16.mxu0 0
    %1341 = vmatpush1.bf16.msra.mxu0 0
    %1342 = vmatprep.subr.bf16.mxu0 0
    %1343 = vmatpush1.bf16.msra.mxu0 0
    %1344 = vmatprep.subr.bf16.mxu0 0
    %1345 = vmatpush1.bf16.msra.mxu0 0
    %1346 = vmatprep.subr.bf16.mxu0 0
    %1347 = vmatpush1.bf16.msra.mxu0 0
    %1348 = vmatprep.subr.bf16.mxu0 0
    %1349 = vmatpush1.bf16.msra.mxu0 0
    %1350 = vmatprep.subr.bf16.mxu0 0
    %1351 = vmatpush1.bf16.msra.mxu0 0
    %1352 = vmatprep.subr.bf16.mxu0 0
    %1353 = vmatpush1.bf16.msra.mxu0 0
    %1354 = vmatprep.subr.bf16.mxu0 0
    %1355 = vmatpush1.bf16.msra.mxu0 0
    %1356 = vmatprep.mubr.bf16.mxu0 0
    %1357 = vmatmul.mubr.bf16.gmra.mrb[0].mxu0 %v1322
    %v1358 = vpop.f32.mrb[0].mxu0
    %v1359 = vadd.f32 0.0, %v1358
    %v1360 = vpop.f32.mrb[0].mxu0
    %v1361 = vpop.f32.mrb[0].mxu0
    %v1362 = vadd.f32 0.0, %v1361
    %v1363 = vpop.f32.mrb[0].mxu0
    %1364 = vdwg.mxu0
    %1365 = vst [vmem:[#allocation3 + $0x20] sm:$0xff] %v1359
    %1366 = vst [vmem:[#allocation3 + $0x28] sm:$0xff] %v1362
    %v1367 = vld [vmem:[%s275] sm:$0xf]
    %v1368 = vld [vmem:[%s275 + $0x4] sm:$0xf]
    %v1369 = vld [vmem:[#allocation2 + $0x18] sm:$0xff]
    %v1372 = vunpack.c.l.b16 %v1367
    %v1373 = vunpack.c.l.b16 %v1368
    %v1374 = vpack.c.b16 %v1373, %v1372
    %v1376 = vsel %vm118, %v1374, 0
    %1378 = vmatprep.subr.bf16.mxu0 0
    %1379 = vmatpush1.bf16.msra.mxu0 %v1369
    %1380 = vmatprep.subr.bf16.mxu0 0
    %1381 = vmatpush1.bf16.msra.mxu0 0
    %1382 = vmatprep.subr.bf16.mxu0 0
    %1383 = vmatpush1.bf16.msra.mxu0 0
    %1384 = vmatprep.subr.bf16.mxu0 0
    %1385 = vmatpush1.bf16.msra.mxu0 0
    %1386 = vmatprep.subr.bf16.mxu0 0
    %1387 = vmatpush1.bf16.msra.mxu0 0
    %1388 = vmatprep.subr.bf16.mxu0 0
    %1389 = vmatpush1.bf16.msra.mxu0 0
    %1390 = vmatprep.subr.bf16.mxu0 0
    %1391 = vmatpush1.bf16.msra.mxu0 0
    %1392 = vmatprep.subr.bf16.mxu0 0
    %1393 = vmatpush1.bf16.msra.mxu0 0
    %1394 = vmatprep.subr.bf16.mxu0 0
    %1395 = vmatpush1.bf16.msra.mxu0 0
    %1396 = vmatprep.subr.bf16.mxu0 0
    %1397 = vmatpush1.bf16.msra.mxu0 0
    %1398 = vmatprep.subr.bf16.mxu0 0
    %1399 = vmatpush1.bf16.msra.mxu0 0
    %1400 = vmatprep.subr.bf16.mxu0 0
    %1401 = vmatpush1.bf16.msra.mxu0 0
    %1402 = vmatprep.subr.bf16.mxu0 0
    %1403 = vmatpush1.bf16.msra.mxu0 0
    %1404 = vmatprep.subr.bf16.mxu0 0
    %1405 = vmatpush1.bf16.msra.mxu0 0
    %1406 = vmatprep.subr.bf16.mxu0 0
    %1407 = vmatpush1.bf16.msra.mxu0 0
    %1408 = vmatprep.subr.bf16.mxu0 0
    %1409 = vmatpush1.bf16.msra.mxu0 0
    %1410 = vmatprep.mubr.bf16.mxu0 0
    %1411 = vmatmul.mubr.bf16.gmra.mrb[0].mxu0 %v1376
    %v1412 = vpop.f32.mrb[0].mxu0
    %v1413 = vadd.f32 0.0, %v1412
    %v1414 = vpop.f32.mrb[0].mxu0
    %v1415 = vpop.f32.mrb[0].mxu0
    %v1416 = vadd.f32 0.0, %v1415
    %v1417 = vpop.f32.mrb[0].mxu0
    %1418 = vdwg.mxu0
    %1419 = vst [vmem:[#allocation3 + $0x30] sm:$0xff] %v1413
    %1420 = vst [vmem:[#allocation3 + $0x38] sm:$0xff] %v1416
    %v1421 = vld [vmem:[#allocation3] sm:$0xff]
    %v1422 = vld [vmem:[#allocation3 + $0x8] sm:$0xff]
    %v1423 = vld [vmem:[#allocation3 + $0x10] sm:$0xff]
    %v1424 = vld [vmem:[#allocation3 + $0x18] sm:$0xff]
    %v1425 = vld [vmem:[#allocation3 + $0x20] sm:$0xff]
    %v1426 = vld [vmem:[#allocation3 + $0x28] sm:$0xff]
    %v1427 = vld [vmem:[#allocation3 + $0x30] sm:$0xff]
    %v1428 = vld [vmem:[#allocation3 + $0x38] sm:$0xff]
    %v1429 = vld [vmem:[#allocation2] sm:$0xff]
    %v1430 = vld [vmem:[#allocation2 + $0x8] sm:$0xff]
    %v1431 = vld [vmem:[#allocation2 + $0x10] sm:$0xff]
    %v1432 = vld [vmem:[#allocation2 + $0x18] sm:$0xff]
    %v1433 = vunpack.c.l.bf16 %v1429
    %v1434 = vunpack.c.h.bf16 %v1429
    %v1435 = vunpack.c.l.bf16 %v1430
    %v1436 = vunpack.c.h.bf16 %v1430
    %v1437 = vunpack.c.l.bf16 %v1431
    %v1438 = vunpack.c.h.bf16 %v1431
    %v1439 = vunpack.c.l.bf16 %v1432
    %v1440 = vunpack.c.h.bf16 %v1432
    %v1441 = vadd.f32 %v1421, %v1433
    %v1442 = vadd.f32 %v1422, %v1434
    %v1443 = vadd.f32 %v1423, %v1435
    %v1444 = vadd.f32 %v1424, %v1436
    %v1445 = vadd.f32 %v1425, %v1437
    %v1446 = vadd.f32 %v1426, %v1438
    %v1447 = vadd.f32 %v1427, %v1439
    %v1448 = vadd.f32 %v1428, %v1440
    %v1449 = vpack.c.bf16 %v1442, %v1441
    %v1450 = vpack.c.bf16 %v1444, %v1443
    %v1451 = vpack.c.bf16 %v1446, %v1445
    %v1452 = vpack.c.bf16 %v1448, %v1447
    %s1453 = scalar_lea.vmem [#allocation9], 256
    %v1454 = vld [vmem:[%s1453] sm:$0xf]
    %v1455 = vld [vmem:[%s1453 + $0x4] sm:$0xf]
    %v1456 = vld [vmem:[%s1453 + $0x8] sm:$0xf]
    %v1457 = vld [vmem:[%s1453 + $0xc] sm:$0xf]
    %v1458 = vld [vmem:[%s1453 + $0x10] sm:$0xf]
    %v1459 = vld [vmem:[%s1453 + $0x14] sm:$0xf]
    %v1460 = vld [vmem:[%s1453 + $0x18] sm:$0xf]
    %v1461 = vld [vmem:[%s1453 + $0x1c] sm:$0xf]
    %v1462 = vld [vmem:[%s1453 + $0x20] sm:$0xf]
    %v1463 = vld [vmem:[%s1453 + $0x24] sm:$0xf]
    %v1464 = vld [vmem:[%s1453 + $0x28] sm:$0xf]
    %v1465 = vld [vmem:[%s1453 + $0x2c] sm:$0xf]
    %v1466 = vld [vmem:[%s1453 + $0x30] sm:$0xf]
    %v1467 = vld [vmem:[%s1453 + $0x34] sm:$0xf]
    %v1468 = vld [vmem:[%s1453 + $0x38] sm:$0xf]
    %v1469 = vld [vmem:[%s1453 + $0x3c] sm:$0xf]
    %v1470 = vld [vmem:[#allocation10 + $0x4] sm:$0x1]
    %v1471 = vlaneseq
    %v1472 = vshrl.u32 %v1471, 7
    %v1473 = vsub.s32 0, %v1472
    %v1474 = vrot.slane %v1470, %v1473
    %v1491 = vunpack.c.l.b16 %v1454
    %v1492 = vunpack.c.l.b16 %v1455
    %v1493 = vunpack.c.l.b16 %v1456
    %v1494 = vunpack.c.l.b16 %v1457
    %v1495 = vunpack.c.l.b16 %v1458
    %v1496 = vunpack.c.l.b16 %v1459
    %v1497 = vunpack.c.l.b16 %v1460
    %v1498 = vunpack.c.l.b16 %v1461
    %v1499 = vunpack.c.l.b16 %v1462
    %v1500 = vunpack.c.l.b16 %v1463
    %v1501 = vunpack.c.l.b16 %v1464
    %v1502 = vunpack.c.l.b16 %v1465
    %v1503 = vunpack.c.l.b16 %v1466
    %v1504 = vunpack.c.l.b16 %v1467
    %v1505 = vunpack.c.l.b16 %v1468
    %v1506 = vunpack.c.l.b16 %v1469
    %v1507 = vpack.c.b16 %v1492, %v1491
    %v1508 = vpack.c.b16 %v1494, %v1493
    %v1509 = vpack.c.b16 %v1496, %v1495
    %v1510 = vpack.c.b16 %v1498, %v1497
    %v1511 = vpack.c.b16 %v1500, %v1499
    %v1512 = vpack.c.b16 %v1502, %v1501
    %v1513 = vpack.c.b16 %v1504, %v1503
    %v1514 = vpack.c.b16 %v1506, %v1505
    %1523 = vmatprep.subr.bf16.mxu0 0
    %1524 = vmatpush1.bf16.msra.mxu0 %v1507
    %1525 = vmatprep.subr.bf16.mxu0 0
    %1526 = vmatpush1.bf16.msra.mxu0 %v1508
    %1527 = vmatprep.subr.bf16.mxu0 0
    %1528 = vmatpush1.bf16.msra.mxu0 %v1509
    %1529 = vmatprep.subr.bf16.mxu0 0
    %1530 = vmatpush1.bf16.msra.mxu0 %v1510
    %1531 = vmatprep.subr.bf16.mxu0 0
    %1532 = vmatpush1.bf16.msra.mxu0 %v1511
    %1533 = vmatprep.subr.bf16.mxu0 0
    %1534 = vmatpush1.bf16.msra.mxu0 %v1512
    %1535 = vmatprep.subr.bf16.mxu0 0
    %1536 = vmatpush1.bf16.msra.mxu0 %v1513
    %1537 = vmatprep.subr.bf16.mxu0 0
    %1538 = vmatpush1.bf16.msra.mxu0 %v1514
    %1539 = vmatprep.subr.bf16.mxu0 0
    %1540 = vmatpush1.bf16.msra.mxu0 0
    %1541 = vmatprep.subr.bf16.mxu0 0
    %1542 = vmatpush1.bf16.msra.mxu0 0
    %1543 = vmatprep.subr.bf16.mxu0 0
    %1544 = vmatpush1.bf16.msra.mxu0 0
    %1545 = vmatprep.subr.bf16.mxu0 0
    %1546 = vmatpush1.bf16.msra.mxu0 0
    %1547 = vmatprep.subr.bf16.mxu0 0
    %1548 = vmatpush1.bf16.msra.mxu0 0
    %1549 = vmatprep.subr.bf16.mxu0 0
    %1550 = vmatpush1.bf16.msra.mxu0 0
    %1551 = vmatprep.subr.bf16.mxu0 0
    %1552 = vmatpush1.bf16.msra.mxu0 0
    %1553 = vmatprep.subr.bf16.mxu0 0
    %1554 = vmatpush1.bf16.msra.mxu0 0
    %1555 = vmatprep.mubr.bf16.mxu0 0
    %1556 = vmatmul.mubr.bf16.gmra.mrb[0].mxu0 %v1449
    %v1557 = vpop.f32.mrb[0].mxu0
    %v1558 = vadd.f32 %v1474, %v1557
    %v1559 = vpop.f32.mrb[0].mxu0
    %v1560 = vpop.f32.mrb[0].mxu0
    %v1561 = vadd.f32 %v1474, %v1560
    %v1562 = vpop.f32.mrb[0].mxu0
    %1563 = vmatprep.mubr.bf16.mxu0 0
    %1564 = vmatmul.mubr.bf16.gmra.mrb[0].mxu0 %v1450
    %v1565 = vpop.f32.mrb[0].mxu0
    %v1566 = vadd.f32 %v1474, %v1565
    %v1567 = vpop.f32.mrb[0].mxu0
    %v1568 = vpop.f32.mrb[0].mxu0
    %v1569 = vadd.f32 %v1474, %v1568
    %v1570 = vpop.f32.mrb[0].mxu0
    %1571 = vmatprep.mubr.bf16.mxu0 0
    %1572 = vmatmul.mubr.bf16.gmra.mrb[0].mxu0 %v1451
    %v1573 = vpop.f32.mrb[0].mxu0
    %v1574 = vadd.f32 %v1474, %v1573
    %v1575 = vpop.f32.mrb[0].mxu0
    %v1576 = vpop.f32.mrb[0].mxu0
    %v1577 = vadd.f32 %v1474, %v1576
    %v1578 = vpop.f32.mrb[0].mxu0
    %1579 = vmatprep.mubr.bf16.mxu0 0
    %1580 = vmatmul.mubr.bf16.gmra.mrb[0].mxu0 %v1452
    %v1581 = vpop.f32.mrb[0].mxu0
    %v1582 = vadd.f32 %v1474, %v1581
    %v1583 = vpop.f32.mrb[0].mxu0
    %v1584 = vpop.f32.mrb[0].mxu0
    %v1585 = vadd.f32 %v1474, %v1584
    %v1586 = vpop.f32.mrb[0].mxu0
    %1587 = vdwg.mxu0
    %v1588 = vmax.f32 %v1558, 0.0
    %v1589 = vmax.f32 %v1561, 0.0
    %v1590 = vmax.f32 %v1566, 0.0
    %v1591 = vmax.f32 %v1569, 0.0
    %v1592 = vmax.f32 %v1574, 0.0
    %v1593 = vmax.f32 %v1577, 0.0
    %v1594 = vmax.f32 %v1582, 0.0
    %v1595 = vmax.f32 %v1585, 0.0
    %v1596 = vpack.c.bf16 %v1589, %v1588
    %v1597 = vpack.c.bf16 %v1591, %v1590
    %v1598 = vpack.c.bf16 %v1593, %v1592
    %v1599 = vpack.c.bf16 %v1595, %v1594
    %s1600 = scalar_lea.vmem [#allocation9], 320
    %v1601 = vld [vmem:[%s1600] sm:$0xf]
    %v1602 = vld [vmem:[%s1600 + $0x4] sm:$0xf]
    %v1603 = vld [vmem:[%s1600 + $0x8] sm:$0xf]
    %v1604 = vld [vmem:[%s1600 + $0xc] sm:$0xf]
    %v1605 = vld [vmem:[%s1600 + $0x10] sm:$0xf]
    %v1606 = vld [vmem:[%s1600 + $0x14] sm:$0xf]
    %v1607 = vld [vmem:[%s1600 + $0x18] sm:$0xf]
    %v1608 = vld [vmem:[%s1600 + $0x1c] sm:$0xf]
    %v1609 = vld [vmem:[%s1600 + $0x20] sm:$0xf]
    %v1610 = vld [vmem:[%s1600 + $0x24] sm:$0xf]
    %v1611 = vld [vmem:[%s1600 + $0x28] sm:$0xf]
    %v1612 = vld [vmem:[%s1600 + $0x2c] sm:$0xf]
    %v1613 = vld [vmem:[%s1600 + $0x30] sm:$0xf]
    %v1614 = vld [vmem:[%s1600 + $0x34] sm:$0xf]
    %v1615 = vld [vmem:[%s1600 + $0x38] sm:$0xf]
    %v1616 = vld [vmem:[%s1600 + $0x3c] sm:$0xf]
    %v1617 = vld [vmem:[#allocation10 + $0x5] sm:$0x1]
    %v1618 = vlaneseq
    %v1619 = vshrl.u32 %v1618, 7
    %v1620 = vsub.s32 0, %v1619
    %v1621 = vrot.slane %v1617, %v1620
    %v1638 = vunpack.c.l.b16 %v1601
    %v1639 = vunpack.c.l.b16 %v1602
    %v1640 = vunpack.c.l.b16 %v1603
    %v1641 = vunpack.c.l.b16 %v1604
    %v1642 = vunpack.c.l.b16 %v1605
    %v1643 = vunpack.c.l.b16 %v1606
    %v1644 = vunpack.c.l.b16 %v1607
    %v1645 = vunpack.c.l.b16 %v1608
    %v1646 = vunpack.c.l.b16 %v1609
    %v1647 = vunpack.c.l.b16 %v1610
    %v1648 = vunpack.c.l.b16 %v1611
    %v1649 = vunpack.c.l.b16 %v1612
    %v1650 = vunpack.c.l.b16 %v1613
    %v1651 = vunpack.c.l.b16 %v1614
    %v1652 = vunpack.c.l.b16 %v1615
    %v1653 = vunpack.c.l.b16 %v1616
    %v1654 = vpack.c.b16 %v1639, %v1638
    %v1655 = vpack.c.b16 %v1641, %v1640
    %v1656 = vpack.c.b16 %v1643, %v1642
    %v1657 = vpack.c.b16 %v1645, %v1644
    %v1658 = vpack.c.b16 %v1647, %v1646
    %v1659 = vpack.c.b16 %v1649, %v1648
    %v1660 = vpack.c.b16 %v1651, %v1650
    %v1661 = vpack.c.b16 %v1653, %v1652
    %1670 = vmatprep.subr.bf16.mxu0 0
    %1671 = vmatpush1.bf16.msra.mxu0 %v1654
    %1672 = vmatprep.subr.bf16.mxu0 0
    %1673 = vmatpush1.bf16.msra.mxu0 %v1655
    %1674 = vmatprep.subr.bf16.mxu0 0
    %1675 = vmatpush1.bf16.msra.mxu0 %v1656
    %1676 = vmatprep.subr.bf16.mxu0 0
    %1677 = vmatpush1.bf16.msra.mxu0 %v1657
    %1678 = vmatprep.subr.bf16.mxu0 0
    %1679 = vmatpush1.bf16.msra.mxu0 %v1658
    %1680 = vmatprep.subr.bf16.mxu0 0
    %1681 = vmatpush1.bf16.msra.mxu0 %v1659
    %1682 = vmatprep.subr.bf16.mxu0 0
    %1683 = vmatpush1.bf16.msra.mxu0 %v1660
    %1684 = vmatprep.subr.bf16.mxu0 0
    %1685 = vmatpush1.bf16.msra.mxu0 %v1661
    %1686 = vmatprep.subr.bf16.mxu0 0
    %1687 = vmatpush1.bf16.msra.mxu0 0
    %1688 = vmatprep.subr.bf16.mxu0 0
    %1689 = vmatpush1.bf16.msra.mxu0 0
    %1690 = vmatprep.subr.bf16.mxu0 0
    %1691 = vmatpush1.bf16.msra.mxu0 0
    %1692 = vmatprep.subr.bf16.mxu0 0
    %1693 = vmatpush1.bf16.msra.mxu0 0
    %1694 = vmatprep.subr.bf16.mxu0 0
    %1695 = vmatpush1.bf16.msra.mxu0 0
    %1696 = vmatprep.subr.bf16.mxu0 0
    %1697 = vmatpush1.bf16.msra.mxu0 0
    %1698 = vmatprep.subr.bf16.mxu0 0
    %1699 = vmatpush1.bf16.msra.mxu0 0
    %1700 = vmatprep.subr.bf16.mxu0 0
    %1701 = vmatpush1.bf16.msra.mxu0 0
    %1702 = vmatprep.mubr.bf16.mxu0 0
    %1703 = vmatmul.mubr.bf16.gmra.mrb[0].mxu0 %v1596
    %v1704 = vpop.f32.mrb[0].mxu0
    %v1705 = vadd.f32 %v1621, %v1704
    %v1706 = vpop.f32.mrb[0].mxu0
    %v1707 = vpop.f32.mrb[0].mxu0
    %v1708 = vadd.f32 %v1621, %v1707
    %v1709 = vpop.f32.mrb[0].mxu0
    %1710 = vmatprep.mubr.bf16.mxu0 0
    %1711 = vmatmul.mubr.bf16.gmra.mrb[0].mxu0 %v1597
    %v1712 = vpop.f32.mrb[0].mxu0
    %v1713 = vadd.f32 %v1621, %v1712
    %v1714 = vpop.f32.mrb[0].mxu0
    %v1715 = vpop.f32.mrb[0].mxu0
    %v1716 = vadd.f32 %v1621, %v1715
    %v1717 = vpop.f32.mrb[0].mxu0
    %1718 = vmatprep.mubr.bf16.mxu0 0
    %1719 = vmatmul.mubr.bf16.gmra.mrb[0].mxu0 %v1598
    %v1720 = vpop.f32.mrb[0].mxu0
    %v1721 = vadd.f32 %v1621, %v1720
    %v1722 = vpop.f32.mrb[0].mxu0
    %v1723 = vpop.f32.mrb[0].mxu0
    %v1724 = vadd.f32 %v1621, %v1723
    %v1725 = vpop.f32.mrb[0].mxu0
    %1726 = vmatprep.mubr.bf16.mxu0 0
    %1727 = vmatmul.mubr.bf16.gmra.mrb[0].mxu0 %v1599
    %v1728 = vpop.f32.mrb[0].mxu0
    %v1729 = vadd.f32 %v1621, %v1728
    %v1730 = vpop.f32.mrb[0].mxu0
    %v1731 = vpop.f32.mrb[0].mxu0
    %v1732 = vadd.f32 %v1621, %v1731
    %v1733 = vpop.f32.mrb[0].mxu0
    %1734 = vdwg.mxu0
    %v1735 = vmax.f32 %v1705, 0.0
    %v1736 = vmax.f32 %v1708, 0.0
    %v1737 = vmax.f32 %v1713, 0.0
    %v1738 = vmax.f32 %v1716, 0.0
    %v1739 = vmax.f32 %v1721, 0.0
    %v1740 = vmax.f32 %v1724, 0.0
    %v1741 = vmax.f32 %v1729, 0.0
    %v1742 = vmax.f32 %v1732, 0.0
    %v1743 = vpack.c.bf16 %v1736, %v1735
    %v1744 = vpack.c.bf16 %v1738, %v1737
    %v1745 = vpack.c.bf16 %v1740, %v1739
    %v1746 = vpack.c.bf16 %v1742, %v1741
    %1747 = vst [vmem:[#allocation2] sm:$0xff] %v1743
    %1748 = vst [vmem:[#allocation2 + $0x8] sm:$0xff] %v1744
    %1749 = vst [vmem:[#allocation2 + $0x10] sm:$0xff] %v1745
    %1750 = vst [vmem:[#allocation2 + $0x18] sm:$0xff] %v1746
    %v1751 = vld [vmem:[#allocation7] sm:$0xf]
    %v1752 = vld [vmem:[#allocation7 + $0x4] sm:$0xf]
    %v1753 = vld [vmem:[#allocation2] sm:$0xff]
    %v1756 = vunpack.c.l.b16 %v1751
    %v1757 = vunpack.c.l.b16 %v1752
    %v1758 = vpack.c.b16 %v1757, %v1756
    %v1760 = vsel %vm118, %v1758, 0
    %1762 = vmatprep.subr.bf16.mxu0 0
    %1763 = vmatpush1.bf16.msra.mxu0 %v1753
    %1764 = vmatprep.subr.bf16.mxu0 0
    %1765 = vmatpush1.bf16.msra.mxu0 0
    %1766 = vmatprep.subr.bf16.mxu0 0
    %1767 = vmatpush1.bf16.msra.mxu0 0
    %1768 = vmatprep.subr.bf16.mxu0 0
    %1769 = vmatpush1.bf16.msra.mxu0 0
    %1770 = vmatprep.subr.bf16.mxu0 0
    %1771 = vmatpush1.bf16.msra.mxu0 0
    %1772 = vmatprep.subr.bf16.mxu0 0
    %1773 = vmatpush1.bf16.msra.mxu0 0
    %1774 = vmatprep.subr.bf16.mxu0 0
    %1775 = vmatpush1.bf16.msra.mxu0 0
    %1776 = vmatprep.subr.bf16.mxu0 0
    %1777 = vmatpush1.bf16.msra.mxu0 0
    %1778 = vmatprep.subr.bf16.mxu0 0
    %1779 = vmatpush1.bf16.msra.mxu0 0
    %1780 = vmatprep.subr.bf16.mxu0 0
    %1781 = vmatpush1.bf16.msra.mxu0 0
    %1782 = vmatprep.subr.bf16.mxu0 0
    %1783 = vmatpush1.bf16.msra.mxu0 0
    %1784 = vmatprep.subr.bf16.mxu0 0
    %1785 = vmatpush1.bf16.msra.mxu0 0
    %1786 = vmatprep.subr.bf16.mxu0 0
    %1787 = vmatpush1.bf16.msra.mxu0 0
    %1788 = vmatprep.subr.bf16.mxu0 0
    %1789 = vmatpush1.bf16.msra.mxu0 0
    %1790 = vmatprep.subr.bf16.mxu0 0
    %1791 = vmatpush1.bf16.msra.mxu0 0
    %1792 = vmatprep.subr.bf16.mxu0 0
    %1793 = vmatpush1.bf16.msra.mxu0 0
    %1794 = vmatprep.mubr.bf16.mxu0 0
    %1795 = vmatmul.mubr.bf16.gmra.mrb[0].mxu0 %v1760
    %v1796 = vpop.f32.mrb[0].mxu0
    %v1797 = vadd.f32 0.0, %v1796
    %v1798 = vpop.f32.mrb[0].mxu0
    %v1799 = vpop.f32.mrb[0].mxu0
    %v1800 = vadd.f32 0.0, %v1799
    %v1801 = vpop.f32.mrb[0].mxu0
    %1802 = vdwg.mxu0
    %1803 = vst [vmem:[#allocation3] sm:$0xff] %v1797
    %1804 = vst [vmem:[#allocation3 + $0x8] sm:$0xff] %v1800
    %v1805 = vld [vmem:[%s165] sm:$0xf]
    %v1806 = vld [vmem:[%s165 + $0x4] sm:$0xf]
    %v1807 = vld [vmem:[#allocation2 + $0x8] sm:$0xff]
    %v1810 = vunpack.c.l.b16 %v1805
    %v1811 = vunpack.c.l.b16 %v1806
    %v1812 = vpack.c.b16 %v1811, %v1810
    %v1814 = vsel %vm118, %v1812, 0
    %1816 = vmatprep.subr.bf16.mxu0 0
    %1817 = vmatpush1.bf16.msra.mxu0 %v1807
    %1818 = vmatprep.subr.bf16.mxu0 0
    %1819 = vmatpush1.bf16.msra.mxu0 0
    %1820 = vmatprep.subr.bf16.mxu0 0
    %1821 = vmatpush1.bf16.msra.mxu0 0
    %1822 = vmatprep.subr.bf16.mxu0 0
    %1823 = vmatpush1.bf16.msra.mxu0 0
    %1824 = vmatprep.subr.bf16.mxu0 0
    %1825 = vmatpush1.bf16.msra.mxu0 0
    %1826 = vmatprep.subr.bf16.mxu0 0
    %1827 = vmatpush1.bf16.msra.mxu0 0
    %1828 = vmatprep.subr.bf16.mxu0 0
    %1829 = vmatpush1.bf16.msra.mxu0 0
    %1830 = vmatprep.subr.bf16.mxu0 0
    %1831 = vmatpush1.bf16.msra.mxu0 0
    %1832 = vmatprep.subr.bf16.mxu0 0
    %1833 = vmatpush1.bf16.msra.mxu0 0
    %1834 = vmatprep.subr.bf16.mxu0 0
    %1835 = vmatpush1.bf16.msra.mxu0 0
    %1836 = vmatprep.subr.bf16.mxu0 0
    %1837 = vmatpush1.bf16.msra.mxu0 0
    %1838 = vmatprep.subr.bf16.mxu0 0
    %1839 = vmatpush1.bf16.msra.mxu0 0
    %1840 = vmatprep.subr.bf16.mxu0 0
    %1841 = vmatpush1.bf16.msra.mxu0 0
    %1842 = vmatprep.subr.bf16.mxu0 0
    %1843 = vmatpush1.bf16.msra.mxu0 0
    %1844 = vmatprep.subr.bf16.mxu0 0
    %1845 = vmatpush1.bf16.msra.mxu0 0
    %1846 = vmatprep.subr.bf16.mxu0 0
    %1847 = vmatpush1.bf16.msra.mxu0 0
    %1848 = vmatprep.mubr.bf16.mxu0 0
    %1849 = vmatmul.mubr.bf16.gmra.mrb[0].mxu0 %v1814
    %v1850 = vpop.f32.mrb[0].mxu0
    %v1851 = vadd.f32 0.0, %v1850
    %v1852 = vpop.f32.mrb[0].mxu0
    %v1853 = vpop.f32.mrb[0].mxu0
    %v1854 = vadd.f32 0.0, %v1853
    %v1855 = vpop.f32.mrb[0].mxu0
    %1856 = vdwg.mxu0
    %1857 = vst [vmem:[#allocation3 + $0x10] sm:$0xff] %v1851
    %1858 = vst [vmem:[#allocation3 + $0x18] sm:$0xff] %v1854
    %v1859 = vld [vmem:[%s220] sm:$0xf]
    %v1860 = vld [vmem:[%s220 + $0x4] sm:$0xf]
    %v1861 = vld [vmem:[#allocation2 + $0x10] sm:$0xff]
    %v1864 = vunpack.c.l.b16 %v1859
    %v1865 = vunpack.c.l.b16 %v1860
    %v1866 = vpack.c.b16 %v1865, %v1864
    %v1868 = vsel %vm118, %v1866, 0
    %1870 = vmatprep.subr.bf16.mxu0 0
    %1871 = vmatpush1.bf16.msra.mxu0 %v1861
    %1872 = vmatprep.subr.bf16.mxu0 0
    %1873 = vmatpush1.bf16.msra.mxu0 0
    %1874 = vmatprep.subr.bf16.mxu0 0
    %1875 = vmatpush1.bf16.msra.mxu0 0
    %1876 = vmatprep.subr.bf16.mxu0 0
    %1877 = vmatpush1.bf16.msra.mxu0 0
    %1878 = vmatprep.subr.bf16.mxu0 0
    %1879 = vmatpush1.bf16.msra.mxu0 0
    %1880 = vmatprep.subr.bf16.mxu0 0
    %1881 = vmatpush1.bf16.msra.mxu0 0
    %1882 = vmatprep.subr.bf16.mxu0 0
    %1883 = vmatpush1.bf16.msra.mxu0 0
    %1884 = vmatprep.subr.bf16.mxu0 0
    %1885 = vmatpush1.bf16.msra.mxu0 0
    %1886 = vmatprep.subr.bf16.mxu0 0
    %1887 = vmatpush1.bf16.msra.mxu0 0
    %1888 = vmatprep.subr.bf16.mxu0 0
    %1889 = vmatpush1.bf16.msra.mxu0 0
    %1890 = vmatprep.subr.bf16.mxu0 0
    %1891 = vmatpush1.bf16.msra.mxu0 0
    %1892 = vmatprep.subr.bf16.mxu0 0
    %1893 = vmatpush1.bf16.msra.mxu0 0
    %1894 = vmatprep.subr.bf16.mxu0 0
    %1895 = vmatpush1.bf16.msra.mxu0 0
    %1896 = vmatprep.subr.bf16.mxu0 0
    %1897 = vmatpush1.bf16.msra.mxu0 0
    %1898 = vmatprep.subr.bf16.mxu0 0
    %1899 = vmatpush1.bf16.msra.mxu0 0
    %1900 = vmatprep.subr.bf16.mxu0 0
    %1901 = vmatpush1.bf16.msra.mxu0 0
    %1902 = vmatprep.mubr.bf16.mxu0 0
    %1903 = vmatmul.mubr.bf16.gmra.mrb[0].mxu0 %v1868
    %v1904 = vpop.f32.mrb[0].mxu0
    %v1905 = vadd.f32 0.0, %v1904
    %v1906 = vpop.f32.mrb[0].mxu0
    %v1907 = vpop.f32.mrb[0].mxu0
    %v1908 = vadd.f32 0.0, %v1907
    %v1909 = vpop.f32.mrb[0].mxu0
    %1910 = vdwg.mxu0
    %1911 = vst [vmem:[#allocation3 + $0x20] sm:$0xff] %v1905
    %1912 = vst [vmem:[#allocation3 + $0x28] sm:$0xff] %v1908
    %v1913 = vld [vmem:[%s275] sm:$0xf]
    %v1914 = vld [vmem:[%s275 + $0x4] sm:$0xf]
    %v1915 = vld [vmem:[#allocation2 + $0x18] sm:$0xff]
    %v1918 = vunpack.c.l.b16 %v1913
    %v1919 = vunpack.c.l.b16 %v1914
    %v1920 = vpack.c.b16 %v1919, %v1918
    %v1922 = vsel %vm118, %v1920, 0
    %1924 = vmatprep.subr.bf16.mxu0 0
    %1925 = vmatpush1.bf16.msra.mxu0 %v1915
    %1926 = vmatprep.subr.bf16.mxu0 0
    %1927 = vmatpush1.bf16.msra.mxu0 0
    %1928 = vmatprep.subr.bf16.mxu0 0
    %1929 = vmatpush1.bf16.msra.mxu0 0
    %1930 = vmatprep.subr.bf16.mxu0 0
    %1931 = vmatpush1.bf16.msra.mxu0 0
    %1932 = vmatprep.subr.bf16.mxu0 0
    %1933 = vmatpush1.bf16.msra.mxu0 0
    %1934 = vmatprep.subr.bf16.mxu0 0
    %1935 = vmatpush1.bf16.msra.mxu0 0
    %1936 = vmatprep.subr.bf16.mxu0 0
    %1937 = vmatpush1.bf16.msra.mxu0 0
    %1938 = vmatprep.subr.bf16.mxu0 0
    %1939 = vmatpush1.bf16.msra.mxu0 0
    %1940 = vmatprep.subr.bf16.mxu0 0
    %1941 = vmatpush1.bf16.msra.mxu0 0
    %1942 = vmatprep.subr.bf16.mxu0 0
    %1943 = vmatpush1.bf16.msra.mxu0 0
    %1944 = vmatprep.subr.bf16.mxu0 0
    %1945 = vmatpush1.bf16.msra.mxu0 0
    %1946 = vmatprep.subr.bf16.mxu0 0
    %1947 = vmatpush1.bf16.msra.mxu0 0
    %1948 = vmatprep.subr.bf16.mxu0 0
    %1949 = vmatpush1.bf16.msra.mxu0 0
    %1950 = vmatprep.subr.bf16.mxu0 0
    %1951 = vmatpush1.bf16.msra.mxu0 0
    %1952 = vmatprep.subr.bf16.mxu0 0
    %1953 = vmatpush1.bf16.msra.mxu0 0
    %1954 = vmatprep.subr.bf16.mxu0 0
    %1955 = vmatpush1.bf16.msra.mxu0 0
    %1956 = vmatprep.mubr.bf16.mxu0 0
    %1957 = vmatmul.mubr.bf16.gmra.mrb[0].mxu0 %v1922
    %v1958 = vpop.f32.mrb[0].mxu0
    %v1959 = vadd.f32 0.0, %v1958
    %v1960 = vpop.f32.mrb[0].mxu0
    %v1961 = vpop.f32.mrb[0].mxu0
    %v1962 = vadd.f32 0.0, %v1961
    %v1963 = vpop.f32.mrb[0].mxu0
    %1964 = vdwg.mxu0
    %1965 = vst [vmem:[#allocation3 + $0x30] sm:$0xff] %v1959
    %1966 = vst [vmem:[#allocation3 + $0x38] sm:$0xff] %v1962
    %v1967 = vld [vmem:[#allocation3] sm:$0xff]
    %v1968 = vld [vmem:[#allocation3 + $0x8] sm:$0xff]
    %v1969 = vld [vmem:[#allocation3 + $0x10] sm:$0xff]
    %v1970 = vld [vmem:[#allocation3 + $0x18] sm:$0xff]
    %v1971 = vld [vmem:[#allocation3 + $0x20] sm:$0xff]
    %v1972 = vld [vmem:[#allocation3 + $0x28] sm:$0xff]
    %v1973 = vld [vmem:[#allocation3 + $0x30] sm:$0xff]
    %v1974 = vld [vmem:[#allocation3 + $0x38] sm:$0xff]
    %v1975 = vld [vmem:[#allocation2] sm:$0xff]
    %v1976 = vld [vmem:[#allocation2 + $0x8] sm:$0xff]
    %v1977 = vld [vmem:[#allocation2 + $0x10] sm:$0xff]
    %v1978 = vld [vmem:[#allocation2 + $0x18] sm:$0xff]
    %v1979 = vunpack.c.l.bf16 %v1975
    %v1980 = vunpack.c.h.bf16 %v1975
    %v1981 = vunpack.c.l.bf16 %v1976
    %v1982 = vunpack.c.h.bf16 %v1976
    %v1983 = vunpack.c.l.bf16 %v1977
    %v1984 = vunpack.c.h.bf16 %v1977
    %v1985 = vunpack.c.l.bf16 %v1978
    %v1986 = vunpack.c.h.bf16 %v1978
    %v1987 = vadd.f32 %v1967, %v1979
    %v1988 = vadd.f32 %v1968, %v1980
    %v1989 = vadd.f32 %v1969, %v1981
    %v1990 = vadd.f32 %v1970, %v1982
    %v1991 = vadd.f32 %v1971, %v1983
    %v1992 = vadd.f32 %v1972, %v1984
    %v1993 = vadd.f32 %v1973, %v1985
    %v1994 = vadd.f32 %v1974, %v1986
    %v1995 = vpack.c.bf16 %v1988, %v1987
    %v1996 = vpack.c.bf16 %v1990, %v1989
    %v1997 = vpack.c.bf16 %v1992, %v1991
    %v1998 = vpack.c.bf16 %v1994, %v1993
    %s1999 = scalar_lea.vmem [#allocation9], 384
    %v2000 = vld [vmem:[%s1999] sm:$0xf]
    %v2001 = vld [vmem:[%s1999 + $0x4] sm:$0xf]
    %v2002 = vld [vmem:[%s1999 + $0x8] sm:$0xf]
    %v2003 = vld [vmem:[%s1999 + $0xc] sm:$0xf]
    %v2004 = vld [vmem:[%s1999 + $0x10] sm:$0xf]
    %v2005 = vld [vmem:[%s1999 + $0x14] sm:$0xf]
    %v2006 = vld [vmem:[%s1999 + $0x18] sm:$0xf]
    %v2007 = vld [vmem:[%s1999 + $0x1c] sm:$0xf]
    %v2008 = vld [vmem:[%s1999 + $0x20] sm:$0xf]
    %v2009 = vld [vmem:[%s1999 + $0x24] sm:$0xf]
    %v2010 = vld [vmem:[%s1999 + $0x28] sm:$0xf]
    %v2011 = vld [vmem:[%s1999 + $0x2c] sm:$0xf]
    %v2012 = vld [vmem:[%s1999 + $0x30] sm:$0xf]
    %v2013 = vld [vmem:[%s1999 + $0x34] sm:$0xf]
    %v2014 = vld [vmem:[%s1999 + $0x38] sm:$0xf]
    %v2015 = vld [vmem:[%s1999 + $0x3c] sm:$0xf]
    %v2016 = vld [vmem:[#allocation10 + $0x6] sm:$0x1]
    %v2017 = vlaneseq
    %v2018 = vshrl.u32 %v2017, 7
    %v2019 = vsub.s32 0, %v2018
    %v2020 = vrot.slane %v2016, %v2019
    %v2037 = vunpack.c.l.b16 %v2000
    %v2038 = vunpack.c.l.b16 %v2001
    %v2039 = vunpack.c.l.b16 %v2002
    %v2040 = vunpack.c.l.b16 %v2003
    %v2041 = vunpack.c.l.b16 %v2004
    %v2042 = vunpack.c.l.b16 %v2005
    %v2043 = vunpack.c.l.b16 %v2006
    %v2044 = vunpack.c.l.b16 %v2007
    %v2045 = vunpack.c.l.b16 %v2008
    %v2046 = vunpack.c.l.b16 %v2009
    %v2047 = vunpack.c.l.b16 %v2010
    %v2048 = vunpack.c.l.b16 %v2011
    %v2049 = vunpack.c.l.b16 %v2012
    %v2050 = vunpack.c.l.b16 %v2013
    %v2051 = vunpack.c.l.b16 %v2014
    %v2052 = vunpack.c.l.b16 %v2015
    %v2053 = vpack.c.b16 %v2038, %v2037
    %v2054 = vpack.c.b16 %v2040, %v2039
    %v2055 = vpack.c.b16 %v2042, %v2041
    %v2056 = vpack.c.b16 %v2044, %v2043
    %v2057 = vpack.c.b16 %v2046, %v2045
    %v2058 = vpack.c.b16 %v2048, %v2047
    %v2059 = vpack.c.b16 %v2050, %v2049
    %v2060 = vpack.c.b16 %v2052, %v2051
    %2069 = vmatprep.subr.bf16.mxu0 0
    %2070 = vmatpush1.bf16.msra.mxu0 %v2053
    %2071 = vmatprep.subr.bf16.mxu0 0
    %2072 = vmatpush1.bf16.msra.mxu0 %v2054
    %2073 = vmatprep.subr.bf16.mxu0 0
    %2074 = vmatpush1.bf16.msra.mxu0 %v2055
    %2075 = vmatprep.subr.bf16.mxu0 0
    %2076 = vmatpush1.bf16.msra.mxu0 %v2056
    %2077 = vmatprep.subr.bf16.mxu0 0
    %2078 = vmatpush1.bf16.msra.mxu0 %v2057
    %2079 = vmatprep.subr.bf16.mxu0 0
    %2080 = vmatpush1.bf16.msra.mxu0 %v2058
    %2081 = vmatprep.subr.bf16.mxu0 0
    %2082 = vmatpush1.bf16.msra.mxu0 %v2059
    %2083 = vmatprep.subr.bf16.mxu0 0
    %2084 = vmatpush1.bf16.msra.mxu0 %v2060
    %2085 = vmatprep.subr.bf16.mxu0 0
    %2086 = vmatpush1.bf16.msra.mxu0 0
    %2087 = vmatprep.subr.bf16.mxu0 0
    %2088 = vmatpush1.bf16.msra.mxu0 0
    %2089 = vmatprep.subr.bf16.mxu0 0
    %2090 = vmatpush1.bf16.msra.mxu0 0
    %2091 = vmatprep.subr.bf16.mxu0 0
    %2092 = vmatpush1.bf16.msra.mxu0 0
    %2093 = vmatprep.subr.bf16.mxu0 0
    %2094 = vmatpush1.bf16.msra.mxu0 0
    %2095 = vmatprep.subr.bf16.mxu0 0
    %2096 = vmatpush1.bf16.msra.mxu0 0
    %2097 = vmatprep.subr.bf16.mxu0 0
    %2098 = vmatpush1.bf16.msra.mxu0 0
    %2099 = vmatprep.subr.bf16.mxu0 0
    %2100 = vmatpush1.bf16.msra.mxu0 0
    %2101 = vmatprep.mubr.bf16.mxu0 0
    %2102 = vmatmul.mubr.bf16.gmra.mrb[0].mxu0 %v1995
    %v2103 = vpop.f32.mrb[0].mxu0
    %v2104 = vadd.f32 %v2020, %v2103
    %v2105 = vpop.f32.mrb[0].mxu0
    %v2106 = vpop.f32.mrb[0].mxu0
    %v2107 = vadd.f32 %v2020, %v2106
    %v2108 = vpop.f32.mrb[0].mxu0
    %2109 = vmatprep.mubr.bf16.mxu0 0
    %2110 = vmatmul.mubr.bf16.gmra.mrb[0].mxu0 %v1996
    %v2111 = vpop.f32.mrb[0].mxu0
    %v2112 = vadd.f32 %v2020, %v2111
    %v2113 = vpop.f32.mrb[0].mxu0
    %v2114 = vpop.f32.mrb[0].mxu0
    %v2115 = vadd.f32 %v2020, %v2114
    %v2116 = vpop.f32.mrb[0].mxu0
    %2117 = vmatprep.mubr.bf16.mxu0 0
    %2118 = vmatmul.mubr.bf16.gmra.mrb[0].mxu0 %v1997
    %v2119 = vpop.f32.mrb[0].mxu0
    %v2120 = vadd.f32 %v2020, %v2119
    %v2121 = vpop.f32.mrb[0].mxu0
    %v2122 = vpop.f32.mrb[0].mxu0
    %v2123 = vadd.f32 %v2020, %v2122
    %v2124 = vpop.f32.mrb[0].mxu0
    %2125 = vmatprep.mubr.bf16.mxu0 0
    %2126 = vmatmul.mubr.bf16.gmra.mrb[0].mxu0 %v1998
    %v2127 = vpop.f32.mrb[0].mxu0
    %v2128 = vadd.f32 %v2020, %v2127
    %v2129 = vpop.f32.mrb[0].mxu0
    %v2130 = vpop.f32.mrb[0].mxu0
    %v2131 = vadd.f32 %v2020, %v2130
    %v2132 = vpop.f32.mrb[0].mxu0
    %2133 = vdwg.mxu0
    %v2134 = vmax.f32 %v2104, 0.0
    %v2135 = vmax.f32 %v2107, 0.0
    %v2136 = vmax.f32 %v2112, 0.0
    %v2137 = vmax.f32 %v2115, 0.0
    %v2138 = vmax.f32 %v2120, 0.0
    %v2139 = vmax.f32 %v2123, 0.0
    %v2140 = vmax.f32 %v2128, 0.0
    %v2141 = vmax.f32 %v2131, 0.0
    %v2142 = vpack.c.bf16 %v2135, %v2134
    %v2143 = vpack.c.bf16 %v2137, %v2136
    %v2144 = vpack.c.bf16 %v2139, %v2138
    %v2145 = vpack.c.bf16 %v2141, %v2140
    %s2146 = scalar_lea.vmem [#allocation9], 448
    %v2147 = vld [vmem:[%s2146] sm:$0xf]
    %v2148 = vld [vmem:[%s2146 + $0x4] sm:$0xf]
    %v2149 = vld [vmem:[%s2146 + $0x8] sm:$0xf]
    %v2150 = vld [vmem:[%s2146 + $0xc] sm:$0xf]
    %v2151 = vld [vmem:[%s2146 + $0x10] sm:$0xf]
    %v2152 = vld [vmem:[%s2146 + $0x14] sm:$0xf]
    %v2153 = vld [vmem:[%s2146 + $0x18] sm:$0xf]
    %v2154 = vld [vmem:[%s2146 + $0x1c] sm:$0xf]
    %v2155 = vld [vmem:[%s2146 + $0x20] sm:$0xf]
    %v2156 = vld [vmem:[%s2146 + $0x24] sm:$0xf]
    %v2157 = vld [vmem:[%s2146 + $0x28] sm:$0xf]
    %v2158 = vld [vmem:[%s2146 + $0x2c] sm:$0xf]
    %v2159 = vld [vmem:[%s2146 + $0x30] sm:$0xf]
    %v2160 = vld [vmem:[%s2146 + $0x34] sm:$0xf]
    %v2161 = vld [vmem:[%s2146 + $0x38] sm:$0xf]
    %v2162 = vld [vmem:[%s2146 + $0x3c] sm:$0xf]
    %v2163 = vld [vmem:[#allocation10 + $0x7] sm:$0x1]
    %v2164 = vlaneseq
    %v2165 = vshrl.u32 %v2164, 7
    %v2166 = vsub.s32 0, %v2165
    %v2167 = vrot.slane %v2163, %v2166
    %v2184 = vunpack.c.l.b16 %v2147
    %v2185 = vunpack.c.l.b16 %v2148
    %v2186 = vunpack.c.l.b16 %v2149
    %v2187 = vunpack.c.l.b16 %v2150
    %v2188 = vunpack.c.l.b16 %v2151
    %v2189 = vunpack.c.l.b16 %v2152
    %v2190 = vunpack.c.l.b16 %v2153
    %v2191 = vunpack.c.l.b16 %v2154
    %v2192 = vunpack.c.l.b16 %v2155
    %v2193 = vunpack.c.l.b16 %v2156
    %v2194 = vunpack.c.l.b16 %v2157
    %v2195 = vunpack.c.l.b16 %v2158
    %v2196 = vunpack.c.l.b16 %v2159
    %v2197 = vunpack.c.l.b16 %v2160
    %v2198 = vunpack.c.l.b16 %v2161
    %v2199 = vunpack.c.l.b16 %v2162
    %v2200 = vpack.c.b16 %v2185, %v2184
    %v2201 = vpack.c.b16 %v2187, %v2186
    %v2202 = vpack.c.b16 %v2189, %v2188
    %v2203 = vpack.c.b16 %v2191, %v2190
    %v2204 = vpack.c.b16 %v2193, %v2192
    %v2205 = vpack.c.b16 %v2195, %v2194
    %v2206 = vpack.c.b16 %v2197, %v2196
    %v2207 = vpack.c.b16 %v2199, %v2198
    %2216 = vmatprep.subr.bf16.mxu0 0
    %2217 = vmatpush1.bf16.msra.mxu0 %v2200
    %2218 = vmatprep.subr.bf16.mxu0 0
    %2219 = vmatpush1.bf16.msra.mxu0 %v2201
    %2220 = vmatprep.subr.bf16.mxu0 0
    %2221 = vmatpush1.bf16.msra.mxu0 %v2202
    %2222 = vmatprep.subr.bf16.mxu0 0
    %2223 = vmatpush1.bf16.msra.mxu0 %v2203
    %2224 = vmatprep.subr.bf16.mxu0 0
    %2225 = vmatpush1.bf16.msra.mxu0 %v2204
    %2226 = vmatprep.subr.bf16.mxu0 0
    %2227 = vmatpush1.bf16.msra.mxu0 %v2205
    %2228 = vmatprep.subr.bf16.mxu0 0
    %2229 = vmatpush1.bf16.msra.mxu0 %v2206
    %2230 = vmatprep.subr.bf16.mxu0 0
    %2231 = vmatpush1.bf16.msra.mxu0 %v2207
    %2232 = vmatprep.subr.bf16.mxu0 0
    %2233 = vmatpush1.bf16.msra.mxu0 0
    %2234 = vmatprep.subr.bf16.mxu0 0
    %2235 = vmatpush1.bf16.msra.mxu0 0
    %2236 = vmatprep.subr.bf16.mxu0 0
    %2237 = vmatpush1.bf16.msra.mxu0 0
    %2238 = vmatprep.subr.bf16.mxu0 0
    %2239 = vmatpush1.bf16.msra.mxu0 0
    %2240 = vmatprep.subr.bf16.mxu0 0
    %2241 = vmatpush1.bf16.msra.mxu0 0
    %2242 = vmatprep.subr.bf16.mxu0 0
    %2243 = vmatpush1.bf16.msra.mxu0 0
    %2244 = vmatprep.subr.bf16.mxu0 0
    %2245 = vmatpush1.bf16.msra.mxu0 0
    %2246 = vmatprep.subr.bf16.mxu0 0
    %2247 = vmatpush1.bf16.msra.mxu0 0
    %2248 = vmatprep.mubr.bf16.mxu0 0
    %2249 = vmatmul.mubr.bf16.gmra.mrb[0].mxu0 %v2142
    %v2250 = vpop.f32.mrb[0].mxu0
    %v2251 = vadd.f32 %v2167, %v2250
    %v2252 = vpop.f32.mrb[0].mxu0
    %v2253 = vpop.f32.mrb[0].mxu0
    %v2254 = vadd.f32 %v2167, %v2253
    %v2255 = vpop.f32.mrb[0].mxu0
    %2256 = vmatprep.mubr.bf16.mxu0 0
    %2257 = vmatmul.mubr.bf16.gmra.mrb[0].mxu0 %v2143
    %v2258 = vpop.f32.mrb[0].mxu0
    %v2259 = vadd.f32 %v2167, %v2258
    %v2260 = vpop.f32.mrb[0].mxu0
    %v2261 = vpop.f32.mrb[0].mxu0
    %v2262 = vadd.f32 %v2167, %v2261
    %v2263 = vpop.f32.mrb[0].mxu0
    %2264 = vmatprep.mubr.bf16.mxu0 0
    %2265 = vmatmul.mubr.bf16.gmra.mrb[0].mxu0 %v2144
    %v2266 = vpop.f32.mrb[0].mxu0
    %v2267 = vadd.f32 %v2167, %v2266
    %v2268 = vpop.f32.mrb[0].mxu0
    %v2269 = vpop.f32.mrb[0].mxu0
    %v2270 = vadd.f32 %v2167, %v2269
    %v2271 = vpop.f32.mrb[0].mxu0
    %2272 = vmatprep.mubr.bf16.mxu0 0
    %2273 = vmatmul.mubr.bf16.gmra.mrb[0].mxu0 %v2145
    %v2274 = vpop.f32.mrb[0].mxu0
    %v2275 = vadd.f32 %v2167, %v2274
    %v2276 = vpop.f32.mrb[0].mxu0
    %v2277 = vpop.f32.mrb[0].mxu0
    %v2278 = vadd.f32 %v2167, %v2277
    %v2279 = vpop.f32.mrb[0].mxu0
    %2280 = vdwg.mxu0
    %v2281 = vpack.c.bf16 %v2254, %v2251
    %v2282 = vpack.c.bf16 %v2262, %v2259
    %v2283 = vpack.c.bf16 %v2270, %v2267
    %v2284 = vpack.c.bf16 %v2278, %v2275
    %2285 = vst [vmem:[#allocation2] sm:$0xff] %v2281
    %2286 = vst [vmem:[#allocation2 + $0x8] sm:$0xff] %v2282
    %2287 = vst [vmem:[#allocation2 + $0x10] sm:$0xff] %v2283
    %2288 = vst [vmem:[#allocation2 + $0x18] sm:$0xff] %v2284
    %v2289 = vld [vmem:[#allocation2] sm:$0xff]
    %v2290 = vld [vmem:[#allocation2 + $0x8] sm:$0xff]
    %v2291 = vld [vmem:[#allocation2 + $0x10] sm:$0xff]
    %v2292 = vld [vmem:[#allocation2 + $0x18] sm:$0xff]
    %s2293 = scalar_lea.vmem [#allocation9], 512
    %v2294 = vld [vmem:[%s2293] sm:$0xf]
    %v2295 = vld [vmem:[%s2293 + $0x4] sm:$0xf]
    %v2296 = vld [vmem:[%s2293 + $0x8] sm:$0xf]
    %v2297 = vld [vmem:[%s2293 + $0xc] sm:$0xf]
    %v2298 = vld [vmem:[%s2293 + $0x10] sm:$0xf]
    %v2299 = vld [vmem:[%s2293 + $0x14] sm:$0xf]
    %v2300 = vld [vmem:[%s2293 + $0x18] sm:$0xf]
    %v2301 = vld [vmem:[%s2293 + $0x1c] sm:$0xf]
    %v2302 = vld [vmem:[%s2293 + $0x20] sm:$0xf]
    %v2303 = vld [vmem:[%s2293 + $0x24] sm:$0xf]
    %v2304 = vld [vmem:[%s2293 + $0x28] sm:$0xf]
    %v2305 = vld [vmem:[%s2293 + $0x2c] sm:$0xf]
    %v2306 = vld [vmem:[%s2293 + $0x30] sm:$0xf]
    %v2307 = vld [vmem:[%s2293 + $0x34] sm:$0xf]
    %v2308 = vld [vmem:[%s2293 + $0x38] sm:$0xf]
    %v2309 = vld [vmem:[%s2293 + $0x3c] sm:$0xf]
    %v2326 = vunpack.c.l.b16 %v2294
    %v2327 = vunpack.c.l.b16 %v2295
    %v2328 = vunpack.c.l.b16 %v2296
    %v2329 = vunpack.c.l.b16 %v2297
    %v2330 = vunpack.c.l.b16 %v2298
    %v2331 = vunpack.c.l.b16 %v2299
    %v2332 = vunpack.c.l.b16 %v2300
    %v2333 = vunpack.c.l.b16 %v2301
    %v2334 = vunpack.c.l.b16 %v2302
    %v2335 = vunpack.c.l.b16 %v2303
    %v2336 = vunpack.c.l.b16 %v2304
    %v2337 = vunpack.c.l.b16 %v2305
    %v2338 = vunpack.c.l.b16 %v2306
    %v2339 = vunpack.c.l.b16 %v2307
    %v2340 = vunpack.c.l.b16 %v2308
    %v2341 = vunpack.c.l.b16 %v2309
    %v2342 = vpack.c.b16 %v2327, %v2326
    %v2343 = vpack.c.b16 %v2329, %v2328
    %v2344 = vpack.c.b16 %v2331, %v2330
    %v2345 = vpack.c.b16 %v2333, %v2332
    %v2346 = vpack.c.b16 %v2335, %v2334
    %v2347 = vpack.c.b16 %v2337, %v2336
    %v2348 = vpack.c.b16 %v2339, %v2338
    %v2349 = vpack.c.b16 %v2341, %v2340
    %2358 = vmatprep.subr.bf16.mxu0 0
    %2359 = vmatpush1.bf16.msra.mxu0 %v2342
    %2360 = vmatprep.subr.bf16.mxu0 0
    %2361 = vmatpush1.bf16.msra.mxu0 %v2343
    %2362 = vmatprep.subr.bf16.mxu0 0
    %2363 = vmatpush1.bf16.msra.mxu0 %v2344
    %2364 = vmatprep.subr.bf16.mxu0 0
    %2365 = vmatpush1.bf16.msra.mxu0 %v2345
    %2366 = vmatprep.subr.bf16.mxu0 0
    %2367 = vmatpush1.bf16.msra.mxu0 %v2346
    %2368 = vmatprep.subr.bf16.mxu0 0
    %2369 = vmatpush1.bf16.msra.mxu0 %v2347
    %2370 = vmatprep.subr.bf16.mxu0 0
    %2371 = vmatpush1.bf16.msra.mxu0 %v2348
    %2372 = vmatprep.subr.bf16.mxu0 0
    %2373 = vmatpush1.bf16.msra.mxu0 %v2349
    %2374 = vmatprep.subr.bf16.mxu0 0
    %2375 = vmatpush1.bf16.msra.mxu0 0
    %2376 = vmatprep.subr.bf16.mxu0 0
    %2377 = vmatpush1.bf16.msra.mxu0 0
    %2378 = vmatprep.subr.bf16.mxu0 0
    %2379 = vmatpush1.bf16.msra.mxu0 0
    %2380 = vmatprep.subr.bf16.mxu0 0
    %2381 = vmatpush1.bf16.msra.mxu0 0
    %2382 = vmatprep.subr.bf16.mxu0 0
    %2383 = vmatpush1.bf16.msra.mxu0 0
    %2384 = vmatprep.subr.bf16.mxu0 0
    %2385 = vmatpush1.bf16.msra.mxu0 0
    %2386 = vmatprep.subr.bf16.mxu0 0
    %2387 = vmatpush1.bf16.msra.mxu0 0
    %2388 = vmatprep.subr.bf16.mxu0 0
    %2389 = vmatpush1.bf16.msra.mxu0 0
    %2390 = vmatprep.mubr.bf16.mxu0 0
    %2391 = vmatmul.mubr.bf16.gmra.mrb[0].mxu0 %v2289
    %v2392 = vpop.f32.mrb[0].mxu0
    %v2393 = vadd.f32 0.0, %v2392
    %v2394 = vpop.f32.mrb[0].mxu0
    %v2395 = vpop.f32.mrb[0].mxu0
    %v2396 = vadd.f32 0.0, %v2395
    %v2397 = vpop.f32.mrb[0].mxu0
    %2398 = vmatprep.mubr.bf16.mxu0 0
    %2399 = vmatmul.mubr.bf16.gmra.mrb[0].mxu0 %v2290
    %v2400 = vpop.f32.mrb[0].mxu0
    %v2401 = vadd.f32 0.0, %v2400
    %v2402 = vpop.f32.mrb[0].mxu0
    %v2403 = vpop.f32.mrb[0].mxu0
    %v2404 = vadd.f32 0.0, %v2403
    %v2405 = vpop.f32.mrb[0].mxu0
    %2406 = vmatprep.mubr.bf16.mxu0 0
    %2407 = vmatmul.mubr.bf16.gmra.mrb[0].mxu0 %v2291
    %v2408 = vpop.f32.mrb[0].mxu0
    %v2409 = vadd.f32 0.0, %v2408
    %v2410 = vpop.f32.mrb[0].mxu0
    %v2411 = vpop.f32.mrb[0].mxu0
    %v2412 = vadd.f32 0.0, %v2411
    %v2413 = vpop.f32.mrb[0].mxu0
    %2414 = vmatprep.mubr.bf16.mxu0 0
    %2415 = vmatmul.mubr.bf16.gmra.mrb[0].mxu0 %v2292
    %v2416 = vpop.f32.mrb[0].mxu0
    %v2417 = vadd.f32 0.0, %v2416
    %v2418 = vpop.f32.mrb[0].mxu0
    %v2419 = vpop.f32.mrb[0].mxu0
    %v2420 = vadd.f32 0.0, %v2419
    %v2421 = vpop.f32.mrb[0].mxu0
    %2422 = vdwg.mxu0
    %v2423 = vld [vmem:[#allocation10 + $0x8] sm:$0x1]
    %v2424 = vlaneseq
    %v2425 = vshrl.u32 %v2424, 7
    %v2426 = vsub.s32 0, %v2425
    %v2427 = vrot.slane %v2423, %v2426
    %v2428 = vadd.f32 %v2393, %v2427
    %v2429 = vadd.f32 %v2396, %v2427
    %v2430 = vadd.f32 %v2401, %v2427
    %v2431 = vadd.f32 %v2404, %v2427
    %v2432 = vadd.f32 %v2409, %v2427
    %v2433 = vadd.f32 %v2412, %v2427
    %v2434 = vadd.f32 %v2417, %v2427
    %v2435 = vadd.f32 %v2420, %v2427
    %vm2436 = vcmp.ge.f32.partialorder %v2428, 0.0
    %vm2437 = vcmp.ge.f32.partialorder %v2429, 0.0
    %vm2438 = vcmp.ge.f32.partialorder %v2430, 0.0
    %vm2439 = vcmp.ge.f32.partialorder %v2431, 0.0
    %vm2440 = vcmp.ge.f32.partialorder %v2432, 0.0
    %vm2441 = vcmp.ge.f32.partialorder %v2433, 0.0
    %vm2442 = vcmp.ge.f32.partialorder %v2434, 0.0
    %vm2443 = vcmp.ge.f32.partialorder %v2435, 0.0
    %v2444 = vmul.f32 %v2428, 0.01
    %v2445 = vmul.f32 %v2429, 0.01
    %v2446 = vmul.f32 %v2430, 0.01
    %v2447 = vmul.f32 %v2431, 0.01
    %v2448 = vmul.f32 %v2432, 0.01
    %v2449 = vmul.f32 %v2433, 0.01
    %v2450 = vmul.f32 %v2434, 0.01
    %v2451 = vmul.f32 %v2435, 0.01
    %v2452 = vsel %vm2436, %v2428, %v2444
    %v2453 = vsel %vm2437, %v2429, %v2445
    %v2454 = vsel %vm2438, %v2430, %v2446
    %v2455 = vsel %vm2439, %v2431, %v2447
    %v2456 = vsel %vm2440, %v2432, %v2448
    %v2457 = vsel %vm2441, %v2433, %v2449
    %v2458 = vsel %vm2442, %v2434, %v2450
    %v2459 = vsel %vm2443, %v2435, %v2451
    %v2460 = vpack.c.bf16 %v2396, %v2393
    %v2461 = vpack.c.bf16 %v2404, %v2401
    %v2462 = vpack.c.bf16 %v2412, %v2409
    %v2463 = vpack.c.bf16 %v2420, %v2417
    %2464 = vst [vmem:[#allocation2] sm:$0xff] %v2460
    %2465 = vst [vmem:[#allocation2 + $0x8] sm:$0xff] %v2461
    %2466 = vst [vmem:[#allocation2 + $0x10] sm:$0xff] %v2462
    %2467 = vst [vmem:[#allocation2 + $0x18] sm:$0xff] %v2463
    %v2468 = vld [vmem:[#allocation7] sm:$0xf]
    %v2469 = vld [vmem:[#allocation7 + $0x4] sm:$0xf]
    %v2470 = vld [vmem:[#allocation2] sm:$0xff]
    %v2473 = vunpack.c.l.b16 %v2468
    %v2474 = vunpack.c.l.b16 %v2469
    %v2475 = vpack.c.b16 %v2474, %v2473
    %v2477 = vsel %vm118, %v2475, 0
    %2479 = vmatprep.subr.bf16.mxu0 0
    %2480 = vmatpush1.bf16.msra.mxu0 %v2470
    %2481 = vmatprep.subr.bf16.mxu0 0
    %2482 = vmatpush1.bf16.msra.mxu0 0
    %2483 = vmatprep.subr.bf16.mxu0 0
    %2484 = vmatpush1.bf16.msra.mxu0 0
    %2485 = vmatprep.subr.bf16.mxu0 0
    %2486 = vmatpush1.bf16.msra.mxu0 0
    %2487 = vmatprep.subr.bf16.mxu0 0
    %2488 = vmatpush1.bf16.msra.mxu0 0
    %2489 = vmatprep.subr.bf16.mxu0 0
    %2490 = vmatpush1.bf16.msra.mxu0 0
    %2491 = vmatprep.subr.bf16.mxu0 0
    %2492 = vmatpush1.bf16.msra.mxu0 0
    %2493 = vmatprep.subr.bf16.mxu0 0
    %2494 = vmatpush1.bf16.msra.mxu0 0
    %2495 = vmatprep.subr.bf16.mxu0 0
    %2496 = vmatpush1.bf16.msra.mxu0 0
    %2497 = vmatprep.subr.bf16.mxu0 0
    %2498 = vmatpush1.bf16.msra.mxu0 0
    %2499 = vmatprep.subr.bf16.mxu0 0
    %2500 = vmatpush1.bf16.msra.mxu0 0
    %2501 = vmatprep.subr.bf16.mxu0 0
    %2502 = vmatpush1.bf16.msra.mxu0 0
    %2503 = vmatprep.subr.bf16.mxu0 0
    %2504 = vmatpush1.bf16.msra.mxu0 0
    %2505 = vmatprep.subr.bf16.mxu0 0
    %2506 = vmatpush1.bf16.msra.mxu0 0
    %2507 = vmatprep.subr.bf16.mxu0 0
    %2508 = vmatpush1.bf16.msra.mxu0 0
    %2509 = vmatprep.subr.bf16.mxu0 0
    %2510 = vmatpush1.bf16.msra.mxu0 0
    %2511 = vmatprep.mubr.bf16.mxu0 0
    %2512 = vmatmul.mubr.bf16.gmra.mrb[0].mxu0 %v2477
    %v2513 = vpop.f32.mrb[0].mxu0
    %v2514 = vadd.f32 0.0, %v2513
    %v2515 = vpop.f32.mrb[0].mxu0
    %v2516 = vpop.f32.mrb[0].mxu0
    %v2517 = vadd.f32 0.0, %v2516
    %v2518 = vpop.f32.mrb[0].mxu0
    %2519 = vdwg.mxu0
    %2520 = vst [vmem:[#allocation3] sm:$0xff] %v2514
    %2521 = vst [vmem:[#allocation3 + $0x8] sm:$0xff] %v2517
    %v2522 = vld [vmem:[%s165] sm:$0xf]
    %v2523 = vld [vmem:[%s165 + $0x4] sm:$0xf]
    %v2524 = vld [vmem:[#allocation2 + $0x8] sm:$0xff]
    %v2527 = vunpack.c.l.b16 %v2522
    %v2528 = vunpack.c.l.b16 %v2523
    %v2529 = vpack.c.b16 %v2528, %v2527
    %v2531 = vsel %vm118, %v2529, 0
    %2533 = vmatprep.subr.bf16.mxu0 0
    %2534 = vmatpush1.bf16.msra.mxu0 %v2524
    %2535 = vmatprep.subr.bf16.mxu0 0
    %2536 = vmatpush1.bf16.msra.mxu0 0
    %2537 = vmatprep.subr.bf16.mxu0 0
    %2538 = vmatpush1.bf16.msra.mxu0 0
    %2539 = vmatprep.subr.bf16.mxu0 0
    %2540 = vmatpush1.bf16.msra.mxu0 0
    %2541 = vmatprep.subr.bf16.mxu0 0
    %2542 = vmatpush1.bf16.msra.mxu0 0
    %2543 = vmatprep.subr.bf16.mxu0 0
    %2544 = vmatpush1.bf16.msra.mxu0 0
    %2545 = vmatprep.subr.bf16.mxu0 0
    %2546 = vmatpush1.bf16.msra.mxu0 0
    %2547 = vmatprep.subr.bf16.mxu0 0
    %2548 = vmatpush1.bf16.msra.mxu0 0
    %2549 = vmatprep.subr.bf16.mxu0 0
    %2550 = vmatpush1.bf16.msra.mxu0 0
    %2551 = vmatprep.subr.bf16.mxu0 0
    %2552 = vmatpush1.bf16.msra.mxu0 0
    %2553 = vmatprep.subr.bf16.mxu0 0
    %2554 = vmatpush1.bf16.msra.mxu0 0
    %2555 = vmatprep.subr.bf16.mxu0 0
    %2556 = vmatpush1.bf16.msra.mxu0 0
    %2557 = vmatprep.subr.bf16.mxu0 0
    %2558 = vmatpush1.bf16.msra.mxu0 0
    %2559 = vmatprep.subr.bf16.mxu0 0
    %2560 = vmatpush1.bf16.msra.mxu0 0
    %2561 = vmatprep.subr.bf16.mxu0 0
    %2562 = vmatpush1.bf16.msra.mxu0 0
    %2563 = vmatprep.subr.bf16.mxu0 0
    %2564 = vmatpush1.bf16.msra.mxu0 0
    %2565 = vmatprep.mubr.bf16.mxu0 0
    %2566 = vmatmul.mubr.bf16.gmra.mrb[0].mxu0 %v2531
    %v2567 = vpop.f32.mrb[0].mxu0
    %v2568 = vadd.f32 0.0, %v2567
    %v2569 = vpop.f32.mrb[0].mxu0
    %v2570 = vpop.f32.mrb[0].mxu0
    %v2571 = vadd.f32 0.0, %v2570
    %v2572 = vpop.f32.mrb[0].mxu0
    %2573 = vdwg.mxu0
    %2574 = vst [vmem:[#allocation3 + $0x10] sm:$0xff] %v2568
    %2575 = vst [vmem:[#allocation3 + $0x18] sm:$0xff] %v2571
    %v2576 = vld [vmem:[%s220] sm:$0xf]
    %v2577 = vld [vmem:[%s220 + $0x4] sm:$0xf]
    %v2578 = vld [vmem:[#allocation2 + $0x10] sm:$0xff]
    %v2581 = vunpack.c.l.b16 %v2576
    %v2582 = vunpack.c.l.b16 %v2577
    %v2583 = vpack.c.b16 %v2582, %v2581
    %v2585 = vsel %vm118, %v2583, 0
    %2587 = vmatprep.subr.bf16.mxu0 0
    %2588 = vmatpush1.bf16.msra.mxu0 %v2578
    %2589 = vmatprep.subr.bf16.mxu0 0
    %2590 = vmatpush1.bf16.msra.mxu0 0
    %2591 = vmatprep.subr.bf16.mxu0 0
    %2592 = vmatpush1.bf16.msra.mxu0 0
    %2593 = vmatprep.subr.bf16.mxu0 0
    %2594 = vmatpush1.bf16.msra.mxu0 0
    %2595 = vmatprep.subr.bf16.mxu0 0
    %2596 = vmatpush1.bf16.msra.mxu0 0
    %2597 = vmatprep.subr.bf16.mxu0 0
    %2598 = vmatpush1.bf16.msra.mxu0 0
    %2599 = vmatprep.subr.bf16.mxu0 0
    %2600 = vmatpush1.bf16.msra.mxu0 0
    %2601 = vmatprep.subr.bf16.mxu0 0
    %2602 = vmatpush1.bf16.msra.mxu0 0
    %2603 = vmatprep.subr.bf16.mxu0 0
    %2604 = vmatpush1.bf16.msra.mxu0 0
    %2605 = vmatprep.subr.bf16.mxu0 0
    %2606 = vmatpush1.bf16.msra.mxu0 0
    %2607 = vmatprep.subr.bf16.mxu0 0
    %2608 = vmatpush1.bf16.msra.mxu0 0
    %2609 = vmatprep.subr.bf16.mxu0 0
    %2610 = vmatpush1.bf16.msra.mxu0 0
    %2611 = vmatprep.subr.bf16.mxu0 0
    %2612 = vmatpush1.bf16.msra.mxu0 0
    %2613 = vmatprep.subr.bf16.mxu0 0
    %2614 = vmatpush1.bf16.msra.mxu0 0
    %2615 = vmatprep.subr.bf16.mxu0 0
    %2616 = vmatpush1.bf16.msra.mxu0 0
    %2617 = vmatprep.subr.bf16.mxu0 0
    %2618 = vmatpush1.bf16.msra.mxu0 0
    %2619 = vmatprep.mubr.bf16.mxu0 0
    %2620 = vmatmul.mubr.bf16.gmra.mrb[0].mxu0 %v2585
    %v2621 = vpop.f32.mrb[0].mxu0
    %v2622 = vadd.f32 0.0, %v2621
    %v2623 = vpop.f32.mrb[0].mxu0
    %v2624 = vpop.f32.mrb[0].mxu0
    %v2625 = vadd.f32 0.0, %v2624
    %v2626 = vpop.f32.mrb[0].mxu0
    %2627 = vdwg.mxu0
    %2628 = vst [vmem:[#allocation3 + $0x20] sm:$0xff] %v2622
    %2629 = vst [vmem:[#allocation3 + $0x28] sm:$0xff] %v2625
    %v2630 = vld [vmem:[%s275] sm:$0xf]
    %v2631 = vld [vmem:[%s275 + $0x4] sm:$0xf]
    %v2632 = vld [vmem:[#allocation2 + $0x18] sm:$0xff]
    %v2635 = vunpack.c.l.b16 %v2630
    %v2636 = vunpack.c.l.b16 %v2631
    %v2637 = vpack.c.b16 %v2636, %v2635
    %v2639 = vsel %vm118, %v2637, 0
    %2641 = vmatprep.subr.bf16.mxu0 0
    %2642 = vmatpush1.bf16.msra.mxu0 %v2632
    %2643 = vmatprep.subr.bf16.mxu0 0
    %2644 = vmatpush1.bf16.msra.mxu0 0
    %2645 = vmatprep.subr.bf16.mxu0 0
    %2646 = vmatpush1.bf16.msra.mxu0 0
    %2647 = vmatprep.subr.bf16.mxu0 0
    %2648 = vmatpush1.bf16.msra.mxu0 0
    %2649 = vmatprep.subr.bf16.mxu0 0
    %2650 = vmatpush1.bf16.msra.mxu0 0
    %2651 = vmatprep.subr.bf16.mxu0 0
    %2652 = vmatpush1.bf16.msra.mxu0 0
    %2653 = vmatprep.subr.bf16.mxu0 0
    %2654 = vmatpush1.bf16.msra.mxu0 0
    %2655 = vmatprep.subr.bf16.mxu0 0
    %2656 = vmatpush1.bf16.msra.mxu0 0
    %2657 = vmatprep.subr.bf16.mxu0 0
    %2658 = vmatpush1.bf16.msra.mxu0 0
    %2659 = vmatprep.subr.bf16.mxu0 0
    %2660 = vmatpush1.bf16.msra.mxu0 0
    %2661 = vmatprep.subr.bf16.mxu0 0
    %2662 = vmatpush1.bf16.msra.mxu0 0
    %2663 = vmatprep.subr.bf16.mxu0 0
    %2664 = vmatpush1.bf16.msra.mxu0 0
    %2665 = vmatprep.subr.bf16.mxu0 0
    %2666 = vmatpush1.bf16.msra.mxu0 0
    %2667 = vmatprep.subr.bf16.mxu0 0
    %2668 = vmatpush1.bf16.msra.mxu0 0
    %2669 = vmatprep.subr.bf16.mxu0 0
    %2670 = vmatpush1.bf16.msra.mxu0 0
    %2671 = vmatprep.subr.bf16.mxu0 0
    %2672 = vmatpush1.bf16.msra.mxu0 0
    %2673 = vmatprep.mubr.bf16.mxu0 0
    %2674 = vmatmul.mubr.bf16.gmra.mrb[0].mxu0 %v2639
    %v2675 = vpop.f32.mrb[0].mxu0
    %v2676 = vadd.f32 0.0, %v2675
    %v2677 = vpop.f32.mrb[0].mxu0
    %v2678 = vpop.f32.mrb[0].mxu0
    %v2679 = vadd.f32 0.0, %v2678
    %v2680 = vpop.f32.mrb[0].mxu0
    %2681 = vdwg.mxu0
    %2682 = vst [vmem:[#allocation3 + $0x30] sm:$0xff] %v2676
    %2683 = vst [vmem:[#allocation3 + $0x38] sm:$0xff] %v2679
    %v2684 = vld [vmem:[#allocation3] sm:$0xff]
    %v2685 = vld [vmem:[#allocation3 + $0x8] sm:$0xff]
    %v2686 = vld [vmem:[#allocation3 + $0x10] sm:$0xff]
    %v2687 = vld [vmem:[#allocation3 + $0x18] sm:$0xff]
    %v2688 = vld [vmem:[#allocation3 + $0x20] sm:$0xff]
    %v2689 = vld [vmem:[#allocation3 + $0x28] sm:$0xff]
    %v2690 = vld [vmem:[#allocation3 + $0x30] sm:$0xff]
    %v2691 = vld [vmem:[#allocation3 + $0x38] sm:$0xff]
    %v2692 = vadd.f32 %v2684, %v2393
    %v2693 = vadd.f32 %v2685, %v2396
    %v2694 = vadd.f32 %v2686, %v2401
    %v2695 = vadd.f32 %v2687, %v2404
    %v2696 = vadd.f32 %v2688, %v2409
    %v2697 = vadd.f32 %v2689, %v2412
    %v2698 = vadd.f32 %v2690, %v2417
    %v2699 = vadd.f32 %v2691, %v2420
    %v2700 = vld [vmem:[#allocation10 + $0x9] sm:$0x1]
    %v2701 = vlaneseq
    %v2702 = vshrl.u32 %v2701, 7
    %v2703 = vsub.s32 0, %v2702
    %v2704 = vrot.slane %v2700, %v2703
    %v2705 = vadd.f32 %v2692, %v2704
    %v2706 = vadd.f32 %v2693, %v2704
    %v2707 = vadd.f32 %v2694, %v2704
    %v2708 = vadd.f32 %v2695, %v2704
    %v2709 = vadd.f32 %v2696, %v2704
    %v2710 = vadd.f32 %v2697, %v2704
    %v2711 = vadd.f32 %v2698, %v2704
    %v2712 = vadd.f32 %v2699, %v2704
    %v2713 = vmax.f32 %v2705, 0.0
    %v2714 = vmax.f32 %v2706, 0.0
    %v2715 = vmax.f32 %v2707, 0.0
    %v2716 = vmax.f32 %v2708, 0.0
    %v2717 = vmax.f32 %v2709, 0.0
    %v2718 = vmax.f32 %v2710, 0.0
    %v2719 = vmax.f32 %v2711, 0.0
    %v2720 = vmax.f32 %v2712, 0.0
    %v2721 = vld [vmem:[#allocation10 + $0xa] sm:$0x1]
    %v2722 = vlaneseq
    %v2723 = vshrl.u32 %v2722, 7
    %v2724 = vsub.s32 0, %v2723
    %v2725 = vrot.slane %v2721, %v2724
    %v2726 = vmul.f32 %v2713, %v2725
    %v2727 = vmul.f32 %v2714, %v2725
    %v2728 = vmul.f32 %v2715, %v2725
    %v2729 = vmul.f32 %v2716, %v2725
    %v2730 = vmul.f32 %v2717, %v2725
    %v2731 = vmul.f32 %v2718, %v2725
    %v2732 = vmul.f32 %v2719, %v2725
    %v2733 = vmul.f32 %v2720, %v2725
    %v2734 = vld [vmem:[#allocation10 + $0xb] sm:$0x1]
    %v2735 = vlaneseq
    %v2736 = vshrl.u32 %v2735, 7
    %v2737 = vsub.s32 0, %v2736
    %v2738 = vrot.slane %v2734, %v2737
    %v2739 = vadd.f32 %v2726, %v2738
    %v2740 = vadd.f32 %v2727, %v2738
    %v2741 = vadd.f32 %v2728, %v2738
    %v2742 = vadd.f32 %v2729, %v2738
    %v2743 = vadd.f32 %v2730, %v2738
    %v2744 = vadd.f32 %v2731, %v2738
    %v2745 = vadd.f32 %v2732, %v2738
    %v2746 = vadd.f32 %v2733, %v2738
    %v2747 = vlaneseq
    %v2748 = vand.u32 %v2747, 127
    %vm2749 = vcmp.eq.s32.totalorder %v2748, 1
    %v2750 = vsel %vm2749, %v2452, %v2739
    %v2751 = vsel %vm2749, %v2453, %v2740
    %v2752 = vsel %vm2749, %v2454, %v2741
    %v2753 = vsel %vm2749, %v2455, %v2742
    %v2754 = vsel %vm2749, %v2456, %v2743
    %v2755 = vsel %vm2749, %v2457, %v2744
    %v2756 = vsel %vm2749, %v2458, %v2745
    %v2757 = vsel %vm2749, %v2459, %v2746
    %2758 = vst [vmem:[#allocation12] sm:$0xff] %v2750
    %2759 = vst [vmem:[#allocation12 + $0x8] sm:$0xff] %v2751
    %2760 = vst [vmem:[#allocation12 + $0x10] sm:$0xff] %v2752
    %2761 = vst [vmem:[#allocation12 + $0x18] sm:$0xff] %v2753
    %2762 = vst [vmem:[#allocation12 + $0x20] sm:$0xff] %v2754
    %2763 = vst [vmem:[#allocation12 + $0x28] sm:$0xff] %v2755
    %2764 = vst [vmem:[#allocation12 + $0x30] sm:$0xff] %v2756
    %2765 = vst [vmem:[#allocation12 + $0x38] sm:$0xff] %v2757
    // Predicated region
    $region34: #{tpu_custom_call.1} parent=1 // pred_check
      _
    $region35: #{tpu_custom_call.1} parent=1 // pred_check_branch
      %2767 = sbr.rel (0) target = $region37
    $region36: #{tpu_custom_call.1} parent=1 // pred_region
      %s2769 = ssub.s32 1024, 1024
      %2770 = vsyncadd [#allocation6], %s2769
      %s2771 = sshll.u32 [#allocation12], 4
      %s2772 = int_to_ptr.vmem [resolvable:$true] %s2771
      %2777 = dma.vmem_to_hbm [thread:$0]  %s2772, 1024, %s4, [#allocation6], 128, 128, 8
    $region37: #{tpu_custom_call.1} parent=1 // pred_fallthru
      _
    // Predicated region
    $region38: #{tpu_custom_call.1} parent=1 // pred_check
      _
    $region39: #{tpu_custom_call.1} parent=1 // pred_check_branch
      %2779 = sbr.rel (0) target = $region41
    $region40: #{tpu_custom_call.1} parent=1 // pred_region
      %2780 = dma.done [#allocation6], 1024
    $region41: #{tpu_custom_call.1} parent=1 // pred_fallthru
      _
    %2781 = vsyncpa [#allocation5], 1
    %2782 = vsyncpa [#allocation8], 1
    %2783 = vsyncpa [#allocation11], 1
    %2784 = vsyncpa [#allocation6], 1

</llo_original>
